<compile_context>
chip_gen: v7x
topology: tpu7x:2x2x1
jax: 0.10.0
libtpu: 0.0.40
codegen_flags: <defaults>
</compile_context>

<pallas_src>
import jax
import jax.numpy as jnp
from jax import lax
from jax.experimental import pallas as pl
from jax.experimental.pallas import tpu as pltpu


# ---------------------------------------------------------------------------
# Fused kernel: grid (2, n_tiles); phase 0 = noise + Gram reduce, phase 1 = apply
# ---------------------------------------------------------------------------
def _fused_kernel(x_ref, eps_ref, coef_ref, out_ref,
                  xt_buf, gram_acc, sq_acc, off_sc):
    p = pl.program_id(0)          # phase: 0 = reduce, 1 = apply
    k = pl.program_id(1)          # D tile
    n_k = pl.num_programs(1)

    @pl.when(p == 0)
    def _noise_and_reduce():
        @pl.when(k == 0)
        def _():
            gram_acc[...] = jnp.zeros_like(gram_acc)
            sq_acc[...] = jnp.zeros_like(sq_acc)

        coef = coef_ref[...]                              # (B, 2)
        xt = coef[:, 0:1] * x_ref[...] + coef[:, 1:2] * eps_ref[...]   # (B, TD)
        xt_buf[k] = xt                                    # stash for phase 1

        gram_acc[...] += lax.dot_general(
            xt, xt, (((1,), (1,)), ((), ())),
            preferred_element_type=jnp.float32,
            precision=lax.Precision.HIGHEST)              # (B, B)
        sq_acc[...] += jnp.sum(xt * xt, axis=1, keepdims=True)          # (B, 1)

        @pl.when(k == n_k - 1)
        def _():
            sq = sq_acc[...]
            # 1/max(||x||,1e-12) == rsqrt(max(||x||^2,1e-24))   (EUP slot)
            inv = lax.rsqrt(jnp.maximum(sq, 1e-24))
            gv = lax.dot_general(
                gram_acc[...], inv, (((1,), (0,)), ((), ())),
                preferred_element_type=jnp.float32,
                precision=lax.Precision.HIGHEST)          # (B, 1)
            # row_sum(cos)_i = inv_i * sum_j G_ij inv_j ; diag(cos)_i = sq_i*inv_i^2
            off_sc[...] = inv * gv - sq * inv * inv

    @pl.when(p == 1)
    def _apply():
        out_ref[...] = xt_buf[k] + off_sc[...]


# ---------------------------------------------------------------------------
# Two-pass fallback, pass 1: per-core partial Gram / squared norms
# grid = (S, tiles_per_core); leading axis "parallel" (2 TCs on v7x)
# ---------------------------------------------------------------------------
def _gram_partial_kernel(x_ref, eps_ref, coef_ref, gram_out_ref, sq_out_ref,
                         gram_acc, sq_acc):
    k = pl.program_id(1)
    n_k = pl.num_programs(1)

    @pl.when(k == 0)
    def _():
        gram_acc[...] = jnp.zeros_like(gram_acc)
        sq_acc[...] = jnp.zeros_like(sq_acc)

    coef = coef_ref[...]                                  # (B, 2)
    xt = coef[:, 0:1] * x_ref[...] + coef[:, 1:2] * eps_ref[...]

    gram_acc[...] += lax.dot_general(
        xt, xt, (((1,), (1,)), ((), ())),
        preferred_element_type=jnp.float32,
        precision=lax.Precision.HIGHEST)
    sq_acc[...] += jnp.sum(xt * xt, axis=1, keepdims=True)

    @pl.when(k == n_k - 1)
    def _():
        gram_out_ref[0] = gram_acc[...]
        sq_out_ref[0] = sq_acc[...]


# ---------------------------------------------------------------------------
# Two-pass fallback, pass 2: streaming apply of x_tilde + broadcast offset
# ---------------------------------------------------------------------------
def _apply_offset_kernel(x_ref, eps_ref, coef_ref, off_ref, out_ref):
    coef = coef_ref[...]
    out_ref[...] = coef[:, 0:1] * x_ref[...] + coef[:, 1:2] * eps_ref[...] \
        + off_ref[...]


# ---------------------------------------------------------------------------
# Tiling / VMEM policy (generation-aware)
# ---------------------------------------------------------------------------
_MIN_BUDGET = 32 * 1024 * 1024
_MAX_BUDGET = 112 * 1024 * 1024


def _pad_up(n, m):
    return ((n + m - 1) // m) * m


def _vmem_budget_bytes():
    """~75% of physical VMEM: ~48 MiB on v7x (64 MiB), ~96 MiB on v5e/v6e."""
    cap = None
    try:
        cap = getattr(pltpu.get_tpu_info(), "vmem_capacity_bytes", None)
    except Exception:
        cap = None
    if not cap:
        cap = 64 * 1024 * 1024            # conservative default (v7x)
    return int(max(_MIN_BUDGET, min(int(0.75 * cap), _MAX_BUDGET)))


def _lane_tile_candidates(D):
    """Multiples of 128 dividing D (descending); full D if D isn't 128-aligned."""
    if D % 128 != 0:
        return [D]
    return [td for td in range(D, 0, -128) if D % td == 0]


def _plan(B, D, budget, mode, tile_d):
    """Pick ('fused'|'two_pass', TD) from the actual VMEM budget."""
    b_pad = _pad_up(B, 8)

    def tile_bytes(td):                   # one (B, td) f32 tile, physically padded
        return b_pad * _pad_up(td, 128) * 4

    small = (b_pad * _pad_up(B, 128) * 4  # (B,B) Gram accumulator (lane-padded)
             + 6 * b_pad * 128 * 4        # sq / offset / coef blocks
             + (2 << 20))                 # misc / internal scratch slack

    if tile_d is not None:
        if D % tile_d != 0 or not (tile_d == D or tile_d % 128 == 0):
            raise ValueError("tile_d must divide D and be a multiple of 128 (or == D)")
        cands = [tile_d]
    else:
        cands = _lane_tile_candidates(D)

    def fused_bytes(td):
        n = D // td
        # persistent x_tilde stash + double-buffered x/eps/out tiles
        return n * tile_bytes(td) + 6 * tile_bytes(td) + small

    def two_pass_bytes(td):
        return 6 * tile_bytes(td) + small

    fused_fit = [td for td in cands if fused_bytes(td) <= budget]
    if mode == "fused" and not fused_fit:
        raise ValueError("fused mode requested but x_tilde stash does not fit VMEM")
    if mode != "two_pass" and fused_fit:
        return "fused", max(fused_fit)

    fit = [td for td in cands if two_pass_bytes(td) <= budget]
    even_fit = [td for td in fit if (D // td) % 2 == 0]   # enables 2-core split
    if even_fit:
        td = max(even_fit)
    elif fit:
        td = max(fit)
    else:
        td = min(cands)                   # best effort: smallest lane-dense tile
    return "two_pass", td


# ---------------------------------------------------------------------------
# Wrapper: noising + disentangle offset (ShiftDiff.forward, idx=None branch)
# ---------------------------------------------------------------------------
def shiftdiff_noise_step(x, epsilon, alpha_bars, idx, *, mode="auto", tile_d=None):
    """x, epsilon: (B,C,H,W) f32; alpha_bars: (T,) f32; idx: (B,) i32.

    mode: "auto" (fused if it fits, else two-pass) | "fused" | "two_pass".
    tile_d: optional forced D-tile size (testing / tuning).
    """
    B, C, H, W = x.shape
    D = C * H * W
    x_flat = x.reshape(B, D).astype(jnp.float32)
    eps_flat = epsilon.reshape(B, D).astype(jnp.float32)

    used_ab = alpha_bars[idx].astype(jnp.float32)                            # (B,)
    coef = jnp.stack([jnp.sqrt(used_ab), jnp.sqrt(1.0 - used_ab)], axis=1)   # (B, 2)

    budget = _vmem_budget_bytes()
    scheme, TD = _plan(B, D, budget, mode, tile_d)
    n_tiles = D // TD

    if scheme == "fused":
        # Inputs are only re-read in phase 0; in phase 1 the index map repeats the
        # last block so no new DMA is issued.  The output index map stays at block
        # 0 through phase 0 (no flush before valid data is written in phase 1).
        in_map = lambda p, k: (0, (1 - p) * k + p * (n_tiles - 1))
        out_flat = pl.pallas_call(
            _fused_kernel,
            grid=(2, n_tiles),
            in_specs=[
                pl.BlockSpec((B, TD), in_map),
                pl.BlockSpec((B, TD), in_map),
                pl.BlockSpec((B, 2), lambda p, k: (0, 0)),
            ],
            out_specs=pl.BlockSpec((B, TD), lambda p, k: (0, p * k)),
            out_shape=jax.ShapeDtypeStruct((B, D), jnp.float32),
            scratch_shapes=[
                pltpu.VMEM((n_tiles, B, TD), jnp.float32),   # x_tilde stash
                pltpu.VMEM((B, B), jnp.float32),             # Gram accumulator
                pltpu.VMEM((B, 1), jnp.float32),             # squared norms
                pltpu.VMEM((B, 1), jnp.float32),             # per-sample offset
            ],
            compiler_params=pltpu.CompilerParams(
                dimension_semantics=("arbitrary", "arbitrary"),
                vmem_limit_bytes=budget),
        )(x_flat, eps_flat, coef)
        return out_flat.reshape(B, C, H, W)

    # -------------------- two-pass fallback (large B*D) --------------------
    S = 2 if (n_tiles >= 2 and n_tiles % 2 == 0) else 1   # 2-core split on v7x
    tpc = n_tiles // S

    gram_parts, sq_parts = pl.pallas_call(
        _gram_partial_kernel,
        grid=(S, tpc),
        in_specs=[
            pl.BlockSpec((B, TD), lambda c, k: (0, c * tpc + k)),
            pl.BlockSpec((B, TD), lambda c, k: (0, c * tpc + k)),
            pl.BlockSpec((B, 2), lambda c, k: (0, 0)),
        ],
        out_specs=[
            pl.BlockSpec((1, B, B), lambda c, k: (c, 0, 0)),
            pl.BlockSpec((1, B, 1), lambda c, k: (c, 0, 0)),
        ],
        out_shape=[
            jax.ShapeDtypeStruct((S, B, B), jnp.float32),
            jax.ShapeDtypeStruct((S, B, 1), jnp.float32),
        ],
        scratch_shapes=[
            pltpu.VMEM((B, B), jnp.float32),
            pltpu.VMEM((B, 1), jnp.float32),
        ],
        compiler_params=pltpu.CompilerParams(
            dimension_semantics=("parallel", "arbitrary"),
            vmem_limit_bytes=budget),
    )(x_flat, eps_flat, coef)

    # Tiny epilogue in pure f32 XLA: combine per-core partials -> offset (B,1).
    gram = jnp.sum(gram_parts, axis=0)                        # (B, B)
    sq = jnp.sum(sq_parts, axis=0)                            # (B, 1)
    inv = lax.rsqrt(jnp.maximum(sq, 1e-24))                   # (B, 1)
    gv = jnp.sum(gram * inv.reshape(1, B), axis=1, keepdims=True)
    offset = inv * gv - sq * inv * inv                        # (B, 1)

    out_flat = pl.pallas_call(
        _apply_offset_kernel,
        grid=(n_tiles,),
        in_specs=[
            pl.BlockSpec((B, TD), lambda k: (0, k)),
            pl.BlockSpec((B, TD), lambda k: (0, k)),
            pl.BlockSpec((B, 2), lambda k: (0, 0)),
            pl.BlockSpec((B, 1), lambda k: (0, 0)),
        ],
        out_specs=pl.BlockSpec((B, TD), lambda k: (0, k)),
        out_shape=jax.ShapeDtypeStruct((B, D), jnp.float32),
        compiler_params=pltpu.CompilerParams(
            dimension_semantics=("parallel",),
            vmem_limit_bytes=budget),
    )(x_flat, eps_flat, coef, offset)

    return out_flat.reshape(B, C, H, W)


# ---------------------------------------------------------------------------
# Pure-JAX reference mirroring the PyTorch code (correctness check)
# ---------------------------------------------------------------------------
def _reference_noise_step(x, epsilon, alpha_bars, idx):
    B, C, H, W = x.shape
    used_ab = alpha_bars[idx][:, None, None, None]
    x_tilde = jnp.sqrt(used_ab) * x + jnp.sqrt(1.0 - used_ab) * epsilon
    flat = x_tilde.reshape(B, -1)
    n = flat / jnp.maximum(jnp.linalg.norm(flat, axis=1, keepdims=True), 1e-12)
    cos = jnp.matmul(n, n.T, precision=lax.Precision.HIGHEST)
    cos = cos * (1.0 - jnp.eye(B, dtype=cos.dtype))
    offset = jnp.sum(cos, axis=1)[:, None, None, None]
    return x_tilde + offset


if __name__ == "__main__":
    # Diffusion schedule (deterministic, in-script) — mirrors ShiftDiff.__init__
    beta1, betaT, T = 1e-4, 2e-2, 100
    betas = jnp.linspace(beta1, betaT, T, dtype=jnp.float32)
    alpha_bars = jnp.cumprod(1.0 - betas)

    key = jax.random.PRNGKey(0)
    cases = [
        # (shape,          mode,       tile_d)  -- exercises every code path
        ((2, 4, 16, 16), "auto",     None),   # fused, single D tile
        ((4, 3, 32, 32), "auto",     1024),   # fused, 3 tiles (multi-tile Gram)
        ((4, 3, 32, 32), "two_pass", 512),    # fallback, 6 tiles -> 2-core split
        ((2, 4, 16, 16), "two_pass", 1024),   # fallback, single tile, no split
    ]
    for (B, C, H, W), mode, tile_d in cases:
        kx, keps, kidx, key = jax.random.split(key, 4)
        x = jax.random.normal(kx, (B, C, H, W), dtype=jnp.float32)
        epsilon = jax.random.normal(keps, (B, C, H, W), dtype=jnp.float32)
        idx = jax.random.randint(kidx, (B,), 0, T)

        out = jax.block_until_ready(
            shiftdiff_noise_step(x, epsilon, alpha_bars, idx,
                                 mode=mode, tile_d=tile_d))
        ref = _reference_noise_step(x, epsilon, alpha_bars, idx)

        assert out.shape == (B, C, H, W)
        assert jnp.allclose(out, ref, atol=1e-4, rtol=1e-4), \
            f"mismatch vs reference: shape={(B, C, H, W)} mode={mode} tile_d={tile_d}"

    print("KERNEL_OK")
</pallas_src>

<mosaic_0001>
module attributes {stable_mosaic.version = 11 : i64} {
  func.func @_fused_kernel(%arg0: i32, %arg1: i32, %arg2: memref<2x1024xf32, #tpu.memory_space<vmem>>, %arg3: memref<2x1024xf32, #tpu.memory_space<vmem>>, %arg4: memref<2x2xf32, #tpu.memory_space<vmem>>, %arg5: memref<2x1024xf32, #tpu.memory_space<vmem>>, %arg6: memref<1x2x1024xf32, #tpu.memory_space<vmem>>, %arg7: memref<2x2xf32, #tpu.memory_space<vmem>>, %arg8: memref<2x1xf32, #tpu.memory_space<vmem>>, %arg9: memref<2x1xf32, #tpu.memory_space<vmem>>) attributes {dimension_semantics = [#tpu.dimension_semantics<arbitrary>, #tpu.dimension_semantics<arbitrary>], iteration_bounds = array<i64: 2, 1>, scalar_prefetch = 0 : i64, scratch_operands = 4 : i64, tpu.core_type = #tpu.core_type<tc>, window_params = [{transform_indices = @transform_0, window_bounds = array<i64: 2, 1024>}, {transform_indices = @transform_1, window_bounds = array<i64: 2, 1024>}, {pipeline_mode = #tpu.pipeline_mode<synchronous>, transform_indices = @transform_2, window_bounds = array<i64: 2, 2>}, {transform_indices = @transform_3, window_bounds = array<i64: 2, 1024>}]} {
    %c0_i32 = arith.constant 0 : i32
    %0 = arith.cmpi eq, %arg0, %c0_i32 : i32
    %1 = arith.extui %0 : i1 to i32
    %c0_i32_0 = arith.constant 0 : i32
    %2 = arith.cmpi ne, %1, %c0_i32_0 : i32
    scf.if %2 {
      %c0_i32_2 = arith.constant 0 : i32
      %6 = arith.cmpi eq, %arg1, %c0_i32_2 : i32
      %7 = arith.extui %6 : i1 to i32
      %c0_i32_3 = arith.constant 0 : i32
      %8 = arith.cmpi ne, %7, %c0_i32_3 : i32
      scf.if %8 {
        %cst_22 = arith.constant 0.000000e+00 : f32
        %36 = vector.broadcast %cst_22 : f32 to vector<2x2xf32>
        %c0_23 = arith.constant 0 : index
        %c0_24 = arith.constant 0 : index
        %37 = vector.load %arg7[%c0_23, %c0_24] : memref<2x2xf32, #tpu.memory_space<vmem>>, vector<2x2xf32>
        tpu.vector_store %arg7[%c0_23, %c0_24], %36 {strides = array<i32>} : memref<2x2xf32, #tpu.memory_space<vmem>>, vector<2x2xf32>,
        %cst_25 = arith.constant 0.000000e+00 : f32
        %38 = vector.broadcast %cst_25 : f32 to vector<2x1xf32>
        %c0_26 = arith.constant 0 : index
        %c0_27 = arith.constant 0 : index
        %39 = vector.load %arg8[%c0_26, %c0_27] : memref<2x1xf32, #tpu.memory_space<vmem>>, vector<2x1xf32>
        tpu.vector_store %arg8[%c0_26, %c0_27], %38 {strides = array<i32>} : memref<2x1xf32, #tpu.memory_space<vmem>>, vector<2x1xf32>,
      } else {
      }
      %c0 = arith.constant 0 : index
      %c0_4 = arith.constant 0 : index
      %9 = vector.load %arg4[%c0, %c0_4] : memref<2x2xf32, #tpu.memory_space<vmem>>, vector<2x2xf32>
      %10 = vector.extract_strided_slice %9 {offsets = [0, 0], sizes = [2, 1], strides = [1, 1]} : vector<2x2xf32> to vector<2x1xf32>
      %c0_5 = arith.constant 0 : index
      %c0_6 = arith.constant 0 : index
      %11 = vector.load %arg2[%c0_5, %c0_6] : memref<2x1024xf32, #tpu.memory_space<vmem>>, vector<2x1024xf32>
      %12 = vector.broadcast %10 : vector<2x1xf32> to vector<2x1024xf32>
      %13 = arith.mulf %12, %11 : vector<2x1024xf32>
      %14 = vector.extract_strided_slice %9 {offsets = [0, 1], sizes = [2, 1], strides = [1, 1]} : vector<2x2xf32> to vector<2x1xf32>
      %c0_7 = arith.constant 0 : index
      %c0_8 = arith.constant 0 : index
      %15 = vector.load %arg3[%c0_7, %c0_8] : memref<2x1024xf32, #tpu.memory_space<vmem>>, vector<2x1024xf32>
      %16 = vector.broadcast %14 : vector<2x1xf32> to vector<2x1024xf32>
      %17 = arith.mulf %16, %15 : vector<2x1024xf32>
      %18 = arith.addf %13, %17 : vector<2x1024xf32>
      %19 = arith.index_cast %arg1 : i32 to index
      %c0_9 = arith.constant 0 : index
      %c0_10 = arith.constant 0 : index
      %20 = vector.load %arg6[%19, %c0_9, %c0_10] : memref<1x2x1024xf32, #tpu.memory_space<vmem>>, vector<1x2x1024xf32>
      %21 = vector.shape_cast %20 : vector<1x2x1024xf32> to vector<2x1024xf32>
      %22 = vector.shape_cast %18 : vector<2x1024xf32> to vector<1x2x1024xf32>
      tpu.vector_store %arg6[%19, %c0_9, %c0_10], %22 {strides = array<i32>} : memref<1x2x1024xf32, #tpu.memory_space<vmem>>, vector<1x2x1024xf32>,
      %c0_11 = arith.constant 0 : index
      %c0_12 = arith.constant 0 : index
      %23 = vector.load %arg7[%c0_11, %c0_12] : memref<2x2xf32, #tpu.memory_space<vmem>>, vector<2x2xf32>
      %cst = arith.constant dense<0.000000e+00> : vector<2x2xf32>
      %24 = tpu.matmul %18, %18, %cst {dimension_numbers = #tpu.dot_dimension_numbers<[1], [1], [0], [0], [0, 0, 1, 0], [], []>, precision = #tpu.contract_precision<fp32>} : vector<2x1024xf32>, vector<2x1024xf32>, vector<2x2xf32> -> vector<2x2xf32>
      %25 = arith.addf %23, %24 : vector<2x2xf32>
      %c0_13 = arith.constant 0 : index
      %c0_14 = arith.constant 0 : index
      %26 = vector.load %arg7[%c0_13, %c0_14] : memref<2x2xf32, #tpu.memory_space<vmem>>, vector<2x2xf32>
      tpu.vector_store %arg7[%c0_13, %c0_14], %25 {strides = array<i32>} : memref<2x2xf32, #tpu.memory_space<vmem>>, vector<2x2xf32>,
      %c0_15 = arith.constant 0 : index
      %c0_16 = arith.constant 0 : index
      %27 = vector.load %arg8[%c0_15, %c0_16] : memref<2x1xf32, #tpu.memory_space<vmem>>, vector<2x1xf32>
      %28 = arith.mulf %18, %18 : vector<2x1024xf32>
      %cst_17 = arith.constant dense<0.000000e+00> : vector<2xf32>
      %29 = vector.multi_reduction <add>, %28, %cst_17 [1] : vector<2x1024xf32> to vector<2xf32>
      %30 = vector.shape_cast %29 : vector<2xf32> to vector<2x1xf32>
      %31 = arith.addf %27, %30 : vector<2x1xf32>
      %c0_18 = arith.constant 0 : index
      %c0_19 = arith.constant 0 : index
      %32 = vector.load %arg8[%c0_18, %c0_19] : memref<2x1xf32, #tpu.memory_space<vmem>>, vector<2x1xf32>
      tpu.vector_store %arg8[%c0_18, %c0_19], %31 {strides = array<i32>} : memref<2x1xf32, #tpu.memory_space<vmem>>, vector<2x1xf32>,
      %c0_i32_20 = arith.constant 0 : i32
      %33 = arith.cmpi eq, %arg1, %c0_i32_20 : i32
      %34 = arith.extui %33 : i1 to i32
      %c0_i32_21 = arith.constant 0 : i32
      %35 = arith.cmpi ne, %34, %c0_i32_21 : i32
      scf.if %35 {
        %c0_22 = arith.constant 0 : index
        %c0_23 = arith.constant 0 : index
        %36 = vector.load %arg8[%c0_22, %c0_23] : memref<2x1xf32, #tpu.memory_space<vmem>>, vector<2x1xf32>
        %cst_24 = arith.constant 1.000000e-24 : f32
        %37 = vector.broadcast %cst_24 : f32 to vector<2x1xf32>
        %38 = arith.maximumf %36, %37 : vector<2x1xf32>
        %39 = math.rsqrt %38 : vector<2x1xf32>
        %c0_25 = arith.constant 0 : index
        %c0_26 = arith.constant 0 : index
        %40 = vector.load %arg7[%c0_25, %c0_26] : memref<2x2xf32, #tpu.memory_space<vmem>>, vector<2x2xf32>
        %cst_27 = arith.constant dense<0.000000e+00> : vector<2x1xf32>
        %41 = tpu.matmul %40, %39, %cst_27 {dimension_numbers = #tpu.dot_dimension_numbers<[1], [0], [0], [1], [0, 0, 1, 1], [], []>, precision = #tpu.contract_precision<fp32>} : vector<2x2xf32>, vector<2x1xf32>, vector<2x1xf32> -> vector<2x1xf32>
        %42 = arith.mulf %39, %41 : vector<2x1xf32>
        %43 = arith.mulf %36, %39 : vector<2x1xf32>
        %44 = arith.mulf %43, %39 : vector<2x1xf32>
        %45 = arith.subf %42, %44 : vector<2x1xf32>
        %c0_28 = arith.constant 0 : index
        %c0_29 = arith.constant 0 : index
        %46 = vector.load %arg9[%c0_28, %c0_29] : memref<2x1xf32, #tpu.memory_space<vmem>>, vector<2x1xf32>
        tpu.vector_store %arg9[%c0_28, %c0_29], %45 {strides = array<i32>} : memref<2x1xf32, #tpu.memory_space<vmem>>, vector<2x1xf32>,
      } else {
      }
    } else {
    }
    %c1_i32 = arith.constant 1 : i32
    %3 = arith.cmpi eq, %arg0, %c1_i32 : i32
    %4 = arith.extui %3 : i1 to i32
    %c0_i32_1 = arith.constant 0 : i32
    %5 = arith.cmpi ne, %4, %c0_i32_1 : i32
    scf.if %5 {
      %6 = arith.index_cast %arg1 : i32 to index
      %c0 = arith.constant 0 : index
      %c0_2 = arith.constant 0 : index
      %7 = vector.load %arg6[%6, %c0, %c0_2] : memref<1x2x1024xf32, #tpu.memory_space<vmem>>, vector<1x2x1024xf32>
      %8 = vector.shape_cast %7 : vector<1x2x1024xf32> to vector<2x1024xf32>
      %c0_3 = arith.constant 0 : index
      %c0_4 = arith.constant 0 : index
      %9 = vector.load %arg9[%c0_3, %c0_4] : memref<2x1xf32, #tpu.memory_space<vmem>>, vector<2x1xf32>
      %10 = vector.broadcast %9 : vector<2x1xf32> to vector<2x1024xf32>
      %11 = arith.addf %8, %10 : vector<2x1024xf32>
      %c0_5 = arith.constant 0 : index
      %c0_6 = arith.constant 0 : index
      %12 = vector.load %arg5[%c0_5, %c0_6] : memref<2x1024xf32, #tpu.memory_space<vmem>>, vector<2x1024xf32>
      tpu.vector_store %arg5[%c0_5, %c0_6], %11 {strides = array<i32>} : memref<2x1024xf32, #tpu.memory_space<vmem>>, vector<2x1024xf32>,
    } else {
    }
    return
  }
  func.func @transform_0(%arg0: i32, %arg1: i32) -> (i32, i32) {
    %c1_i32 = arith.constant 1 : i32
    %0 = arith.subi %c1_i32, %arg0 : i32
    %1 = arith.muli %0, %arg1 : i32
    %c0_i32 = arith.constant 0 : i32
    %2 = arith.muli %arg0, %c0_i32 : i32
    %3 = arith.addi %1, %2 : i32
    %c0_i32_0 = arith.constant 0 : i32
    %c0_i32_1 = arith.constant 0 : i32
    return %c0_i32_0, %3 : i32, i32
  }
  func.func @transform_1(%arg0: i32, %arg1: i32) -> (i32, i32) {
    %c1_i32 = arith.constant 1 : i32
    %0 = arith.subi %c1_i32, %arg0 : i32
    %1 = arith.muli %0, %arg1 : i32
    %c0_i32 = arith.constant 0 : i32
    %2 = arith.muli %arg0, %c0_i32 : i32
    %3 = arith.addi %1, %2 : i32
    %c0_i32_0 = arith.constant 0 : i32
    %c0_i32_1 = arith.constant 0 : i32
    return %c0_i32_0, %3 : i32, i32
  }
  func.func @transform_2(%arg0: i32, %arg1: i32) -> (i32, i32) {
    %c0_i32 = arith.constant 0 : i32
    %c0_i32_0 = arith.constant 0 : i32
    %c0_i32_1 = arith.constant 0 : i32
    return %c0_i32, %c0_i32_0 : i32, i32
  }
  func.func @transform_3(%arg0: i32, %arg1: i32) -> (i32, i32) {
    %0 = arith.muli %arg0, %arg1 : i32
    %c0_i32 = arith.constant 0 : i32
    %c0_i32_0 = arith.constant 0 : i32
    return %c0_i32, %0 : i32, i32
  }
}

</mosaic_0001>

<llo_original>
// kernel: tpu_custom_call.1
$region0: #{tpu_custom_call.1}
  #allocation0 [shape = 'u32[]', space=smem, size = 0x4, offset = 0x4, fixed_abs, tag = 'smem constant byte address 0x4 - core index']
  #allocation1 [shape = 'u32[144,128]{1,0:T(1,128)}', space=vmem, size = 0x12000, scoped, tag = 'internal scratch']
  #allocation2 [shape = 'f32[1,2,1024]{2,1,0:T(2,128)}', space=vmem, size = 0x2000, scoped, tag = 'scratch operand']
  #allocation3 [shape = 'f32[2,2]{1,0:T(2,128)}', space=vmem, size = 0x400, scoped, tag = 'scratch operand']
  #allocation4 [shape = 'f32[2,1]{1,0:T(2,128)}', space=vmem, size = 0x400, scoped, tag = 'scratch operand']
  #allocation5 [shape = 'f32[2,1]{1,0:T(2,128)}', space=vmem, size = 0x400, scoped, tag = 'scratch operand']
  %s0 = inlined_call_operand.hbm [shape: f32[2,1024], index: 0, kind: input, shape index: {}]
  %s1 = inlined_call_operand.hbm [shape: f32[2,1024], index: 1, kind: input, shape index: {}]
  %s2 = inlined_call_operand.vmem [shape: f32[2,2], index: 2, kind: input, shape index: {}]
  %s3 = inlined_call_operand.hbm [shape: f32[2,1024], index: 3, kind: output, shape index: {}]
  %s4 = sld [smem:[#allocation0]]
  $region69: #{tpu_custom_call.1} parent=0
    _
  %s6 = ssub.s32 1, %s4
  %s7 = scalar_select 0, %s6, %s4
  $region1: #{tpu_custom_call.1} parent=0
    #allocation6 [shape = 'u8[16384]{0}', space=vmem, size = 0x4000, scoped, tag = 'input window, operand 0']
    #allocation7 [shape = 's32[2]{0}', space=sflag, size = 0x8, scoped, tag = 'scoped memory for tpu_custom_call.1']
    #allocation8 [shape = 's32[2]{0}', space=sflag, size = 0x8, scoped, tag = 'scoped memory for tpu_custom_call.1']
    #allocation9 [shape = 'u8[16384]{0}', space=vmem, size = 0x4000, scoped, tag = 'input window, operand 1']
    #allocation10 [shape = 's32[2]{0}', space=sflag, size = 0x8, scoped, tag = 'scoped memory for tpu_custom_call.1']
    #allocation11 [shape = 'u8[16384]{0}', space=vmem, size = 0x4000, scoped, tag = 'output window, operand 0']
    %8 = vsyncpa [#allocation7], 0
    %s9 = scalar_lea.sflag [#allocation7], 1
    %10 = vsyncpa %s9, 0
    %11 = vsyncpa [#allocation10], 0
    %s12 = scalar_lea.sflag [#allocation10], 1
    %13 = vsyncpa %s12, 0
    %14 = vsyncpa [#allocation8], 0
    %s15 = scalar_lea.sflag [#allocation8], 1
    %16 = vsyncpa %s15, 0
    loop: start=0, step=1, limit=4
    $region2: #{tpu_custom_call.1} parent=1 // loop_pre_header
      _
    $region3: #{tpu_custom_call.1} parent=1 // loop_header
      %s18 = sphi 0, %s22
      %p19 = scmp.ge.s32.totalorder %s18, 4
      %s25 = sphi 0, %s37
      %s26 = sphi 0, %s33
      %s27 = sphi 0, %s25
      %s28 = sphi 0, %s26
      %s29 = sphi 0, %s27
      %s30 = sphi 0, %s28
      %s44 = sphi 0, %s46
      %s47 = sphi 0, %s44
      %s48 = sphi 0, %s47
      %s64 = sphi 0, %s48
      %s74 = sphi 0, %s76
      %s77 = sphi 0, %s74
      %s78 = sphi 0, %s77
      %s94 = sphi 0, %s78
      %s98 = sphi 0, %s98
      %s100 = sphi 0, %s98
      %s101 = sphi 0, %s100
      %s115 = sphi 0, %s101
      %s123 = sphi 0, %s125
      %s126 = sphi 0, %s123
      %s127 = sphi 0, %s126
      %s143 = sphi 0, %s127
    $region4: #{tpu_custom_call.1} parent=1 // loop_header_branch
      %21 = sbr.rel (%p19) target = $region8
    $region5: #{tpu_custom_call.1} parent=1 // loop_body
      %s23 = ssub.s32 %s18, 1
      %s24 = ssub.s32 %s18, 2
      %s31 = sadd.s32 1, %s26
      %p32 = scmp.ge.s32.totalorder %s31, 1
      %s33 = scalar_select %p32, 0, %s31
      %s34 = sadd.s32 1, %s25
      %s35 = scalar_select %p32, %s34, %s25
      %p36 = scmp.ge.s32.totalorder %s35, 2
      %s37 = scalar_select %p36, 0, %s35
      %s38 = ssub.s32 1, %s25
      %s39 = smul.u32 %s38, %s26
      %s40 = ssub.s32 1, %s37
      %s41 = smul.u32 %s40, %s33
      %s42 = ssub.s32 %s39, %s41
      %p43 = scmp.eq.s32.totalorder %s42, 0
      %s45 = sadd.s32 %s44, 1
      %s46 = scalar_select %p43, %s44, %s45
      %p49 = pneg %p43
      %p50 = scmp.eq.s32.totalorder %s18, 1
      %p51 = por %p49, %p50
      %p52 = scmp.ne.s32.totalorder %s44, %s47
      %p53 = scmp.eq.s32.totalorder %s18, 0
      %p54 = por %p52, %p53
      %p55 = scmp.ne.s32.totalorder %s44, %s47
      %p56 = scmp.eq.s32.totalorder %s23, 1
      %p57 = por %p55, %p56
      %p58 = scmp.ne.s32.totalorder %s47, %s48
      %p59 = scmp.eq.s32.totalorder %s23, 0
      %p60 = por %p58, %p59
      %p61 = scmp.ne.s32.totalorder %s47, %s48
      %p62 = scmp.eq.s32.totalorder %s24, 1
      %p63 = por %p61, %p62
      %p65 = scmp.ne.s32.totalorder %s48, %s64
      %p66 = scmp.eq.s32.totalorder %s24, 0
      %p67 = por %p65, %p66
      %s68 = ssub.s32 1, %s25
      %s69 = smul.u32 %s68, %s26
      %s70 = ssub.s32 1, %s37
      %s71 = smul.u32 %s70, %s33
      %s72 = ssub.s32 %s69, %s71
      %p73 = scmp.eq.s32.totalorder %s72, 0
      %s75 = sadd.s32 %s74, 1
      %s76 = scalar_select %p73, %s74, %s75
      %p79 = pneg %p73
      %p80 = scmp.eq.s32.totalorder %s18, 1
      %p81 = por %p79, %p80
      %p82 = scmp.ne.s32.totalorder %s74, %s77
      %p83 = scmp.eq.s32.totalorder %s18, 0
      %p84 = por %p82, %p83
      %p85 = scmp.ne.s32.totalorder %s74, %s77
      %p86 = scmp.eq.s32.totalorder %s23, 1
      %p87 = por %p85, %p86
      %p88 = scmp.ne.s32.totalorder %s77, %s78
      %p89 = scmp.eq.s32.totalorder %s23, 0
      %p90 = por %p88, %p89
      %p91 = scmp.ne.s32.totalorder %s77, %s78
      %p92 = scmp.eq.s32.totalorder %s24, 1
      %p93 = por %p91, %p92
      %p95 = scmp.ne.s32.totalorder %s78, %s94
      %p96 = scmp.eq.s32.totalorder %s24, 0
      %p97 = por %p95, %p96
      %s99 = sadd.s32 %s98, 1
      %p102 = scmp.eq.s32.totalorder %s18, 1
      %p103 = scmp.ne.s32.totalorder %s98, %s100
      %p104 = scmp.eq.s32.totalorder %s18, 0
      %p105 = por %p103, %p104
      %p106 = scmp.ne.s32.totalorder %s98, %s100
      %p107 = scmp.eq.s32.totalorder %s23, 1
      %p108 = por %p106, %p107
      %p109 = scmp.ne.s32.totalorder %s100, %s101
      %p110 = scmp.eq.s32.totalorder %s23, 0
      %p111 = por %p109, %p110
      %p112 = scmp.ne.s32.totalorder %s100, %s101
      %p113 = scmp.eq.s32.totalorder %s24, 1
      %p114 = por %p112, %p113
      %p116 = scmp.ne.s32.totalorder %s101, %s115
      %p117 = scmp.eq.s32.totalorder %s24, 0
      %p118 = por %p116, %p117
      %s119 = smul.u32 %s25, %s26
      %s120 = smul.u32 %s37, %s33
      %s121 = ssub.s32 %s119, %s120
      %p122 = scmp.eq.s32.totalorder %s121, 0
      %s124 = sadd.s32 %s123, 1
      %s125 = scalar_select %p122, %s123, %s124
      %p128 = pneg %p122
      %p129 = scmp.eq.s32.totalorder %s18, 1
      %p130 = por %p128, %p129
      %p131 = scmp.ne.s32.totalorder %s123, %s126
      %p132 = scmp.eq.s32.totalorder %s18, 0
      %p133 = por %p131, %p132
      %p134 = scmp.ne.s32.totalorder %s123, %s126
      %p135 = scmp.eq.s32.totalorder %s23, 1
      %p136 = por %p134, %p135
      %p137 = scmp.ne.s32.totalorder %s126, %s127
      %p138 = scmp.eq.s32.totalorder %s23, 0
      %p139 = por %p137, %p138
      %p140 = scmp.ne.s32.totalorder %s126, %s127
      %p141 = scmp.eq.s32.totalorder %s24, 1
      %p142 = por %p140, %p141
      %p144 = scmp.ne.s32.totalorder %s127, %s143
      %p145 = scmp.eq.s32.totalorder %s24, 0
      %p146 = por %p144, %p145
      %p147 = scmp.le.s32.totalorder 1, %s18
      %p148 = scmp.lt.s32.totalorder %s18, 3
      %p149 = pnand %p147, %p148
      %p150 = pneg %p149
      // Predicated region
      $region9: #{tpu_custom_call.1} parent=5 // pred_check
        _
      $region10: #{tpu_custom_call.1} parent=5 // pred_check_branch
        %152 = sbr.rel (%p149) target = $region12
      $region11: #{tpu_custom_call.1} parent=5 // pred_region
        %s153 = ssub.s32 %s18, 1
        // Predicated region
        $region13: #{tpu_custom_call.1} parent=11 // pred_check
          %p154 = pneg %p111
        $region14: #{tpu_custom_call.1} parent=11 // pred_check_branch
          %156 = sbr.rel (%p154) target = $region16
        $region15: #{tpu_custom_call.1} parent=11 // pred_region
          _
        $region16: #{tpu_custom_call.1} parent=11 // pred_fallthru
          _
      $region12: #{tpu_custom_call.1} parent=5 // pred_fallthru
        _
      %p157 = scmp.lt.s32.totalorder %s18, 2
      // Predicated region
      $region17: #{tpu_custom_call.1} parent=5 // pred_check
        %p158 = pneg %p157
      $region18: #{tpu_custom_call.1} parent=5 // pred_check_branch
        %160 = sbr.rel (%p158) target = $region20
      $region19: #{tpu_custom_call.1} parent=5 // pred_region
        // Predicated region
        $region21: #{tpu_custom_call.1} parent=19 // pred_check
          %p161 = pneg %p54
        $region22: #{tpu_custom_call.1} parent=19 // pred_check_branch
          %163 = sbr.rel (%p161) target = $region24
        $region23: #{tpu_custom_call.1} parent=19 // pred_region
          %s164 = sand.u32 %s44, 1
          %s165 = scalar_lea.sflag [#allocation7], %s164
          %s166 = sand.u32 %s44, 1
          %s167 = smul.addr %s166, 16
          %s168 = scalar_lea.vmem [#allocation6], %s167
          %s169 = ssub.s32 1, %s25
          %s170 = smul.u32 %s169, %s26
          %s171 = smul.u32 8, %s170
          %s173 = ssub.s32 256, 256
          %174 = vsyncadd %s165, %s173
          %s175 = smul.addr %s171, 32
          %s176 = scalar_lea.hbm %s0, %s175
          %s178 = sshll.u32 %s168, 4
          %s179 = int_to_ptr.vmem [resolvable:$true] %s178
          %181 = dma.hbm_to_vmem [thread:$0]  %s176, 256, %s179, %s165
        $region24: #{tpu_custom_call.1} parent=19 // pred_fallthru
          _
        // Predicated region
        $region25: #{tpu_custom_call.1} parent=19 // pred_check
          %p182 = pneg %p84
        $region26: #{tpu_custom_call.1} parent=19 // pred_check_branch
          %184 = sbr.rel (%p182) target = $region28
        $region27: #{tpu_custom_call.1} parent=19 // pred_region
          %s185 = sand.u32 %s74, 1
          %s186 = scalar_lea.sflag [#allocation10], %s185
          %s187 = sand.u32 %s74, 1
          %s188 = smul.addr %s187, 16
          %s189 = scalar_lea.vmem [#allocation9], %s188
          %s190 = ssub.s32 1, %s25
          %s191 = smul.u32 %s190, %s26
          %s192 = smul.u32 8, %s191
          %s194 = ssub.s32 256, 256
          %195 = vsyncadd %s186, %s194
          %s196 = smul.addr %s192, 32
          %s197 = scalar_lea.hbm %s1, %s196
          %s199 = sshll.u32 %s189, 4
          %s200 = int_to_ptr.vmem [resolvable:$true] %s199
          %202 = dma.hbm_to_vmem [thread:$0]  %s197, 256, %s200, %s186
        $region28: #{tpu_custom_call.1} parent=19 // pred_fallthru
          _
      $region20: #{tpu_custom_call.1} parent=5 // pred_fallthru
        _
      %p203 = scmp.le.s32.totalorder 1, %s18
      %p204 = scmp.lt.s32.totalorder %s18, 3
      %p205 = pnand %p203, %p204
      %p206 = pneg %p205
      // Predicated region
      $region29: #{tpu_custom_call.1} parent=5 // pred_check
        _
      $region30: #{tpu_custom_call.1} parent=5 // pred_check_branch
        %208 = sbr.rel (%p205) target = $region32
      $region31: #{tpu_custom_call.1} parent=5 // pred_region
        %s209 = ssub.s32 %s18, 1
        %s210 = sand.u32 %s47, 1
        %s211 = scalar_lea.sflag [#allocation7], %s210
        %s212 = sand.u32 %s47, 1
        %s213 = smul.addr %s212, 16
        %s214 = scalar_lea.vmem [#allocation6], %s213
        // Predicated region
        $region33: #{tpu_custom_call.1} parent=31 // pred_check
          %p215 = pneg %p60
        $region34: #{tpu_custom_call.1} parent=31 // pred_check_branch
          %217 = sbr.rel (%p215) target = $region36
        $region35: #{tpu_custom_call.1} parent=31 // pred_region
          %218 = dma.done %s211, 256
        $region36: #{tpu_custom_call.1} parent=31 // pred_fallthru
          _
        %s219 = sand.u32 %s77, 1
        %s220 = scalar_lea.sflag [#allocation10], %s219
        %s221 = sand.u32 %s77, 1
        %s222 = smul.addr %s221, 16
        %s223 = scalar_lea.vmem [#allocation9], %s222
        // Predicated region
        $region37: #{tpu_custom_call.1} parent=31 // pred_check
          %p224 = pneg %p90
        $region38: #{tpu_custom_call.1} parent=31 // pred_check_branch
          %226 = sbr.rel (%p224) target = $region40
        $region39: #{tpu_custom_call.1} parent=31 // pred_region
          %227 = dma.done %s220, 256
        $region40: #{tpu_custom_call.1} parent=31 // pred_fallthru
          _
        %s228 = sand.u32 %s47, 1
        %s229 = scalar_lea.sflag [#allocation7], %s228
        %s230 = sand.u32 %s47, 1
        %s231 = smul.addr %s230, 16
        %s232 = scalar_lea.vmem [#allocation6], %s231
        %p233 = pneg %p60
        %p234 = pneg %p57
        %s235 = sand.u32 %s77, 1
        %s236 = scalar_lea.sflag [#allocation10], %s235
        %s237 = sand.u32 %s77, 1
        %s238 = smul.addr %s237, 16
        %s239 = scalar_lea.vmem [#allocation9], %s238
        %p240 = pneg %p90
        %p241 = pneg %p87
        %p242 = pneg %p111
        %p243 = pneg %p108
        %p244 = pneg %p139
        %p245 = pneg %p136
        %s246 = sand.u32 %s126, 1
        %s247 = scalar_lea.sflag [#allocation8], %s246
        %s248 = sand.u32 %s126, 1
        %s249 = smul.addr %s248, 16
        %s250 = scalar_lea.vmem [#allocation11], %s249
        %s251 = ssub.s32 1, %s27
        %s252 = smul.u32 %s251, %s28
        %s253 = smul.u32 8, %s252
        %s254 = ssub.s32 1, %s27
        %s255 = smul.u32 %s254, %s28
        %s256 = smul.u32 8, %s255
        %s257 = smul.u32 %s27, %s28
        %s258 = smul.u32 8, %s257
        %p259 = scmp.eq.s32.totalorder %s27, 0
        // Predicated region
        $region41: #{tpu_custom_call.1} parent=31 // pred_check
          %p260 = pneg %p259
        $region42: #{tpu_custom_call.1} parent=31 // pred_check_branch
          %262 = sbr.rel (%p260) target = $region44
        $region43: #{tpu_custom_call.1} parent=31 // pred_region
          %p263 = scmp.eq.s32.totalorder %s28, 0
          // Predicated region
          $region45: #{tpu_custom_call.1} parent=43 // pred_check
            %p264 = pneg %p263
          $region46: #{tpu_custom_call.1} parent=43 // pred_check_branch
            %266 = sbr.rel (%p264) target = $region48
          $region47: #{tpu_custom_call.1} parent=43 // pred_region
            %vm267 = vcmask 9216
            %268 = vst.msk [vmem:[#allocation3] sm:$0x3] %vm267, 0.0
            %vm269 = vcmask 1024
            %270 = vst.msk [vmem:[#allocation4] sm:$0x3] %vm269, 0.0
          $region48: #{tpu_custom_call.1} parent=43 // pred_fallthru
            _
          %v271 = vld [vmem:[%s2] sm:$0x3]
          %v272 = vld [vmem:[%s214] sm:$0xff]
          %v273 = vld [vmem:[%s214 + $0x8] sm:$0xff]
          %275 = vset.pattern.permute.xlu0 0
          %276 = vperm.xlu0 %275, %v271
          %v277 = vpop.permute.xlu0 %276
          %v281 = vcombine.high %v272, %v272
          %v283 = vunpack.c.l.s4 1983009808
          %v284 = vunpack.c.0.s8 %v283
          %v285 = vlaneseq
          %v286 = vshrl.u32 %v285, 7
          %v287 = vsub.s32 %v284, %v286
          %v288 = vrot.slane %v272, %v287
          %v290 = vunpack.c.l.s4 1983009808
          %v291 = vunpack.c.0.s8 %v290
          %v292 = vlaneseq
          %v293 = vshrl.u32 %v292, 7
          %v294 = vsub.s32 %v291, %v293
          %v295 = vrot.slane %v281, %v294
          %v296 = vcombine.high %v288, %v288
          %v297 = vcombine.high %v295, %v295
          %v298 = vcombine.high %v273, %v273
          %v300 = vunpack.c.l.s4 1983009808
          %v301 = vunpack.c.0.s8 %v300
          %v302 = vlaneseq
          %v303 = vshrl.u32 %v302, 7
          %v304 = vsub.s32 %v301, %v303
          %v305 = vrot.slane %v273, %v304
          %v307 = vunpack.c.l.s4 1983009808
          %v308 = vunpack.c.0.s8 %v307
          %v309 = vlaneseq
          %v310 = vshrl.u32 %v309, 7
          %v311 = vsub.s32 %v308, %v310
          %v312 = vrot.slane %v298, %v311
          %v313 = vcombine.high %v305, %v305
          %v314 = vcombine.high %v312, %v312
          %v323 = vmul.f32 %v277, %v288
          %v324 = vmul.f32 %v277, %v296
          %v325 = vmul.f32 %v277, %v295
          %v326 = vmul.f32 %v277, %v297
          %v327 = vmul.f32 %v277, %v305
          %v328 = vmul.f32 %v277, %v313
          %v329 = vmul.f32 %v277, %v312
          %v330 = vmul.f32 %v277, %v314
          %v331 = vld [vmem:[%s223] sm:$0xff]
          %v332 = vld [vmem:[%s223 + $0x8] sm:$0xff]
          %333 = vset.pattern.permute.xlu0 1
          %334 = vperm.xlu0 %333, %v271
          %v335 = vpop.permute.xlu0 %334
          %v339 = vcombine.high %v331, %v331
          %v341 = vunpack.c.l.s4 1983009808
          %v342 = vunpack.c.0.s8 %v341
          %v343 = vlaneseq
          %v344 = vshrl.u32 %v343, 7
          %v345 = vsub.s32 %v342, %v344
          %v346 = vrot.slane %v331, %v345
          %v348 = vunpack.c.l.s4 1983009808
          %v349 = vunpack.c.0.s8 %v348
          %v350 = vlaneseq
          %v351 = vshrl.u32 %v350, 7
          %v352 = vsub.s32 %v349, %v351
          %v353 = vrot.slane %v339, %v352
          %v354 = vcombine.high %v346, %v346
          %v355 = vcombine.high %v353, %v353
          %v356 = vcombine.high %v332, %v332
          %v358 = vunpack.c.l.s4 1983009808
          %v359 = vunpack.c.0.s8 %v358
          %v360 = vlaneseq
          %v361 = vshrl.u32 %v360, 7
          %v362 = vsub.s32 %v359, %v361
          %v363 = vrot.slane %v332, %v362
          %v365 = vunpack.c.l.s4 1983009808
          %v366 = vunpack.c.0.s8 %v365
          %v367 = vlaneseq
          %v368 = vshrl.u32 %v367, 7
          %v369 = vsub.s32 %v366, %v368
          %v370 = vrot.slane %v356, %v369
          %v371 = vcombine.high %v363, %v363
          %v372 = vcombine.high %v370, %v370
          %v381 = vmul.f32 %v335, %v346
          %v382 = vmul.f32 %v335, %v354
          %v383 = vmul.f32 %v335, %v353
          %v384 = vmul.f32 %v335, %v355
          %v385 = vmul.f32 %v335, %v363
          %v386 = vmul.f32 %v335, %v371
          %v387 = vmul.f32 %v335, %v370
          %v388 = vmul.f32 %v335, %v372
          %v389 = vadd.f32 %v323, %v381
          %v390 = vadd.f32 %v324, %v382
          %v391 = vadd.f32 %v325, %v383
          %v392 = vadd.f32 %v326, %v384
          %v393 = vadd.f32 %v327, %v385
          %v394 = vadd.f32 %v328, %v386
          %v395 = vadd.f32 %v329, %v387
          %v396 = vadd.f32 %v330, %v388
          %v405 = vcombine.low %v389, %v390
          %v406 = vcombine.low %v391, %v392
          %v408 = vunpack.c.l.s4 1983009808
          %v409 = vunpack.c.0.s8 %v408
          %v410 = vlaneseq
          %v411 = vshrl.u32 %v410, 7
          %v412 = vsub.s32 %v409, %v411
          %v413 = vrot.slane %v405, %v412
          %v415 = vunpack.c.l.s4 1983009808
          %v416 = vunpack.c.0.s8 %v415
          %v417 = vlaneseq
          %v418 = vshrl.u32 %v417, 7
          %v419 = vsub.s32 %v416, %v418
          %v420 = vrot.slane %v406, %v419
          %v421 = vcombine.low %v413, %v420
          %v422 = vcombine.low %v393, %v394
          %v423 = vcombine.low %v395, %v396
          %v425 = vunpack.c.l.s4 1983009808
          %v426 = vunpack.c.0.s8 %v425
          %v427 = vlaneseq
          %v428 = vshrl.u32 %v427, 7
          %v429 = vsub.s32 %v426, %v428
          %v430 = vrot.slane %v422, %v429
          %v432 = vunpack.c.l.s4 1983009808
          %v433 = vunpack.c.0.s8 %v432
          %v434 = vlaneseq
          %v435 = vshrl.u32 %v434, 7
          %v436 = vsub.s32 %v433, %v435
          %v437 = vrot.slane %v423, %v436
          %v438 = vcombine.low %v430, %v437
          %s441 = smul.u32 %s28, 8
          %s442 = smul.addr %s441, 2
          %s443 = scalar_lea.vmem [#allocation2], %s442
          %444 = vst [vmem:[%s443] sm:$0xff] %v421
          %445 = vst [vmem:[%s443 + $0x8] sm:$0xff] %v438
          %v446 = vld [vmem:[#allocation3] sm:$0x3]
          %v447 = vand.u32 %v390, 4294901760
          %448 = vmatprep.subr.mxu0 %v447
          %v449 = vand.u32 %v389, 4294901760
          %450 = vmatpush1.xpose.msra.mxu0 %v449
          %451 = vmatprep.subr.mxu0 0.0
          %452 = vmatpush1.xpose.msra.mxu0 0.0
          %453 = vmatprep.subr.mxu0 0.0
          %454 = vmatpush1.xpose.msra.mxu0 0.0
          %455 = vmatprep.subr.mxu0 0.0
          %456 = vmatpush1.xpose.msra.mxu0 0.0
          %457 = vmatprep.subr.mxu0 0.0
          %458 = vmatpush1.xpose.msra.mxu0 0.0
          %459 = vmatprep.subr.mxu0 0.0
          %460 = vmatpush1.xpose.msra.mxu0 0.0
          %461 = vmatprep.subr.mxu0 0.0
          %462 = vmatpush1.xpose.msra.mxu0 0.0
          %463 = vmatprep.subr.mxu0 0.0
          %464 = vmatpush1.xpose.msra.mxu0 0.0
          %465 = vmatprep.subr.mxu0 0.0
          %466 = vmatpush1.xpose.msra.mxu0 0.0
          %467 = vmatprep.subr.mxu0 0.0
          %468 = vmatpush1.xpose.msra.mxu0 0.0
          %469 = vmatprep.subr.mxu0 0.0
          %470 = vmatpush1.xpose.msra.mxu0 0.0
          %471 = vmatprep.subr.mxu0 0.0
          %472 = vmatpush1.xpose.msra.mxu0 0.0
          %473 = vmatprep.subr.mxu0 0.0
          %474 = vmatpush1.xpose.msra.mxu0 0.0
          %475 = vmatprep.subr.mxu0 0.0
          %476 = vmatpush1.xpose.msra.mxu0 0.0
          %477 = vmatprep.subr.mxu0 0.0
          %478 = vmatpush1.xpose.msra.mxu0 0.0
          %479 = vmatprep.subr.mxu0 0.0
          %480 = vmatpush1.xpose.msra.mxu0 0.0
          %481 = vmatprep.subr.mxu0 0.0
          %482 = vmatpush1.xpose.msra.mxu0 0.0
          %483 = vmatprep.subr.mxu0 0.0
          %484 = vmatpush1.xpose.msra.mxu0 0.0
          %485 = vmatprep.subr.mxu0 0.0
          %486 = vmatpush1.xpose.msra.mxu0 0.0
          %487 = vmatprep.subr.mxu0 0.0
          %488 = vmatpush1.xpose.msra.mxu0 0.0
          %489 = vmatprep.subr.mxu0 0.0
          %490 = vmatpush1.xpose.msra.mxu0 0.0
          %491 = vmatprep.subr.mxu0 0.0
          %492 = vmatpush1.xpose.msra.mxu0 0.0
          %493 = vmatprep.subr.mxu0 0.0
          %494 = vmatpush1.xpose.msra.mxu0 0.0
          %495 = vmatprep.subr.mxu0 0.0
          %496 = vmatpush1.xpose.msra.mxu0 0.0
          %497 = vmatprep.subr.mxu0 0.0
          %498 = vmatpush1.xpose.msra.mxu0 0.0
          %499 = vmatprep.subr.mxu0 0.0
          %500 = vmatpush1.xpose.msra.mxu0 0.0
          %501 = vmatprep.subr.mxu0 0.0
          %502 = vmatpush1.xpose.msra.mxu0 0.0
          %503 = vmatprep.subr.mxu0 0.0
          %504 = vmatpush1.xpose.msra.mxu0 0.0
          %505 = vmatprep.subr.mxu0 0.0
          %506 = vmatpush1.xpose.msra.mxu0 0.0
          %507 = vmatprep.subr.mxu0 0.0
          %508 = vmatpush1.xpose.msra.mxu0 0.0
          %509 = vmatprep.subr.mxu0 0.0
          %510 = vmatpush1.xpose.msra.mxu0 0.0
          %511 = vmatprep.subr.mxu0 0.0
          %512 = vmatpush1.xpose.msra.mxu0 0.0
          %v513 = vand.u32 %v390, 4294901760
          %v514 = vsub.f32 %v390, %v513
          %v515 = vand.u32 %v514, 4294901760
          %v516 = vsub.f32 %v514, %v515
          %v517 = vand.u32 %v516, 4294901760
          %518 = vmatprep.mubr.f32.mxu0 %v517
          %v519 = vand.u32 %v389, 4294901760
          %v520 = vsub.f32 %v389, %v519
          %v521 = vand.u32 %v520, 4294901760
          %v522 = vsub.f32 %v520, %v521
          %v523 = vand.u32 %v522, 4294901760
          %524 = vmatmul.mubr.f32.gmra.mrb[0].mxu0 %v523
          %v525 = vpop.f32.mrb[0].mxu0
          %v526 = vadd.f32 0.0, %v525
          %v527 = vpop.f32.mrb[0].mxu0
          %528 = vdwg.mxu0
          %v529 = vand.u32 %v390, 4294901760
          %v530 = vsub.f32 %v390, %v529
          %v531 = vand.u32 %v530, 4294901760
          %v532 = vsub.f32 %v530, %v531
          %v533 = vand.u32 %v532, 4294901760
          %534 = vmatprep.subr.mxu0 %v533
          %v535 = vand.u32 %v389, 4294901760
          %v536 = vsub.f32 %v389, %v535
          %v537 = vand.u32 %v536, 4294901760
          %v538 = vsub.f32 %v536, %v537
          %v539 = vand.u32 %v538, 4294901760
          %540 = vmatpush1.xpose.msra.mxu0 %v539
          %541 = vmatprep.subr.mxu0 0.0
          %542 = vmatpush1.xpose.msra.mxu0 0.0
          %543 = vmatprep.subr.mxu0 0.0
          %544 = vmatpush1.xpose.msra.mxu0 0.0
          %545 = vmatprep.subr.mxu0 0.0
          %546 = vmatpush1.xpose.msra.mxu0 0.0
          %547 = vmatprep.subr.mxu0 0.0
          %548 = vmatpush1.xpose.msra.mxu0 0.0
          %549 = vmatprep.subr.mxu0 0.0
          %550 = vmatpush1.xpose.msra.mxu0 0.0
          %551 = vmatprep.subr.mxu0 0.0
          %552 = vmatpush1.xpose.msra.mxu0 0.0
          %553 = vmatprep.subr.mxu0 0.0
          %554 = vmatpush1.xpose.msra.mxu0 0.0
          %555 = vmatprep.subr.mxu0 0.0
          %556 = vmatpush1.xpose.msra.mxu0 0.0
          %557 = vmatprep.subr.mxu0 0.0
          %558 = vmatpush1.xpose.msra.mxu0 0.0
          %559 = vmatprep.subr.mxu0 0.0
          %560 = vmatpush1.xpose.msra.mxu0 0.0
          %561 = vmatprep.subr.mxu0 0.0
          %562 = vmatpush1.xpose.msra.mxu0 0.0
          %563 = vmatprep.subr.mxu0 0.0
          %564 = vmatpush1.xpose.msra.mxu0 0.0
          %565 = vmatprep.subr.mxu0 0.0
          %566 = vmatpush1.xpose.msra.mxu0 0.0
          %567 = vmatprep.subr.mxu0 0.0
          %568 = vmatpush1.xpose.msra.mxu0 0.0
          %569 = vmatprep.subr.mxu0 0.0
          %570 = vmatpush1.xpose.msra.mxu0 0.0
          %571 = vmatprep.subr.mxu0 0.0
          %572 = vmatpush1.xpose.msra.mxu0 0.0
          %573 = vmatprep.subr.mxu0 0.0
          %574 = vmatpush1.xpose.msra.mxu0 0.0
          %575 = vmatprep.subr.mxu0 0.0
          %576 = vmatpush1.xpose.msra.mxu0 0.0
          %577 = vmatprep.subr.mxu0 0.0
          %578 = vmatpush1.xpose.msra.mxu0 0.0
          %579 = vmatprep.subr.mxu0 0.0
          %580 = vmatpush1.xpose.msra.mxu0 0.0
          %581 = vmatprep.subr.mxu0 0.0
          %582 = vmatpush1.xpose.msra.mxu0 0.0
          %583 = vmatprep.subr.mxu0 0.0
          %584 = vmatpush1.xpose.msra.mxu0 0.0
          %585 = vmatprep.subr.mxu0 0.0
          %586 = vmatpush1.xpose.msra.mxu0 0.0
          %587 = vmatprep.subr.mxu0 0.0
          %588 = vmatpush1.xpose.msra.mxu0 0.0
          %589 = vmatprep.subr.mxu0 0.0
          %590 = vmatpush1.xpose.msra.mxu0 0.0
          %591 = vmatprep.subr.mxu0 0.0
          %592 = vmatpush1.xpose.msra.mxu0 0.0
          %593 = vmatprep.subr.mxu0 0.0
          %594 = vmatpush1.xpose.msra.mxu0 0.0
          %595 = vmatprep.subr.mxu0 0.0
          %596 = vmatpush1.xpose.msra.mxu0 0.0
          %597 = vmatprep.subr.mxu0 0.0
          %598 = vmatpush1.xpose.msra.mxu0 0.0
          %599 = vmatprep.subr.mxu0 0.0
          %600 = vmatpush1.xpose.msra.mxu0 0.0
          %601 = vmatprep.subr.mxu0 0.0
          %602 = vmatpush1.xpose.msra.mxu0 0.0
          %v603 = vand.u32 %v390, 4294901760
          %604 = vmatprep.mubr.f32.mxu0 %v603
          %v605 = vand.u32 %v389, 4294901760
          %606 = vmatmul.mubr.f32.gmra.mrb[0].mxu0 %v605
          %v607 = vpop.f32.mrb[0].mxu0
          %v608 = vadd.f32 %v526, %v607
          %v609 = vpop.f32.mrb[0].mxu0
          %610 = vdwg.mxu0
          %v611 = vand.u32 %v390, 4294901760
          %v612 = vsub.f32 %v390, %v611
          %613 = vmatprep.subr.mxu0 %v612
          %v614 = vand.u32 %v389, 4294901760
          %v615 = vsub.f32 %v389, %v614
          %616 = vmatpush1.xpose.msra.mxu0 %v615
          %617 = vmatprep.subr.mxu0 0.0
          %618 = vmatpush1.xpose.msra.mxu0 0.0
          %619 = vmatprep.subr.mxu0 0.0
          %620 = vmatpush1.xpose.msra.mxu0 0.0
          %621 = vmatprep.subr.mxu0 0.0
          %622 = vmatpush1.xpose.msra.mxu0 0.0
          %623 = vmatprep.subr.mxu0 0.0
          %624 = vmatpush1.xpose.msra.mxu0 0.0
          %625 = vmatprep.subr.mxu0 0.0
          %626 = vmatpush1.xpose.msra.mxu0 0.0
          %627 = vmatprep.subr.mxu0 0.0
          %628 = vmatpush1.xpose.msra.mxu0 0.0
          %629 = vmatprep.subr.mxu0 0.0
          %630 = vmatpush1.xpose.msra.mxu0 0.0
          %631 = vmatprep.subr.mxu0 0.0
          %632 = vmatpush1.xpose.msra.mxu0 0.0
          %633 = vmatprep.subr.mxu0 0.0
          %634 = vmatpush1.xpose.msra.mxu0 0.0
          %635 = vmatprep.subr.mxu0 0.0
          %636 = vmatpush1.xpose.msra.mxu0 0.0
          %637 = vmatprep.subr.mxu0 0.0
          %638 = vmatpush1.xpose.msra.mxu0 0.0
          %639 = vmatprep.subr.mxu0 0.0
          %640 = vmatpush1.xpose.msra.mxu0 0.0
          %641 = vmatprep.subr.mxu0 0.0
          %642 = vmatpush1.xpose.msra.mxu0 0.0
          %643 = vmatprep.subr.mxu0 0.0
          %644 = vmatpush1.xpose.msra.mxu0 0.0
          %645 = vmatprep.subr.mxu0 0.0
          %646 = vmatpush1.xpose.msra.mxu0 0.0
          %647 = vmatprep.subr.mxu0 0.0
          %648 = vmatpush1.xpose.msra.mxu0 0.0
          %649 = vmatprep.subr.mxu0 0.0
          %650 = vmatpush1.xpose.msra.mxu0 0.0
          %651 = vmatprep.subr.mxu0 0.0
          %652 = vmatpush1.xpose.msra.mxu0 0.0
          %653 = vmatprep.subr.mxu0 0.0
          %654 = vmatpush1.xpose.msra.mxu0 0.0
          %655 = vmatprep.subr.mxu0 0.0
          %656 = vmatpush1.xpose.msra.mxu0 0.0
          %657 = vmatprep.subr.mxu0 0.0
          %658 = vmatpush1.xpose.msra.mxu0 0.0
          %659 = vmatprep.subr.mxu0 0.0
          %660 = vmatpush1.xpose.msra.mxu0 0.0
          %661 = vmatprep.subr.mxu0 0.0
          %662 = vmatpush1.xpose.msra.mxu0 0.0
          %663 = vmatprep.subr.mxu0 0.0
          %664 = vmatpush1.xpose.msra.mxu0 0.0
          %665 = vmatprep.subr.mxu0 0.0
          %666 = vmatpush1.xpose.msra.mxu0 0.0
          %667 = vmatprep.subr.mxu0 0.0
          %668 = vmatpush1.xpose.msra.mxu0 0.0
          %669 = vmatprep.subr.mxu0 0.0
          %670 = vmatpush1.xpose.msra.mxu0 0.0
          %671 = vmatprep.subr.mxu0 0.0
          %672 = vmatpush1.xpose.msra.mxu0 0.0
          %673 = vmatprep.subr.mxu0 0.0
          %674 = vmatpush1.xpose.msra.mxu0 0.0
          %675 = vmatprep.subr.mxu0 0.0
          %676 = vmatpush1.xpose.msra.mxu0 0.0
          %677 = vmatprep.subr.mxu0 0.0
          %678 = vmatpush1.xpose.msra.mxu0 0.0
          %v679 = vand.u32 %v390, 4294901760
          %v680 = vsub.f32 %v390, %v679
          %681 = vmatprep.mubr.f32.mxu0 %v680
          %v682 = vand.u32 %v389, 4294901760
          %v683 = vsub.f32 %v389, %v682
          %684 = vmatmul.mubr.f32.gmra.mrb[0].mxu0 %v683
          %v685 = vpop.f32.mrb[0].mxu0
          %v686 = vadd.f32 %v608, %v685
          %v687 = vpop.f32.mrb[0].mxu0
          %688 = vdwg.mxu0
          %v689 = vand.u32 %v390, 4294901760
          %690 = vmatprep.subr.mxu0 %v689
          %v691 = vand.u32 %v389, 4294901760
          %692 = vmatpush1.xpose.msra.mxu0 %v691
          %693 = vmatprep.subr.mxu0 0.0
          %694 = vmatpush1.xpose.msra.mxu0 0.0
          %695 = vmatprep.subr.mxu0 0.0
          %696 = vmatpush1.xpose.msra.mxu0 0.0
          %697 = vmatprep.subr.mxu0 0.0
          %698 = vmatpush1.xpose.msra.mxu0 0.0
          %699 = vmatprep.subr.mxu0 0.0
          %700 = vmatpush1.xpose.msra.mxu0 0.0
          %701 = vmatprep.subr.mxu0 0.0
          %702 = vmatpush1.xpose.msra.mxu0 0.0
          %703 = vmatprep.subr.mxu0 0.0
          %704 = vmatpush1.xpose.msra.mxu0 0.0
          %705 = vmatprep.subr.mxu0 0.0
          %706 = vmatpush1.xpose.msra.mxu0 0.0
          %707 = vmatprep.subr.mxu0 0.0
          %708 = vmatpush1.xpose.msra.mxu0 0.0
          %709 = vmatprep.subr.mxu0 0.0
          %710 = vmatpush1.xpose.msra.mxu0 0.0
          %711 = vmatprep.subr.mxu0 0.0
          %712 = vmatpush1.xpose.msra.mxu0 0.0
          %713 = vmatprep.subr.mxu0 0.0
          %714 = vmatpush1.xpose.msra.mxu0 0.0
          %715 = vmatprep.subr.mxu0 0.0
          %716 = vmatpush1.xpose.msra.mxu0 0.0
          %717 = vmatprep.subr.mxu0 0.0
          %718 = vmatpush1.xpose.msra.mxu0 0.0
          %719 = vmatprep.subr.mxu0 0.0
          %720 = vmatpush1.xpose.msra.mxu0 0.0
          %721 = vmatprep.subr.mxu0 0.0
          %722 = vmatpush1.xpose.msra.mxu0 0.0
          %723 = vmatprep.subr.mxu0 0.0
          %724 = vmatpush1.xpose.msra.mxu0 0.0
          %725 = vmatprep.subr.mxu0 0.0
          %726 = vmatpush1.xpose.msra.mxu0 0.0
          %727 = vmatprep.subr.mxu0 0.0
          %728 = vmatpush1.xpose.msra.mxu0 0.0
          %729 = vmatprep.subr.mxu0 0.0
          %730 = vmatpush1.xpose.msra.mxu0 0.0
          %731 = vmatprep.subr.mxu0 0.0
          %732 = vmatpush1.xpose.msra.mxu0 0.0
          %733 = vmatprep.subr.mxu0 0.0
          %734 = vmatpush1.xpose.msra.mxu0 0.0
          %735 = vmatprep.subr.mxu0 0.0
          %736 = vmatpush1.xpose.msra.mxu0 0.0
          %737 = vmatprep.subr.mxu0 0.0
          %738 = vmatpush1.xpose.msra.mxu0 0.0
          %739 = vmatprep.subr.mxu0 0.0
          %740 = vmatpush1.xpose.msra.mxu0 0.0
          %741 = vmatprep.subr.mxu0 0.0
          %742 = vmatpush1.xpose.msra.mxu0 0.0
          %743 = vmatprep.subr.mxu0 0.0
          %744 = vmatpush1.xpose.msra.mxu0 0.0
          %745 = vmatprep.subr.mxu0 0.0
          %746 = vmatpush1.xpose.msra.mxu0 0.0
          %747 = vmatprep.subr.mxu0 0.0
          %748 = vmatpush1.xpose.msra.mxu0 0.0
          %749 = vmatprep.subr.mxu0 0.0
          %750 = vmatpush1.xpose.msra.mxu0 0.0
          %751 = vmatprep.subr.mxu0 0.0
          %752 = vmatpush1.xpose.msra.mxu0 0.0
          %753 = vmatprep.subr.mxu0 0.0
          %754 = vmatpush1.xpose.msra.mxu0 0.0
          %v755 = vand.u32 %v390, 4294901760
          %v756 = vsub.f32 %v390, %v755
          %v757 = vand.u32 %v756, 4294901760
          %758 = vmatprep.mubr.f32.mxu0 %v757
          %v759 = vand.u32 %v389, 4294901760
          %v760 = vsub.f32 %v389, %v759
          %v761 = vand.u32 %v760, 4294901760
          %762 = vmatmul.mubr.f32.gmra.mrb[0].mxu0 %v761
          %v763 = vpop.f32.mrb[0].mxu0
          %v764 = vadd.f32 %v686, %v763
          %v765 = vpop.f32.mrb[0].mxu0
          %766 = vdwg.mxu0
          %v767 = vand.u32 %v390, 4294901760
          %v768 = vsub.f32 %v390, %v767
          %v769 = vand.u32 %v768, 4294901760
          %770 = vmatprep.subr.mxu0 %v769
          %v771 = vand.u32 %v389, 4294901760
          %v772 = vsub.f32 %v389, %v771
          %v773 = vand.u32 %v772, 4294901760
          %774 = vmatpush1.xpose.msra.mxu0 %v773
          %775 = vmatprep.subr.mxu0 0.0
          %776 = vmatpush1.xpose.msra.mxu0 0.0
          %777 = vmatprep.subr.mxu0 0.0
          %778 = vmatpush1.xpose.msra.mxu0 0.0
          %779 = vmatprep.subr.mxu0 0.0
          %780 = vmatpush1.xpose.msra.mxu0 0.0
          %781 = vmatprep.subr.mxu0 0.0
          %782 = vmatpush1.xpose.msra.mxu0 0.0
          %783 = vmatprep.subr.mxu0 0.0
          %784 = vmatpush1.xpose.msra.mxu0 0.0
          %785 = vmatprep.subr.mxu0 0.0
          %786 = vmatpush1.xpose.msra.mxu0 0.0
          %787 = vmatprep.subr.mxu0 0.0
          %788 = vmatpush1.xpose.msra.mxu0 0.0
          %789 = vmatprep.subr.mxu0 0.0
          %790 = vmatpush1.xpose.msra.mxu0 0.0
          %791 = vmatprep.subr.mxu0 0.0
          %792 = vmatpush1.xpose.msra.mxu0 0.0
          %793 = vmatprep.subr.mxu0 0.0
          %794 = vmatpush1.xpose.msra.mxu0 0.0
          %795 = vmatprep.subr.mxu0 0.0
          %796 = vmatpush1.xpose.msra.mxu0 0.0
          %797 = vmatprep.subr.mxu0 0.0
          %798 = vmatpush1.xpose.msra.mxu0 0.0
          %799 = vmatprep.subr.mxu0 0.0
          %800 = vmatpush1.xpose.msra.mxu0 0.0
          %801 = vmatprep.subr.mxu0 0.0
          %802 = vmatpush1.xpose.msra.mxu0 0.0
          %803 = vmatprep.subr.mxu0 0.0
          %804 = vmatpush1.xpose.msra.mxu0 0.0
          %805 = vmatprep.subr.mxu0 0.0
          %806 = vmatpush1.xpose.msra.mxu0 0.0
          %807 = vmatprep.subr.mxu0 0.0
          %808 = vmatpush1.xpose.msra.mxu0 0.0
          %809 = vmatprep.subr.mxu0 0.0
          %810 = vmatpush1.xpose.msra.mxu0 0.0
          %811 = vmatprep.subr.mxu0 0.0
          %812 = vmatpush1.xpose.msra.mxu0 0.0
          %813 = vmatprep.subr.mxu0 0.0
          %814 = vmatpush1.xpose.msra.mxu0 0.0
          %815 = vmatprep.subr.mxu0 0.0
          %816 = vmatpush1.xpose.msra.mxu0 0.0
          %817 = vmatprep.subr.mxu0 0.0
          %818 = vmatpush1.xpose.msra.mxu0 0.0
          %819 = vmatprep.subr.mxu0 0.0
          %820 = vmatpush1.xpose.msra.mxu0 0.0
          %821 = vmatprep.subr.mxu0 0.0
          %822 = vmatpush1.xpose.msra.mxu0 0.0
          %823 = vmatprep.subr.mxu0 0.0
          %824 = vmatpush1.xpose.msra.mxu0 0.0
          %825 = vmatprep.subr.mxu0 0.0
          %826 = vmatpush1.xpose.msra.mxu0 0.0
          %827 = vmatprep.subr.mxu0 0.0
          %828 = vmatpush1.xpose.msra.mxu0 0.0
          %829 = vmatprep.subr.mxu0 0.0
          %830 = vmatpush1.xpose.msra.mxu0 0.0
          %831 = vmatprep.subr.mxu0 0.0
          %832 = vmatpush1.xpose.msra.mxu0 0.0
          %833 = vmatprep.subr.mxu0 0.0
          %834 = vmatpush1.xpose.msra.mxu0 0.0
          %835 = vmatprep.subr.mxu0 0.0
          %836 = vmatpush1.xpose.msra.mxu0 0.0
          %v837 = vand.u32 %v390, 4294901760
          %838 = vmatprep.mubr.f32.mxu0 %v837
          %v839 = vand.u32 %v389, 4294901760
          %840 = vmatmul.mubr.f32.gmra.mrb[0].mxu0 %v839
          %v841 = vpop.f32.mrb[0].mxu0
          %v842 = vadd.f32 %v764, %v841
          %v843 = vpop.f32.mrb[0].mxu0
          %844 = vdwg.mxu0
          %v845 = vand.u32 %v390, 4294901760
          %846 = vmatprep.subr.mxu0 %v845
          %v847 = vand.u32 %v389, 4294901760
          %848 = vmatpush1.xpose.msra.mxu0 %v847
          %849 = vmatprep.subr.mxu0 0.0
          %850 = vmatpush1.xpose.msra.mxu0 0.0
          %851 = vmatprep.subr.mxu0 0.0
          %852 = vmatpush1.xpose.msra.mxu0 0.0
          %853 = vmatprep.subr.mxu0 0.0
          %854 = vmatpush1.xpose.msra.mxu0 0.0
          %855 = vmatprep.subr.mxu0 0.0
          %856 = vmatpush1.xpose.msra.mxu0 0.0
          %857 = vmatprep.subr.mxu0 0.0
          %858 = vmatpush1.xpose.msra.mxu0 0.0
          %859 = vmatprep.subr.mxu0 0.0
          %860 = vmatpush1.xpose.msra.mxu0 0.0
          %861 = vmatprep.subr.mxu0 0.0
          %862 = vmatpush1.xpose.msra.mxu0 0.0
          %863 = vmatprep.subr.mxu0 0.0
          %864 = vmatpush1.xpose.msra.mxu0 0.0
          %865 = vmatprep.subr.mxu0 0.0
          %866 = vmatpush1.xpose.msra.mxu0 0.0
          %867 = vmatprep.subr.mxu0 0.0
          %868 = vmatpush1.xpose.msra.mxu0 0.0
          %869 = vmatprep.subr.mxu0 0.0
          %870 = vmatpush1.xpose.msra.mxu0 0.0
          %871 = vmatprep.subr.mxu0 0.0
          %872 = vmatpush1.xpose.msra.mxu0 0.0
          %873 = vmatprep.subr.mxu0 0.0
          %874 = vmatpush1.xpose.msra.mxu0 0.0
          %875 = vmatprep.subr.mxu0 0.0
          %876 = vmatpush1.xpose.msra.mxu0 0.0
          %877 = vmatprep.subr.mxu0 0.0
          %878 = vmatpush1.xpose.msra.mxu0 0.0
          %879 = vmatprep.subr.mxu0 0.0
          %880 = vmatpush1.xpose.msra.mxu0 0.0
          %881 = vmatprep.subr.mxu0 0.0
          %882 = vmatpush1.xpose.msra.mxu0 0.0
          %883 = vmatprep.subr.mxu0 0.0
          %884 = vmatpush1.xpose.msra.mxu0 0.0
          %885 = vmatprep.subr.mxu0 0.0
          %886 = vmatpush1.xpose.msra.mxu0 0.0
          %887 = vmatprep.subr.mxu0 0.0
          %888 = vmatpush1.xpose.msra.mxu0 0.0
          %889 = vmatprep.subr.mxu0 0.0
          %890 = vmatpush1.xpose.msra.mxu0 0.0
          %891 = vmatprep.subr.mxu0 0.0
          %892 = vmatpush1.xpose.msra.mxu0 0.0
          %893 = vmatprep.subr.mxu0 0.0
          %894 = vmatpush1.xpose.msra.mxu0 0.0
          %895 = vmatprep.subr.mxu0 0.0
          %896 = vmatpush1.xpose.msra.mxu0 0.0
          %897 = vmatprep.subr.mxu0 0.0
          %898 = vmatpush1.xpose.msra.mxu0 0.0
          %899 = vmatprep.subr.mxu0 0.0
          %900 = vmatpush1.xpose.msra.mxu0 0.0
          %901 = vmatprep.subr.mxu0 0.0
          %902 = vmatpush1.xpose.msra.mxu0 0.0
          %903 = vmatprep.subr.mxu0 0.0
          %904 = vmatpush1.xpose.msra.mxu0 0.0
          %905 = vmatprep.subr.mxu0 0.0
          %906 = vmatpush1.xpose.msra.mxu0 0.0
          %907 = vmatprep.subr.mxu0 0.0
          %908 = vmatpush1.xpose.msra.mxu0 0.0
          %909 = vmatprep.subr.mxu0 0.0
          %910 = vmatpush1.xpose.msra.mxu0 0.0
          %v911 = vand.u32 %v390, 4294901760
          %912 = vmatprep.mubr.f32.mxu0 %v911
          %v913 = vand.u32 %v389, 4294901760
          %914 = vmatmul.mubr.f32.gmra.mrb[0].mxu0 %v913
          %v915 = vpop.f32.mrb[0].mxu0
          %v916 = vadd.f32 %v842, %v915
          %v917 = vpop.f32.mrb[0].mxu0
          %918 = vdwg.mxu0
          %v919 = vand.u32 %v392, 4294901760
          %920 = vmatprep.subr.mxu0 %v919
          %v921 = vand.u32 %v391, 4294901760
          %922 = vmatpush1.xpose.msra.mxu0 %v921
          %923 = vmatprep.subr.mxu0 0.0
          %924 = vmatpush1.xpose.msra.mxu0 0.0
          %925 = vmatprep.subr.mxu0 0.0
          %926 = vmatpush1.xpose.msra.mxu0 0.0
          %927 = vmatprep.subr.mxu0 0.0
          %928 = vmatpush1.xpose.msra.mxu0 0.0
          %929 = vmatprep.subr.mxu0 0.0
          %930 = vmatpush1.xpose.msra.mxu0 0.0
          %931 = vmatprep.subr.mxu0 0.0
          %932 = vmatpush1.xpose.msra.mxu0 0.0
          %933 = vmatprep.subr.mxu0 0.0
          %934 = vmatpush1.xpose.msra.mxu0 0.0
          %935 = vmatprep.subr.mxu0 0.0
          %936 = vmatpush1.xpose.msra.mxu0 0.0
          %937 = vmatprep.subr.mxu0 0.0
          %938 = vmatpush1.xpose.msra.mxu0 0.0
          %939 = vmatprep.subr.mxu0 0.0
          %940 = vmatpush1.xpose.msra.mxu0 0.0
          %941 = vmatprep.subr.mxu0 0.0
          %942 = vmatpush1.xpose.msra.mxu0 0.0
          %943 = vmatprep.subr.mxu0 0.0
          %944 = vmatpush1.xpose.msra.mxu0 0.0
          %945 = vmatprep.subr.mxu0 0.0
          %946 = vmatpush1.xpose.msra.mxu0 0.0
          %947 = vmatprep.subr.mxu0 0.0
          %948 = vmatpush1.xpose.msra.mxu0 0.0
          %949 = vmatprep.subr.mxu0 0.0
          %950 = vmatpush1.xpose.msra.mxu0 0.0
          %951 = vmatprep.subr.mxu0 0.0
          %952 = vmatpush1.xpose.msra.mxu0 0.0
          %953 = vmatprep.subr.mxu0 0.0
          %954 = vmatpush1.xpose.msra.mxu0 0.0
          %955 = vmatprep.subr.mxu0 0.0
          %956 = vmatpush1.xpose.msra.mxu0 0.0
          %957 = vmatprep.subr.mxu0 0.0
          %958 = vmatpush1.xpose.msra.mxu0 0.0
          %959 = vmatprep.subr.mxu0 0.0
          %960 = vmatpush1.xpose.msra.mxu0 0.0
          %961 = vmatprep.subr.mxu0 0.0
          %962 = vmatpush1.xpose.msra.mxu0 0.0
          %963 = vmatprep.subr.mxu0 0.0
          %964 = vmatpush1.xpose.msra.mxu0 0.0
          %965 = vmatprep.subr.mxu0 0.0
          %966 = vmatpush1.xpose.msra.mxu0 0.0
          %967 = vmatprep.subr.mxu0 0.0
          %968 = vmatpush1.xpose.msra.mxu0 0.0
          %969 = vmatprep.subr.mxu0 0.0
          %970 = vmatpush1.xpose.msra.mxu0 0.0
          %971 = vmatprep.subr.mxu0 0.0
          %972 = vmatpush1.xpose.msra.mxu0 0.0
          %973 = vmatprep.subr.mxu0 0.0
          %974 = vmatpush1.xpose.msra.mxu0 0.0
          %975 = vmatprep.subr.mxu0 0.0
          %976 = vmatpush1.xpose.msra.mxu0 0.0
          %977 = vmatprep.subr.mxu0 0.0
          %978 = vmatpush1.xpose.msra.mxu0 0.0
          %979 = vmatprep.subr.mxu0 0.0
          %980 = vmatpush1.xpose.msra.mxu0 0.0
          %981 = vmatprep.subr.mxu0 0.0
          %982 = vmatpush1.xpose.msra.mxu0 0.0
          %983 = vmatprep.subr.mxu0 0.0
          %984 = vmatpush1.xpose.msra.mxu0 0.0
          %v985 = vand.u32 %v392, 4294901760
          %v986 = vsub.f32 %v392, %v985
          %v987 = vand.u32 %v986, 4294901760
          %v988 = vsub.f32 %v986, %v987
          %v989 = vand.u32 %v988, 4294901760
          %990 = vmatprep.mubr.f32.mxu0 %v989
          %v991 = vand.u32 %v391, 4294901760
          %v992 = vsub.f32 %v391, %v991
          %v993 = vand.u32 %v992, 4294901760
          %v994 = vsub.f32 %v992, %v993
          %v995 = vand.u32 %v994, 4294901760
          %996 = vmatmul.mubr.f32.gmra.mrb[0].mxu0 %v995
          %v997 = vpop.f32.mrb[0].mxu0
          %v998 = vadd.f32 %v916, %v997
          %v999 = vpop.f32.mrb[0].mxu0
          %1000 = vdwg.mxu0
          %v1001 = vand.u32 %v392, 4294901760
          %v1002 = vsub.f32 %v392, %v1001
          %v1003 = vand.u32 %v1002, 4294901760
          %v1004 = vsub.f32 %v1002, %v1003
          %v1005 = vand.u32 %v1004, 4294901760
          %1006 = vmatprep.subr.mxu0 %v1005
          %v1007 = vand.u32 %v391, 4294901760
          %v1008 = vsub.f32 %v391, %v1007
          %v1009 = vand.u32 %v1008, 4294901760
          %v1010 = vsub.f32 %v1008, %v1009
          %v1011 = vand.u32 %v1010, 4294901760
          %1012 = vmatpush1.xpose.msra.mxu0 %v1011
          %1013 = vmatprep.subr.mxu0 0.0
          %1014 = vmatpush1.xpose.msra.mxu0 0.0
          %1015 = vmatprep.subr.mxu0 0.0
          %1016 = vmatpush1.xpose.msra.mxu0 0.0
          %1017 = vmatprep.subr.mxu0 0.0
          %1018 = vmatpush1.xpose.msra.mxu0 0.0
          %1019 = vmatprep.subr.mxu0 0.0
          %1020 = vmatpush1.xpose.msra.mxu0 0.0
          %1021 = vmatprep.subr.mxu0 0.0
          %1022 = vmatpush1.xpose.msra.mxu0 0.0
          %1023 = vmatprep.subr.mxu0 0.0
          %1024 = vmatpush1.xpose.msra.mxu0 0.0
          %1025 = vmatprep.subr.mxu0 0.0
          %1026 = vmatpush1.xpose.msra.mxu0 0.0
          %1027 = vmatprep.subr.mxu0 0.0
          %1028 = vmatpush1.xpose.msra.mxu0 0.0
          %1029 = vmatprep.subr.mxu0 0.0
          %1030 = vmatpush1.xpose.msra.mxu0 0.0
          %1031 = vmatprep.subr.mxu0 0.0
          %1032 = vmatpush1.xpose.msra.mxu0 0.0
          %1033 = vmatprep.subr.mxu0 0.0
          %1034 = vmatpush1.xpose.msra.mxu0 0.0
          %1035 = vmatprep.subr.mxu0 0.0
          %1036 = vmatpush1.xpose.msra.mxu0 0.0
          %1037 = vmatprep.subr.mxu0 0.0
          %1038 = vmatpush1.xpose.msra.mxu0 0.0
          %1039 = vmatprep.subr.mxu0 0.0
          %1040 = vmatpush1.xpose.msra.mxu0 0.0
          %1041 = vmatprep.subr.mxu0 0.0
          %1042 = vmatpush1.xpose.msra.mxu0 0.0
          %1043 = vmatprep.subr.mxu0 0.0
          %1044 = vmatpush1.xpose.msra.mxu0 0.0
          %1045 = vmatprep.subr.mxu0 0.0
          %1046 = vmatpush1.xpose.msra.mxu0 0.0
          %1047 = vmatprep.subr.mxu0 0.0
          %1048 = vmatpush1.xpose.msra.mxu0 0.0
          %1049 = vmatprep.subr.mxu0 0.0
          %1050 = vmatpush1.xpose.msra.mxu0 0.0
          %1051 = vmatprep.subr.mxu0 0.0
          %1052 = vmatpush1.xpose.msra.mxu0 0.0
          %1053 = vmatprep.subr.mxu0 0.0
          %1054 = vmatpush1.xpose.msra.mxu0 0.0
          %1055 = vmatprep.subr.mxu0 0.0
          %1056 = vmatpush1.xpose.msra.mxu0 0.0
          %1057 = vmatprep.subr.mxu0 0.0
          %1058 = vmatpush1.xpose.msra.mxu0 0.0
          %1059 = vmatprep.subr.mxu0 0.0
          %1060 = vmatpush1.xpose.msra.mxu0 0.0
          %1061 = vmatprep.subr.mxu0 0.0
          %1062 = vmatpush1.xpose.msra.mxu0 0.0
          %1063 = vmatprep.subr.mxu0 0.0
          %1064 = vmatpush1.xpose.msra.mxu0 0.0
          %1065 = vmatprep.subr.mxu0 0.0
          %1066 = vmatpush1.xpose.msra.mxu0 0.0
          %1067 = vmatprep.subr.mxu0 0.0
          %1068 = vmatpush1.xpose.msra.mxu0 0.0
          %1069 = vmatprep.subr.mxu0 0.0
          %1070 = vmatpush1.xpose.msra.mxu0 0.0
          %1071 = vmatprep.subr.mxu0 0.0
          %1072 = vmatpush1.xpose.msra.mxu0 0.0
          %1073 = vmatprep.subr.mxu0 0.0
          %1074 = vmatpush1.xpose.msra.mxu0 0.0
          %v1075 = vand.u32 %v392, 4294901760
          %1076 = vmatprep.mubr.f32.mxu0 %v1075
          %v1077 = vand.u32 %v391, 4294901760
          %1078 = vmatmul.mubr.f32.gmra.mrb[0].mxu0 %v1077
          %v1079 = vpop.f32.mrb[0].mxu0
          %v1080 = vadd.f32 %v998, %v1079
          %v1081 = vpop.f32.mrb[0].mxu0
          %1082 = vdwg.mxu0
          %v1083 = vand.u32 %v392, 4294901760
          %v1084 = vsub.f32 %v392, %v1083
          %1085 = vmatprep.subr.mxu0 %v1084
          %v1086 = vand.u32 %v391, 4294901760
          %v1087 = vsub.f32 %v391, %v1086
          %1088 = vmatpush1.xpose.msra.mxu0 %v1087
          %1089 = vmatprep.subr.mxu0 0.0
          %1090 = vmatpush1.xpose.msra.mxu0 0.0
          %1091 = vmatprep.subr.mxu0 0.0
          %1092 = vmatpush1.xpose.msra.mxu0 0.0
          %1093 = vmatprep.subr.mxu0 0.0
          %1094 = vmatpush1.xpose.msra.mxu0 0.0
          %1095 = vmatprep.subr.mxu0 0.0
          %1096 = vmatpush1.xpose.msra.mxu0 0.0
          %1097 = vmatprep.subr.mxu0 0.0
          %1098 = vmatpush1.xpose.msra.mxu0 0.0
          %1099 = vmatprep.subr.mxu0 0.0
          %1100 = vmatpush1.xpose.msra.mxu0 0.0
          %1101 = vmatprep.subr.mxu0 0.0
          %1102 = vmatpush1.xpose.msra.mxu0 0.0
          %1103 = vmatprep.subr.mxu0 0.0
          %1104 = vmatpush1.xpose.msra.mxu0 0.0
          %1105 = vmatprep.subr.mxu0 0.0
          %1106 = vmatpush1.xpose.msra.mxu0 0.0
          %1107 = vmatprep.subr.mxu0 0.0
          %1108 = vmatpush1.xpose.msra.mxu0 0.0
          %1109 = vmatprep.subr.mxu0 0.0
          %1110 = vmatpush1.xpose.msra.mxu0 0.0
          %1111 = vmatprep.subr.mxu0 0.0
          %1112 = vmatpush1.xpose.msra.mxu0 0.0
          %1113 = vmatprep.subr.mxu0 0.0
          %1114 = vmatpush1.xpose.msra.mxu0 0.0
          %1115 = vmatprep.subr.mxu0 0.0
          %1116 = vmatpush1.xpose.msra.mxu0 0.0
          %1117 = vmatprep.subr.mxu0 0.0
          %1118 = vmatpush1.xpose.msra.mxu0 0.0
          %1119 = vmatprep.subr.mxu0 0.0
          %1120 = vmatpush1.xpose.msra.mxu0 0.0
          %1121 = vmatprep.subr.mxu0 0.0
          %1122 = vmatpush1.xpose.msra.mxu0 0.0
          %1123 = vmatprep.subr.mxu0 0.0
          %1124 = vmatpush1.xpose.msra.mxu0 0.0
          %1125 = vmatprep.subr.mxu0 0.0
          %1126 = vmatpush1.xpose.msra.mxu0 0.0
          %1127 = vmatprep.subr.mxu0 0.0
          %1128 = vmatpush1.xpose.msra.mxu0 0.0
          %1129 = vmatprep.subr.mxu0 0.0
          %1130 = vmatpush1.xpose.msra.mxu0 0.0
          %1131 = vmatprep.subr.mxu0 0.0
          %1132 = vmatpush1.xpose.msra.mxu0 0.0
          %1133 = vmatprep.subr.mxu0 0.0
          %1134 = vmatpush1.xpose.msra.mxu0 0.0
          %1135 = vmatprep.subr.mxu0 0.0
          %1136 = vmatpush1.xpose.msra.mxu0 0.0
          %1137 = vmatprep.subr.mxu0 0.0
          %1138 = vmatpush1.xpose.msra.mxu0 0.0
          %1139 = vmatprep.subr.mxu0 0.0
          %1140 = vmatpush1.xpose.msra.mxu0 0.0
          %1141 = vmatprep.subr.mxu0 0.0
          %1142 = vmatpush1.xpose.msra.mxu0 0.0
          %1143 = vmatprep.subr.mxu0 0.0
          %1144 = vmatpush1.xpose.msra.mxu0 0.0
          %1145 = vmatprep.subr.mxu0 0.0
          %1146 = vmatpush1.xpose.msra.mxu0 0.0
          %1147 = vmatprep.subr.mxu0 0.0
          %1148 = vmatpush1.xpose.msra.mxu0 0.0
          %1149 = vmatprep.subr.mxu0 0.0
          %1150 = vmatpush1.xpose.msra.mxu0 0.0
          %v1151 = vand.u32 %v392, 4294901760
          %v1152 = vsub.f32 %v392, %v1151
          %1153 = vmatprep.mubr.f32.mxu0 %v1152
          %v1154 = vand.u32 %v391, 4294901760
          %v1155 = vsub.f32 %v391, %v1154
          %1156 = vmatmul.mubr.f32.gmra.mrb[0].mxu0 %v1155
          %v1157 = vpop.f32.mrb[0].mxu0
          %v1158 = vadd.f32 %v1080, %v1157
          %v1159 = vpop.f32.mrb[0].mxu0
          %1160 = vdwg.mxu0
          %v1161 = vand.u32 %v392, 4294901760
          %1162 = vmatprep.subr.mxu0 %v1161
          %v1163 = vand.u32 %v391, 4294901760
          %1164 = vmatpush1.xpose.msra.mxu0 %v1163
          %1165 = vmatprep.subr.mxu0 0.0
          %1166 = vmatpush1.xpose.msra.mxu0 0.0
          %1167 = vmatprep.subr.mxu0 0.0
          %1168 = vmatpush1.xpose.msra.mxu0 0.0
          %1169 = vmatprep.subr.mxu0 0.0
          %1170 = vmatpush1.xpose.msra.mxu0 0.0
          %1171 = vmatprep.subr.mxu0 0.0
          %1172 = vmatpush1.xpose.msra.mxu0 0.0
          %1173 = vmatprep.subr.mxu0 0.0
          %1174 = vmatpush1.xpose.msra.mxu0 0.0
          %1175 = vmatprep.subr.mxu0 0.0
          %1176 = vmatpush1.xpose.msra.mxu0 0.0
          %1177 = vmatprep.subr.mxu0 0.0
          %1178 = vmatpush1.xpose.msra.mxu0 0.0
          %1179 = vmatprep.subr.mxu0 0.0
          %1180 = vmatpush1.xpose.msra.mxu0 0.0
          %1181 = vmatprep.subr.mxu0 0.0
          %1182 = vmatpush1.xpose.msra.mxu0 0.0
          %1183 = vmatprep.subr.mxu0 0.0
          %1184 = vmatpush1.xpose.msra.mxu0 0.0
          %1185 = vmatprep.subr.mxu0 0.0
          %1186 = vmatpush1.xpose.msra.mxu0 0.0
          %1187 = vmatprep.subr.mxu0 0.0
          %1188 = vmatpush1.xpose.msra.mxu0 0.0
          %1189 = vmatprep.subr.mxu0 0.0
          %1190 = vmatpush1.xpose.msra.mxu0 0.0
          %1191 = vmatprep.subr.mxu0 0.0
          %1192 = vmatpush1.xpose.msra.mxu0 0.0
          %1193 = vmatprep.subr.mxu0 0.0
          %1194 = vmatpush1.xpose.msra.mxu0 0.0
          %1195 = vmatprep.subr.mxu0 0.0
          %1196 = vmatpush1.xpose.msra.mxu0 0.0
          %1197 = vmatprep.subr.mxu0 0.0
          %1198 = vmatpush1.xpose.msra.mxu0 0.0
          %1199 = vmatprep.subr.mxu0 0.0
          %1200 = vmatpush1.xpose.msra.mxu0 0.0
          %1201 = vmatprep.subr.mxu0 0.0
          %1202 = vmatpush1.xpose.msra.mxu0 0.0
          %1203 = vmatprep.subr.mxu0 0.0
          %1204 = vmatpush1.xpose.msra.mxu0 0.0
          %1205 = vmatprep.subr.mxu0 0.0
          %1206 = vmatpush1.xpose.msra.mxu0 0.0
          %1207 = vmatprep.subr.mxu0 0.0
          %1208 = vmatpush1.xpose.msra.mxu0 0.0
          %1209 = vmatprep.subr.mxu0 0.0
          %1210 = vmatpush1.xpose.msra.mxu0 0.0
          %1211 = vmatprep.subr.mxu0 0.0
          %1212 = vmatpush1.xpose.msra.mxu0 0.0
          %1213 = vmatprep.subr.mxu0 0.0
          %1214 = vmatpush1.xpose.msra.mxu0 0.0
          %1215 = vmatprep.subr.mxu0 0.0
          %1216 = vmatpush1.xpose.msra.mxu0 0.0
          %1217 = vmatprep.subr.mxu0 0.0
          %1218 = vmatpush1.xpose.msra.mxu0 0.0
          %1219 = vmatprep.subr.mxu0 0.0
          %1220 = vmatpush1.xpose.msra.mxu0 0.0
          %1221 = vmatprep.subr.mxu0 0.0
          %1222 = vmatpush1.xpose.msra.mxu0 0.0
          %1223 = vmatprep.subr.mxu0 0.0
          %1224 = vmatpush1.xpose.msra.mxu0 0.0
          %1225 = vmatprep.subr.mxu0 0.0
          %1226 = vmatpush1.xpose.msra.mxu0 0.0
          %v1227 = vand.u32 %v392, 4294901760
          %v1228 = vsub.f32 %v392, %v1227
          %v1229 = vand.u32 %v1228, 4294901760
          %1230 = vmatprep.mubr.f32.mxu0 %v1229
          %v1231 = vand.u32 %v391, 4294901760
          %v1232 = vsub.f32 %v391, %v1231
          %v1233 = vand.u32 %v1232, 4294901760
          %1234 = vmatmul.mubr.f32.gmra.mrb[0].mxu0 %v1233
          %v1235 = vpop.f32.mrb[0].mxu0
          %v1236 = vadd.f32 %v1158, %v1235
          %v1237 = vpop.f32.mrb[0].mxu0
          %1238 = vdwg.mxu0
          %v1239 = vand.u32 %v392, 4294901760
          %v1240 = vsub.f32 %v392, %v1239
          %v1241 = vand.u32 %v1240, 4294901760
          %1242 = vmatprep.subr.mxu0 %v1241
          %v1243 = vand.u32 %v391, 4294901760
          %v1244 = vsub.f32 %v391, %v1243
          %v1245 = vand.u32 %v1244, 4294901760
          %1246 = vmatpush1.xpose.msra.mxu0 %v1245
          %1247 = vmatprep.subr.mxu0 0.0
          %1248 = vmatpush1.xpose.msra.mxu0 0.0
          %1249 = vmatprep.subr.mxu0 0.0
          %1250 = vmatpush1.xpose.msra.mxu0 0.0
          %1251 = vmatprep.subr.mxu0 0.0
          %1252 = vmatpush1.xpose.msra.mxu0 0.0
          %1253 = vmatprep.subr.mxu0 0.0
          %1254 = vmatpush1.xpose.msra.mxu0 0.0
          %1255 = vmatprep.subr.mxu0 0.0
          %1256 = vmatpush1.xpose.msra.mxu0 0.0
          %1257 = vmatprep.subr.mxu0 0.0
          %1258 = vmatpush1.xpose.msra.mxu0 0.0
          %1259 = vmatprep.subr.mxu0 0.0
          %1260 = vmatpush1.xpose.msra.mxu0 0.0
          %1261 = vmatprep.subr.mxu0 0.0
          %1262 = vmatpush1.xpose.msra.mxu0 0.0
          %1263 = vmatprep.subr.mxu0 0.0
          %1264 = vmatpush1.xpose.msra.mxu0 0.0
          %1265 = vmatprep.subr.mxu0 0.0
          %1266 = vmatpush1.xpose.msra.mxu0 0.0
          %1267 = vmatprep.subr.mxu0 0.0
          %1268 = vmatpush1.xpose.msra.mxu0 0.0
          %1269 = vmatprep.subr.mxu0 0.0
          %1270 = vmatpush1.xpose.msra.mxu0 0.0
          %1271 = vmatprep.subr.mxu0 0.0
          %1272 = vmatpush1.xpose.msra.mxu0 0.0
          %1273 = vmatprep.subr.mxu0 0.0
          %1274 = vmatpush1.xpose.msra.mxu0 0.0
          %1275 = vmatprep.subr.mxu0 0.0
          %1276 = vmatpush1.xpose.msra.mxu0 0.0
          %1277 = vmatprep.subr.mxu0 0.0
          %1278 = vmatpush1.xpose.msra.mxu0 0.0
          %1279 = vmatprep.subr.mxu0 0.0
          %1280 = vmatpush1.xpose.msra.mxu0 0.0
          %1281 = vmatprep.subr.mxu0 0.0
          %1282 = vmatpush1.xpose.msra.mxu0 0.0
          %1283 = vmatprep.subr.mxu0 0.0
          %1284 = vmatpush1.xpose.msra.mxu0 0.0
          %1285 = vmatprep.subr.mxu0 0.0
          %1286 = vmatpush1.xpose.msra.mxu0 0.0
          %1287 = vmatprep.subr.mxu0 0.0
          %1288 = vmatpush1.xpose.msra.mxu0 0.0
          %1289 = vmatprep.subr.mxu0 0.0
          %1290 = vmatpush1.xpose.msra.mxu0 0.0
          %1291 = vmatprep.subr.mxu0 0.0
          %1292 = vmatpush1.xpose.msra.mxu0 0.0
          %1293 = vmatprep.subr.mxu0 0.0
          %1294 = vmatpush1.xpose.msra.mxu0 0.0
          %1295 = vmatprep.subr.mxu0 0.0
          %1296 = vmatpush1.xpose.msra.mxu0 0.0
          %1297 = vmatprep.subr.mxu0 0.0
          %1298 = vmatpush1.xpose.msra.mxu0 0.0
          %1299 = vmatprep.subr.mxu0 0.0
          %1300 = vmatpush1.xpose.msra.mxu0 0.0
          %1301 = vmatprep.subr.mxu0 0.0
          %1302 = vmatpush1.xpose.msra.mxu0 0.0
          %1303 = vmatprep.subr.mxu0 0.0
          %1304 = vmatpush1.xpose.msra.mxu0 0.0
          %1305 = vmatprep.subr.mxu0 0.0
          %1306 = vmatpush1.xpose.msra.mxu0 0.0
          %1307 = vmatprep.subr.mxu0 0.0
          %1308 = vmatpush1.xpose.msra.mxu0 0.0
          %v1309 = vand.u32 %v392, 4294901760
          %1310 = vmatprep.mubr.f32.mxu0 %v1309
          %v1311 = vand.u32 %v391, 4294901760
          %1312 = vmatmul.mubr.f32.gmra.mrb[0].mxu0 %v1311
          %v1313 = vpop.f32.mrb[0].mxu0
          %v1314 = vadd.f32 %v1236, %v1313
          %v1315 = vpop.f32.mrb[0].mxu0
          %1316 = vdwg.mxu0
          %v1317 = vand.u32 %v392, 4294901760
          %1318 = vmatprep.subr.mxu0 %v1317
          %v1319 = vand.u32 %v391, 4294901760
          %1320 = vmatpush1.xpose.msra.mxu0 %v1319
          %1321 = vmatprep.subr.mxu0 0.0
          %1322 = vmatpush1.xpose.msra.mxu0 0.0
          %1323 = vmatprep.subr.mxu0 0.0
          %1324 = vmatpush1.xpose.msra.mxu0 0.0
          %1325 = vmatprep.subr.mxu0 0.0
          %1326 = vmatpush1.xpose.msra.mxu0 0.0
          %1327 = vmatprep.subr.mxu0 0.0
          %1328 = vmatpush1.xpose.msra.mxu0 0.0
          %1329 = vmatprep.subr.mxu0 0.0
          %1330 = vmatpush1.xpose.msra.mxu0 0.0
          %1331 = vmatprep.subr.mxu0 0.0
          %1332 = vmatpush1.xpose.msra.mxu0 0.0
          %1333 = vmatprep.subr.mxu0 0.0
          %1334 = vmatpush1.xpose.msra.mxu0 0.0
          %1335 = vmatprep.subr.mxu0 0.0
          %1336 = vmatpush1.xpose.msra.mxu0 0.0
          %1337 = vmatprep.subr.mxu0 0.0
          %1338 = vmatpush1.xpose.msra.mxu0 0.0
          %1339 = vmatprep.subr.mxu0 0.0
          %1340 = vmatpush1.xpose.msra.mxu0 0.0
          %1341 = vmatprep.subr.mxu0 0.0
          %1342 = vmatpush1.xpose.msra.mxu0 0.0
          %1343 = vmatprep.subr.mxu0 0.0
          %1344 = vmatpush1.xpose.msra.mxu0 0.0
          %1345 = vmatprep.subr.mxu0 0.0
          %1346 = vmatpush1.xpose.msra.mxu0 0.0
          %1347 = vmatprep.subr.mxu0 0.0
          %1348 = vmatpush1.xpose.msra.mxu0 0.0
          %1349 = vmatprep.subr.mxu0 0.0
          %1350 = vmatpush1.xpose.msra.mxu0 0.0
          %1351 = vmatprep.subr.mxu0 0.0
          %1352 = vmatpush1.xpose.msra.mxu0 0.0
          %1353 = vmatprep.subr.mxu0 0.0
          %1354 = vmatpush1.xpose.msra.mxu0 0.0
          %1355 = vmatprep.subr.mxu0 0.0
          %1356 = vmatpush1.xpose.msra.mxu0 0.0
          %1357 = vmatprep.subr.mxu0 0.0
          %1358 = vmatpush1.xpose.msra.mxu0 0.0
          %1359 = vmatprep.subr.mxu0 0.0
          %1360 = vmatpush1.xpose.msra.mxu0 0.0
          %1361 = vmatprep.subr.mxu0 0.0
          %1362 = vmatpush1.xpose.msra.mxu0 0.0
          %1363 = vmatprep.subr.mxu0 0.0
          %1364 = vmatpush1.xpose.msra.mxu0 0.0
          %1365 = vmatprep.subr.mxu0 0.0
          %1366 = vmatpush1.xpose.msra.mxu0 0.0
          %1367 = vmatprep.subr.mxu0 0.0
          %1368 = vmatpush1.xpose.msra.mxu0 0.0
          %1369 = vmatprep.subr.mxu0 0.0
          %1370 = vmatpush1.xpose.msra.mxu0 0.0
          %1371 = vmatprep.subr.mxu0 0.0
          %1372 = vmatpush1.xpose.msra.mxu0 0.0
          %1373 = vmatprep.subr.mxu0 0.0
          %1374 = vmatpush1.xpose.msra.mxu0 0.0
          %1375 = vmatprep.subr.mxu0 0.0
          %1376 = vmatpush1.xpose.msra.mxu0 0.0
          %1377 = vmatprep.subr.mxu0 0.0
          %1378 = vmatpush1.xpose.msra.mxu0 0.0
          %1379 = vmatprep.subr.mxu0 0.0
          %1380 = vmatpush1.xpose.msra.mxu0 0.0
          %1381 = vmatprep.subr.mxu0 0.0
          %1382 = vmatpush1.xpose.msra.mxu0 0.0
          %v1383 = vand.u32 %v392, 4294901760
          %1384 = vmatprep.mubr.f32.mxu0 %v1383
          %v1385 = vand.u32 %v391, 4294901760
          %1386 = vmatmul.mubr.f32.gmra.mrb[0].mxu0 %v1385
          %v1387 = vpop.f32.mrb[0].mxu0
          %v1388 = vadd.f32 %v1314, %v1387
          %v1389 = vpop.f32.mrb[0].mxu0
          %1390 = vdwg.mxu0
          %v1391 = vand.u32 %v394, 4294901760
          %1392 = vmatprep.subr.mxu0 %v1391
          %v1393 = vand.u32 %v393, 4294901760
          %1394 = vmatpush1.xpose.msra.mxu0 %v1393
          %1395 = vmatprep.subr.mxu0 0.0
          %1396 = vmatpush1.xpose.msra.mxu0 0.0
          %1397 = vmatprep.subr.mxu0 0.0
          %1398 = vmatpush1.xpose.msra.mxu0 0.0
          %1399 = vmatprep.subr.mxu0 0.0
          %1400 = vmatpush1.xpose.msra.mxu0 0.0
          %1401 = vmatprep.subr.mxu0 0.0
          %1402 = vmatpush1.xpose.msra.mxu0 0.0
          %1403 = vmatprep.subr.mxu0 0.0
          %1404 = vmatpush1.xpose.msra.mxu0 0.0
          %1405 = vmatprep.subr.mxu0 0.0
          %1406 = vmatpush1.xpose.msra.mxu0 0.0
          %1407 = vmatprep.subr.mxu0 0.0
          %1408 = vmatpush1.xpose.msra.mxu0 0.0
          %1409 = vmatprep.subr.mxu0 0.0
          %1410 = vmatpush1.xpose.msra.mxu0 0.0
          %1411 = vmatprep.subr.mxu0 0.0
          %1412 = vmatpush1.xpose.msra.mxu0 0.0
          %1413 = vmatprep.subr.mxu0 0.0
          %1414 = vmatpush1.xpose.msra.mxu0 0.0
          %1415 = vmatprep.subr.mxu0 0.0
          %1416 = vmatpush1.xpose.msra.mxu0 0.0
          %1417 = vmatprep.subr.mxu0 0.0
          %1418 = vmatpush1.xpose.msra.mxu0 0.0
          %1419 = vmatprep.subr.mxu0 0.0
          %1420 = vmatpush1.xpose.msra.mxu0 0.0
          %1421 = vmatprep.subr.mxu0 0.0
          %1422 = vmatpush1.xpose.msra.mxu0 0.0
          %1423 = vmatprep.subr.mxu0 0.0
          %1424 = vmatpush1.xpose.msra.mxu0 0.0
          %1425 = vmatprep.subr.mxu0 0.0
          %1426 = vmatpush1.xpose.msra.mxu0 0.0
          %1427 = vmatprep.subr.mxu0 0.0
          %1428 = vmatpush1.xpose.msra.mxu0 0.0
          %1429 = vmatprep.subr.mxu0 0.0
          %1430 = vmatpush1.xpose.msra.mxu0 0.0
          %1431 = vmatprep.subr.mxu0 0.0
          %1432 = vmatpush1.xpose.msra.mxu0 0.0
          %1433 = vmatprep.subr.mxu0 0.0
          %1434 = vmatpush1.xpose.msra.mxu0 0.0
          %1435 = vmatprep.subr.mxu0 0.0
          %1436 = vmatpush1.xpose.msra.mxu0 0.0
          %1437 = vmatprep.subr.mxu0 0.0
          %1438 = vmatpush1.xpose.msra.mxu0 0.0
          %1439 = vmatprep.subr.mxu0 0.0
          %1440 = vmatpush1.xpose.msra.mxu0 0.0
          %1441 = vmatprep.subr.mxu0 0.0
          %1442 = vmatpush1.xpose.msra.mxu0 0.0
          %1443 = vmatprep.subr.mxu0 0.0
          %1444 = vmatpush1.xpose.msra.mxu0 0.0
          %1445 = vmatprep.subr.mxu0 0.0
          %1446 = vmatpush1.xpose.msra.mxu0 0.0
          %1447 = vmatprep.subr.mxu0 0.0
          %1448 = vmatpush1.xpose.msra.mxu0 0.0
          %1449 = vmatprep.subr.mxu0 0.0
          %1450 = vmatpush1.xpose.msra.mxu0 0.0
          %1451 = vmatprep.subr.mxu0 0.0
          %1452 = vmatpush1.xpose.msra.mxu0 0.0
          %1453 = vmatprep.subr.mxu0 0.0
          %1454 = vmatpush1.xpose.msra.mxu0 0.0
          %1455 = vmatprep.subr.mxu0 0.0
          %1456 = vmatpush1.xpose.msra.mxu0 0.0
          %v1457 = vand.u32 %v394, 4294901760
          %v1458 = vsub.f32 %v394, %v1457
          %v1459 = vand.u32 %v1458, 4294901760
          %v1460 = vsub.f32 %v1458, %v1459
          %v1461 = vand.u32 %v1460, 4294901760
          %1462 = vmatprep.mubr.f32.mxu0 %v1461
          %v1463 = vand.u32 %v393, 4294901760
          %v1464 = vsub.f32 %v393, %v1463
          %v1465 = vand.u32 %v1464, 4294901760
          %v1466 = vsub.f32 %v1464, %v1465
          %v1467 = vand.u32 %v1466, 4294901760
          %1468 = vmatmul.mubr.f32.gmra.mrb[0].mxu0 %v1467
          %v1469 = vpop.f32.mrb[0].mxu0
          %v1470 = vadd.f32 %v1388, %v1469
          %v1471 = vpop.f32.mrb[0].mxu0
          %1472 = vdwg.mxu0
          %v1473 = vand.u32 %v394, 4294901760
          %v1474 = vsub.f32 %v394, %v1473
          %v1475 = vand.u32 %v1474, 4294901760
          %v1476 = vsub.f32 %v1474, %v1475
          %v1477 = vand.u32 %v1476, 4294901760
          %1478 = vmatprep.subr.mxu0 %v1477
          %v1479 = vand.u32 %v393, 4294901760
          %v1480 = vsub.f32 %v393, %v1479
          %v1481 = vand.u32 %v1480, 4294901760
          %v1482 = vsub.f32 %v1480, %v1481
          %v1483 = vand.u32 %v1482, 4294901760
          %1484 = vmatpush1.xpose.msra.mxu0 %v1483
          %1485 = vmatprep.subr.mxu0 0.0
          %1486 = vmatpush1.xpose.msra.mxu0 0.0
          %1487 = vmatprep.subr.mxu0 0.0
          %1488 = vmatpush1.xpose.msra.mxu0 0.0
          %1489 = vmatprep.subr.mxu0 0.0
          %1490 = vmatpush1.xpose.msra.mxu0 0.0
          %1491 = vmatprep.subr.mxu0 0.0
          %1492 = vmatpush1.xpose.msra.mxu0 0.0
          %1493 = vmatprep.subr.mxu0 0.0
          %1494 = vmatpush1.xpose.msra.mxu0 0.0
          %1495 = vmatprep.subr.mxu0 0.0
          %1496 = vmatpush1.xpose.msra.mxu0 0.0
          %1497 = vmatprep.subr.mxu0 0.0
          %1498 = vmatpush1.xpose.msra.mxu0 0.0
          %1499 = vmatprep.subr.mxu0 0.0
          %1500 = vmatpush1.xpose.msra.mxu0 0.0
          %1501 = vmatprep.subr.mxu0 0.0
          %1502 = vmatpush1.xpose.msra.mxu0 0.0
          %1503 = vmatprep.subr.mxu0 0.0
          %1504 = vmatpush1.xpose.msra.mxu0 0.0
          %1505 = vmatprep.subr.mxu0 0.0
          %1506 = vmatpush1.xpose.msra.mxu0 0.0
          %1507 = vmatprep.subr.mxu0 0.0
          %1508 = vmatpush1.xpose.msra.mxu0 0.0
          %1509 = vmatprep.subr.mxu0 0.0
          %1510 = vmatpush1.xpose.msra.mxu0 0.0
          %1511 = vmatprep.subr.mxu0 0.0
          %1512 = vmatpush1.xpose.msra.mxu0 0.0
          %1513 = vmatprep.subr.mxu0 0.0
          %1514 = vmatpush1.xpose.msra.mxu0 0.0
          %1515 = vmatprep.subr.mxu0 0.0
          %1516 = vmatpush1.xpose.msra.mxu0 0.0
          %1517 = vmatprep.subr.mxu0 0.0
          %1518 = vmatpush1.xpose.msra.mxu0 0.0
          %1519 = vmatprep.subr.mxu0 0.0
          %1520 = vmatpush1.xpose.msra.mxu0 0.0
          %1521 = vmatprep.subr.mxu0 0.0
          %1522 = vmatpush1.xpose.msra.mxu0 0.0
          %1523 = vmatprep.subr.mxu0 0.0
          %1524 = vmatpush1.xpose.msra.mxu0 0.0
          %1525 = vmatprep.subr.mxu0 0.0
          %1526 = vmatpush1.xpose.msra.mxu0 0.0
          %1527 = vmatprep.subr.mxu0 0.0
          %1528 = vmatpush1.xpose.msra.mxu0 0.0
          %1529 = vmatprep.subr.mxu0 0.0
          %1530 = vmatpush1.xpose.msra.mxu0 0.0
          %1531 = vmatprep.subr.mxu0 0.0
          %1532 = vmatpush1.xpose.msra.mxu0 0.0
          %1533 = vmatprep.subr.mxu0 0.0
          %1534 = vmatpush1.xpose.msra.mxu0 0.0
          %1535 = vmatprep.subr.mxu0 0.0
          %1536 = vmatpush1.xpose.msra.mxu0 0.0
          %1537 = vmatprep.subr.mxu0 0.0
          %1538 = vmatpush1.xpose.msra.mxu0 0.0
          %1539 = vmatprep.subr.mxu0 0.0
          %1540 = vmatpush1.xpose.msra.mxu0 0.0
          %1541 = vmatprep.subr.mxu0 0.0
          %1542 = vmatpush1.xpose.msra.mxu0 0.0
          %1543 = vmatprep.subr.mxu0 0.0
          %1544 = vmatpush1.xpose.msra.mxu0 0.0
          %1545 = vmatprep.subr.mxu0 0.0
          %1546 = vmatpush1.xpose.msra.mxu0 0.0
          %v1547 = vand.u32 %v394, 4294901760
          %1548 = vmatprep.mubr.f32.mxu0 %v1547
          %v1549 = vand.u32 %v393, 4294901760
          %1550 = vmatmul.mubr.f32.gmra.mrb[0].mxu0 %v1549
          %v1551 = vpop.f32.mrb[0].mxu0
          %v1552 = vadd.f32 %v1470, %v1551
          %v1553 = vpop.f32.mrb[0].mxu0
          %1554 = vdwg.mxu0
          %v1555 = vand.u32 %v394, 4294901760
          %v1556 = vsub.f32 %v394, %v1555
          %1557 = vmatprep.subr.mxu0 %v1556
          %v1558 = vand.u32 %v393, 4294901760
          %v1559 = vsub.f32 %v393, %v1558
          %1560 = vmatpush1.xpose.msra.mxu0 %v1559
          %1561 = vmatprep.subr.mxu0 0.0
          %1562 = vmatpush1.xpose.msra.mxu0 0.0
          %1563 = vmatprep.subr.mxu0 0.0
          %1564 = vmatpush1.xpose.msra.mxu0 0.0
          %1565 = vmatprep.subr.mxu0 0.0
          %1566 = vmatpush1.xpose.msra.mxu0 0.0
          %1567 = vmatprep.subr.mxu0 0.0
          %1568 = vmatpush1.xpose.msra.mxu0 0.0
          %1569 = vmatprep.subr.mxu0 0.0
          %1570 = vmatpush1.xpose.msra.mxu0 0.0
          %1571 = vmatprep.subr.mxu0 0.0
          %1572 = vmatpush1.xpose.msra.mxu0 0.0
          %1573 = vmatprep.subr.mxu0 0.0
          %1574 = vmatpush1.xpose.msra.mxu0 0.0
          %1575 = vmatprep.subr.mxu0 0.0
          %1576 = vmatpush1.xpose.msra.mxu0 0.0
          %1577 = vmatprep.subr.mxu0 0.0
          %1578 = vmatpush1.xpose.msra.mxu0 0.0
          %1579 = vmatprep.subr.mxu0 0.0
          %1580 = vmatpush1.xpose.msra.mxu0 0.0
          %1581 = vmatprep.subr.mxu0 0.0
          %1582 = vmatpush1.xpose.msra.mxu0 0.0
          %1583 = vmatprep.subr.mxu0 0.0
          %1584 = vmatpush1.xpose.msra.mxu0 0.0
          %1585 = vmatprep.subr.mxu0 0.0
          %1586 = vmatpush1.xpose.msra.mxu0 0.0
          %1587 = vmatprep.subr.mxu0 0.0
          %1588 = vmatpush1.xpose.msra.mxu0 0.0
          %1589 = vmatprep.subr.mxu0 0.0
          %1590 = vmatpush1.xpose.msra.mxu0 0.0
          %1591 = vmatprep.subr.mxu0 0.0
          %1592 = vmatpush1.xpose.msra.mxu0 0.0
          %1593 = vmatprep.subr.mxu0 0.0
          %1594 = vmatpush1.xpose.msra.mxu0 0.0
          %1595 = vmatprep.subr.mxu0 0.0
          %1596 = vmatpush1.xpose.msra.mxu0 0.0
          %1597 = vmatprep.subr.mxu0 0.0
          %1598 = vmatpush1.xpose.msra.mxu0 0.0
          %1599 = vmatprep.subr.mxu0 0.0
          %1600 = vmatpush1.xpose.msra.mxu0 0.0
          %1601 = vmatprep.subr.mxu0 0.0
          %1602 = vmatpush1.xpose.msra.mxu0 0.0
          %1603 = vmatprep.subr.mxu0 0.0
          %1604 = vmatpush1.xpose.msra.mxu0 0.0
          %1605 = vmatprep.subr.mxu0 0.0
          %1606 = vmatpush1.xpose.msra.mxu0 0.0
          %1607 = vmatprep.subr.mxu0 0.0
          %1608 = vmatpush1.xpose.msra.mxu0 0.0
          %1609 = vmatprep.subr.mxu0 0.0
          %1610 = vmatpush1.xpose.msra.mxu0 0.0
          %1611 = vmatprep.subr.mxu0 0.0
          %1612 = vmatpush1.xpose.msra.mxu0 0.0
          %1613 = vmatprep.subr.mxu0 0.0
          %1614 = vmatpush1.xpose.msra.mxu0 0.0
          %1615 = vmatprep.subr.mxu0 0.0
          %1616 = vmatpush1.xpose.msra.mxu0 0.0
          %1617 = vmatprep.subr.mxu0 0.0
          %1618 = vmatpush1.xpose.msra.mxu0 0.0
          %1619 = vmatprep.subr.mxu0 0.0
          %1620 = vmatpush1.xpose.msra.mxu0 0.0
          %1621 = vmatprep.subr.mxu0 0.0
          %1622 = vmatpush1.xpose.msra.mxu0 0.0
          %v1623 = vand.u32 %v394, 4294901760
          %v1624 = vsub.f32 %v394, %v1623
          %1625 = vmatprep.mubr.f32.mxu0 %v1624
          %v1626 = vand.u32 %v393, 4294901760
          %v1627 = vsub.f32 %v393, %v1626
          %1628 = vmatmul.mubr.f32.gmra.mrb[0].mxu0 %v1627
          %v1629 = vpop.f32.mrb[0].mxu0
          %v1630 = vadd.f32 %v1552, %v1629
          %v1631 = vpop.f32.mrb[0].mxu0
          %1632 = vdwg.mxu0
          %v1633 = vand.u32 %v394, 4294901760
          %1634 = vmatprep.subr.mxu0 %v1633
          %v1635 = vand.u32 %v393, 4294901760
          %1636 = vmatpush1.xpose.msra.mxu0 %v1635
          %1637 = vmatprep.subr.mxu0 0.0
          %1638 = vmatpush1.xpose.msra.mxu0 0.0
          %1639 = vmatprep.subr.mxu0 0.0
          %1640 = vmatpush1.xpose.msra.mxu0 0.0
          %1641 = vmatprep.subr.mxu0 0.0
          %1642 = vmatpush1.xpose.msra.mxu0 0.0
          %1643 = vmatprep.subr.mxu0 0.0
          %1644 = vmatpush1.xpose.msra.mxu0 0.0
          %1645 = vmatprep.subr.mxu0 0.0
          %1646 = vmatpush1.xpose.msra.mxu0 0.0
          %1647 = vmatprep.subr.mxu0 0.0
          %1648 = vmatpush1.xpose.msra.mxu0 0.0
          %1649 = vmatprep.subr.mxu0 0.0
          %1650 = vmatpush1.xpose.msra.mxu0 0.0
          %1651 = vmatprep.subr.mxu0 0.0
          %1652 = vmatpush1.xpose.msra.mxu0 0.0
          %1653 = vmatprep.subr.mxu0 0.0
          %1654 = vmatpush1.xpose.msra.mxu0 0.0
          %1655 = vmatprep.subr.mxu0 0.0
          %1656 = vmatpush1.xpose.msra.mxu0 0.0
          %1657 = vmatprep.subr.mxu0 0.0
          %1658 = vmatpush1.xpose.msra.mxu0 0.0
          %1659 = vmatprep.subr.mxu0 0.0
          %1660 = vmatpush1.xpose.msra.mxu0 0.0
          %1661 = vmatprep.subr.mxu0 0.0
          %1662 = vmatpush1.xpose.msra.mxu0 0.0
          %1663 = vmatprep.subr.mxu0 0.0
          %1664 = vmatpush1.xpose.msra.mxu0 0.0
          %1665 = vmatprep.subr.mxu0 0.0
          %1666 = vmatpush1.xpose.msra.mxu0 0.0
          %1667 = vmatprep.subr.mxu0 0.0
          %1668 = vmatpush1.xpose.msra.mxu0 0.0
          %1669 = vmatprep.subr.mxu0 0.0
          %1670 = vmatpush1.xpose.msra.mxu0 0.0
          %1671 = vmatprep.subr.mxu0 0.0
          %1672 = vmatpush1.xpose.msra.mxu0 0.0
          %1673 = vmatprep.subr.mxu0 0.0
          %1674 = vmatpush1.xpose.msra.mxu0 0.0
          %1675 = vmatprep.subr.mxu0 0.0
          %1676 = vmatpush1.xpose.msra.mxu0 0.0
          %1677 = vmatprep.subr.mxu0 0.0
          %1678 = vmatpush1.xpose.msra.mxu0 0.0
          %1679 = vmatprep.subr.mxu0 0.0
          %1680 = vmatpush1.xpose.msra.mxu0 0.0
          %1681 = vmatprep.subr.mxu0 0.0
          %1682 = vmatpush1.xpose.msra.mxu0 0.0
          %1683 = vmatprep.subr.mxu0 0.0
          %1684 = vmatpush1.xpose.msra.mxu0 0.0
          %1685 = vmatprep.subr.mxu0 0.0
          %1686 = vmatpush1.xpose.msra.mxu0 0.0
          %1687 = vmatprep.subr.mxu0 0.0
          %1688 = vmatpush1.xpose.msra.mxu0 0.0
          %1689 = vmatprep.subr.mxu0 0.0
          %1690 = vmatpush1.xpose.msra.mxu0 0.0
          %1691 = vmatprep.subr.mxu0 0.0
          %1692 = vmatpush1.xpose.msra.mxu0 0.0
          %1693 = vmatprep.subr.mxu0 0.0
          %1694 = vmatpush1.xpose.msra.mxu0 0.0
          %1695 = vmatprep.subr.mxu0 0.0
          %1696 = vmatpush1.xpose.msra.mxu0 0.0
          %1697 = vmatprep.subr.mxu0 0.0
          %1698 = vmatpush1.xpose.msra.mxu0 0.0
          %v1699 = vand.u32 %v394, 4294901760
          %v1700 = vsub.f32 %v394, %v1699
          %v1701 = vand.u32 %v1700, 4294901760
          %1702 = vmatprep.mubr.f32.mxu0 %v1701
          %v1703 = vand.u32 %v393, 4294901760
          %v1704 = vsub.f32 %v393, %v1703
          %v1705 = vand.u32 %v1704, 4294901760
          %1706 = vmatmul.mubr.f32.gmra.mrb[0].mxu0 %v1705
          %v1707 = vpop.f32.mrb[0].mxu0
          %v1708 = vadd.f32 %v1630, %v1707
          %v1709 = vpop.f32.mrb[0].mxu0
          %1710 = vdwg.mxu0
          %v1711 = vand.u32 %v394, 4294901760
          %v1712 = vsub.f32 %v394, %v1711
          %v1713 = vand.u32 %v1712, 4294901760
          %1714 = vmatprep.subr.mxu0 %v1713
          %v1715 = vand.u32 %v393, 4294901760
          %v1716 = vsub.f32 %v393, %v1715
          %v1717 = vand.u32 %v1716, 4294901760
          %1718 = vmatpush1.xpose.msra.mxu0 %v1717
          %1719 = vmatprep.subr.mxu0 0.0
          %1720 = vmatpush1.xpose.msra.mxu0 0.0
          %1721 = vmatprep.subr.mxu0 0.0
          %1722 = vmatpush1.xpose.msra.mxu0 0.0
          %1723 = vmatprep.subr.mxu0 0.0
          %1724 = vmatpush1.xpose.msra.mxu0 0.0
          %1725 = vmatprep.subr.mxu0 0.0
          %1726 = vmatpush1.xpose.msra.mxu0 0.0
          %1727 = vmatprep.subr.mxu0 0.0
          %1728 = vmatpush1.xpose.msra.mxu0 0.0
          %1729 = vmatprep.subr.mxu0 0.0
          %1730 = vmatpush1.xpose.msra.mxu0 0.0
          %1731 = vmatprep.subr.mxu0 0.0
          %1732 = vmatpush1.xpose.msra.mxu0 0.0
          %1733 = vmatprep.subr.mxu0 0.0
          %1734 = vmatpush1.xpose.msra.mxu0 0.0
          %1735 = vmatprep.subr.mxu0 0.0
          %1736 = vmatpush1.xpose.msra.mxu0 0.0
          %1737 = vmatprep.subr.mxu0 0.0
          %1738 = vmatpush1.xpose.msra.mxu0 0.0
          %1739 = vmatprep.subr.mxu0 0.0
          %1740 = vmatpush1.xpose.msra.mxu0 0.0
          %1741 = vmatprep.subr.mxu0 0.0
          %1742 = vmatpush1.xpose.msra.mxu0 0.0
          %1743 = vmatprep.subr.mxu0 0.0
          %1744 = vmatpush1.xpose.msra.mxu0 0.0
          %1745 = vmatprep.subr.mxu0 0.0
          %1746 = vmatpush1.xpose.msra.mxu0 0.0
          %1747 = vmatprep.subr.mxu0 0.0
          %1748 = vmatpush1.xpose.msra.mxu0 0.0
          %1749 = vmatprep.subr.mxu0 0.0
          %1750 = vmatpush1.xpose.msra.mxu0 0.0
          %1751 = vmatprep.subr.mxu0 0.0
          %1752 = vmatpush1.xpose.msra.mxu0 0.0
          %1753 = vmatprep.subr.mxu0 0.0
          %1754 = vmatpush1.xpose.msra.mxu0 0.0
          %1755 = vmatprep.subr.mxu0 0.0
          %1756 = vmatpush1.xpose.msra.mxu0 0.0
          %1757 = vmatprep.subr.mxu0 0.0
          %1758 = vmatpush1.xpose.msra.mxu0 0.0
          %1759 = vmatprep.subr.mxu0 0.0
          %1760 = vmatpush1.xpose.msra.mxu0 0.0
          %1761 = vmatprep.subr.mxu0 0.0
          %1762 = vmatpush1.xpose.msra.mxu0 0.0
          %1763 = vmatprep.subr.mxu0 0.0
          %1764 = vmatpush1.xpose.msra.mxu0 0.0
          %1765 = vmatprep.subr.mxu0 0.0
          %1766 = vmatpush1.xpose.msra.mxu0 0.0
          %1767 = vmatprep.subr.mxu0 0.0
          %1768 = vmatpush1.xpose.msra.mxu0 0.0
          %1769 = vmatprep.subr.mxu0 0.0
          %1770 = vmatpush1.xpose.msra.mxu0 0.0
          %1771 = vmatprep.subr.mxu0 0.0
          %1772 = vmatpush1.xpose.msra.mxu0 0.0
          %1773 = vmatprep.subr.mxu0 0.0
          %1774 = vmatpush1.xpose.msra.mxu0 0.0
          %1775 = vmatprep.subr.mxu0 0.0
          %1776 = vmatpush1.xpose.msra.mxu0 0.0
          %1777 = vmatprep.subr.mxu0 0.0
          %1778 = vmatpush1.xpose.msra.mxu0 0.0
          %1779 = vmatprep.subr.mxu0 0.0
          %1780 = vmatpush1.xpose.msra.mxu0 0.0
          %v1781 = vand.u32 %v394, 4294901760
          %1782 = vmatprep.mubr.f32.mxu0 %v1781
          %v1783 = vand.u32 %v393, 4294901760
          %1784 = vmatmul.mubr.f32.gmra.mrb[0].mxu0 %v1783
          %v1785 = vpop.f32.mrb[0].mxu0
          %v1786 = vadd.f32 %v1708, %v1785
          %v1787 = vpop.f32.mrb[0].mxu0
          %1788 = vdwg.mxu0
          %v1789 = vand.u32 %v394, 4294901760
          %1790 = vmatprep.subr.mxu0 %v1789
          %v1791 = vand.u32 %v393, 4294901760
          %1792 = vmatpush1.xpose.msra.mxu0 %v1791
          %1793 = vmatprep.subr.mxu0 0.0
          %1794 = vmatpush1.xpose.msra.mxu0 0.0
          %1795 = vmatprep.subr.mxu0 0.0
          %1796 = vmatpush1.xpose.msra.mxu0 0.0
          %1797 = vmatprep.subr.mxu0 0.0
          %1798 = vmatpush1.xpose.msra.mxu0 0.0
          %1799 = vmatprep.subr.mxu0 0.0
          %1800 = vmatpush1.xpose.msra.mxu0 0.0
          %1801 = vmatprep.subr.mxu0 0.0
          %1802 = vmatpush1.xpose.msra.mxu0 0.0
          %1803 = vmatprep.subr.mxu0 0.0
          %1804 = vmatpush1.xpose.msra.mxu0 0.0
          %1805 = vmatprep.subr.mxu0 0.0
          %1806 = vmatpush1.xpose.msra.mxu0 0.0
          %1807 = vmatprep.subr.mxu0 0.0
          %1808 = vmatpush1.xpose.msra.mxu0 0.0
          %1809 = vmatprep.subr.mxu0 0.0
          %1810 = vmatpush1.xpose.msra.mxu0 0.0
          %1811 = vmatprep.subr.mxu0 0.0
          %1812 = vmatpush1.xpose.msra.mxu0 0.0
          %1813 = vmatprep.subr.mxu0 0.0
          %1814 = vmatpush1.xpose.msra.mxu0 0.0
          %1815 = vmatprep.subr.mxu0 0.0
          %1816 = vmatpush1.xpose.msra.mxu0 0.0
          %1817 = vmatprep.subr.mxu0 0.0
          %1818 = vmatpush1.xpose.msra.mxu0 0.0
          %1819 = vmatprep.subr.mxu0 0.0
          %1820 = vmatpush1.xpose.msra.mxu0 0.0
          %1821 = vmatprep.subr.mxu0 0.0
          %1822 = vmatpush1.xpose.msra.mxu0 0.0
          %1823 = vmatprep.subr.mxu0 0.0
          %1824 = vmatpush1.xpose.msra.mxu0 0.0
          %1825 = vmatprep.subr.mxu0 0.0
          %1826 = vmatpush1.xpose.msra.mxu0 0.0
          %1827 = vmatprep.subr.mxu0 0.0
          %1828 = vmatpush1.xpose.msra.mxu0 0.0
          %1829 = vmatprep.subr.mxu0 0.0
          %1830 = vmatpush1.xpose.msra.mxu0 0.0
          %1831 = vmatprep.subr.mxu0 0.0
          %1832 = vmatpush1.xpose.msra.mxu0 0.0
          %1833 = vmatprep.subr.mxu0 0.0
          %1834 = vmatpush1.xpose.msra.mxu0 0.0
          %1835 = vmatprep.subr.mxu0 0.0
          %1836 = vmatpush1.xpose.msra.mxu0 0.0
          %1837 = vmatprep.subr.mxu0 0.0
          %1838 = vmatpush1.xpose.msra.mxu0 0.0
          %1839 = vmatprep.subr.mxu0 0.0
          %1840 = vmatpush1.xpose.msra.mxu0 0.0
          %1841 = vmatprep.subr.mxu0 0.0
          %1842 = vmatpush1.xpose.msra.mxu0 0.0
          %1843 = vmatprep.subr.mxu0 0.0
          %1844 = vmatpush1.xpose.msra.mxu0 0.0
          %1845 = vmatprep.subr.mxu0 0.0
          %1846 = vmatpush1.xpose.msra.mxu0 0.0
          %1847 = vmatprep.subr.mxu0 0.0
          %1848 = vmatpush1.xpose.msra.mxu0 0.0
          %1849 = vmatprep.subr.mxu0 0.0
          %1850 = vmatpush1.xpose.msra.mxu0 0.0
          %1851 = vmatprep.subr.mxu0 0.0
          %1852 = vmatpush1.xpose.msra.mxu0 0.0
          %1853 = vmatprep.subr.mxu0 0.0
          %1854 = vmatpush1.xpose.msra.mxu0 0.0
          %v1855 = vand.u32 %v394, 4294901760
          %1856 = vmatprep.mubr.f32.mxu0 %v1855
          %v1857 = vand.u32 %v393, 4294901760
          %1858 = vmatmul.mubr.f32.gmra.mrb[0].mxu0 %v1857
          %v1859 = vpop.f32.mrb[0].mxu0
          %v1860 = vadd.f32 %v1786, %v1859
          %v1861 = vpop.f32.mrb[0].mxu0
          %1862 = vdwg.mxu0
          %v1863 = vand.u32 %v396, 4294901760
          %1864 = vmatprep.subr.mxu0 %v1863
          %v1865 = vand.u32 %v395, 4294901760
          %1866 = vmatpush1.xpose.msra.mxu0 %v1865
          %1867 = vmatprep.subr.mxu0 0.0
          %1868 = vmatpush1.xpose.msra.mxu0 0.0
          %1869 = vmatprep.subr.mxu0 0.0
          %1870 = vmatpush1.xpose.msra.mxu0 0.0
          %1871 = vmatprep.subr.mxu0 0.0
          %1872 = vmatpush1.xpose.msra.mxu0 0.0
          %1873 = vmatprep.subr.mxu0 0.0
          %1874 = vmatpush1.xpose.msra.mxu0 0.0
          %1875 = vmatprep.subr.mxu0 0.0
          %1876 = vmatpush1.xpose.msra.mxu0 0.0
          %1877 = vmatprep.subr.mxu0 0.0
          %1878 = vmatpush1.xpose.msra.mxu0 0.0
          %1879 = vmatprep.subr.mxu0 0.0
          %1880 = vmatpush1.xpose.msra.mxu0 0.0
          %1881 = vmatprep.subr.mxu0 0.0
          %1882 = vmatpush1.xpose.msra.mxu0 0.0
          %1883 = vmatprep.subr.mxu0 0.0
          %1884 = vmatpush1.xpose.msra.mxu0 0.0
          %1885 = vmatprep.subr.mxu0 0.0
          %1886 = vmatpush1.xpose.msra.mxu0 0.0
          %1887 = vmatprep.subr.mxu0 0.0
          %1888 = vmatpush1.xpose.msra.mxu0 0.0
          %1889 = vmatprep.subr.mxu0 0.0
          %1890 = vmatpush1.xpose.msra.mxu0 0.0
          %1891 = vmatprep.subr.mxu0 0.0
          %1892 = vmatpush1.xpose.msra.mxu0 0.0
          %1893 = vmatprep.subr.mxu0 0.0
          %1894 = vmatpush1.xpose.msra.mxu0 0.0
          %1895 = vmatprep.subr.mxu0 0.0
          %1896 = vmatpush1.xpose.msra.mxu0 0.0
          %1897 = vmatprep.subr.mxu0 0.0
          %1898 = vmatpush1.xpose.msra.mxu0 0.0
          %1899 = vmatprep.subr.mxu0 0.0
          %1900 = vmatpush1.xpose.msra.mxu0 0.0
          %1901 = vmatprep.subr.mxu0 0.0
          %1902 = vmatpush1.xpose.msra.mxu0 0.0
          %1903 = vmatprep.subr.mxu0 0.0
          %1904 = vmatpush1.xpose.msra.mxu0 0.0
          %1905 = vmatprep.subr.mxu0 0.0
          %1906 = vmatpush1.xpose.msra.mxu0 0.0
          %1907 = vmatprep.subr.mxu0 0.0
          %1908 = vmatpush1.xpose.msra.mxu0 0.0
          %1909 = vmatprep.subr.mxu0 0.0
          %1910 = vmatpush1.xpose.msra.mxu0 0.0
          %1911 = vmatprep.subr.mxu0 0.0
          %1912 = vmatpush1.xpose.msra.mxu0 0.0
          %1913 = vmatprep.subr.mxu0 0.0
          %1914 = vmatpush1.xpose.msra.mxu0 0.0
          %1915 = vmatprep.subr.mxu0 0.0
          %1916 = vmatpush1.xpose.msra.mxu0 0.0
          %1917 = vmatprep.subr.mxu0 0.0
          %1918 = vmatpush1.xpose.msra.mxu0 0.0
          %1919 = vmatprep.subr.mxu0 0.0
          %1920 = vmatpush1.xpose.msra.mxu0 0.0
          %1921 = vmatprep.subr.mxu0 0.0
          %1922 = vmatpush1.xpose.msra.mxu0 0.0
          %1923 = vmatprep.subr.mxu0 0.0
          %1924 = vmatpush1.xpose.msra.mxu0 0.0
          %1925 = vmatprep.subr.mxu0 0.0
          %1926 = vmatpush1.xpose.msra.mxu0 0.0
          %1927 = vmatprep.subr.mxu0 0.0
          %1928 = vmatpush1.xpose.msra.mxu0 0.0
          %v1929 = vand.u32 %v396, 4294901760
          %v1930 = vsub.f32 %v396, %v1929
          %v1931 = vand.u32 %v1930, 4294901760
          %v1932 = vsub.f32 %v1930, %v1931
          %v1933 = vand.u32 %v1932, 4294901760
          %1934 = vmatprep.mubr.f32.mxu0 %v1933
          %v1935 = vand.u32 %v395, 4294901760
          %v1936 = vsub.f32 %v395, %v1935
          %v1937 = vand.u32 %v1936, 4294901760
          %v1938 = vsub.f32 %v1936, %v1937
          %v1939 = vand.u32 %v1938, 4294901760
          %1940 = vmatmul.mubr.f32.gmra.mrb[0].mxu0 %v1939
          %v1941 = vpop.f32.mrb[0].mxu0
          %v1942 = vadd.f32 %v1860, %v1941
          %v1943 = vpop.f32.mrb[0].mxu0
          %1944 = vdwg.mxu0
          %v1945 = vand.u32 %v396, 4294901760
          %v1946 = vsub.f32 %v396, %v1945
          %v1947 = vand.u32 %v1946, 4294901760
          %v1948 = vsub.f32 %v1946, %v1947
          %v1949 = vand.u32 %v1948, 4294901760
          %1950 = vmatprep.subr.mxu0 %v1949
          %v1951 = vand.u32 %v395, 4294901760
          %v1952 = vsub.f32 %v395, %v1951
          %v1953 = vand.u32 %v1952, 4294901760
          %v1954 = vsub.f32 %v1952, %v1953
          %v1955 = vand.u32 %v1954, 4294901760
          %1956 = vmatpush1.xpose.msra.mxu0 %v1955
          %1957 = vmatprep.subr.mxu0 0.0
          %1958 = vmatpush1.xpose.msra.mxu0 0.0
          %1959 = vmatprep.subr.mxu0 0.0
          %1960 = vmatpush1.xpose.msra.mxu0 0.0
          %1961 = vmatprep.subr.mxu0 0.0
          %1962 = vmatpush1.xpose.msra.mxu0 0.0
          %1963 = vmatprep.subr.mxu0 0.0
          %1964 = vmatpush1.xpose.msra.mxu0 0.0
          %1965 = vmatprep.subr.mxu0 0.0
          %1966 = vmatpush1.xpose.msra.mxu0 0.0
          %1967 = vmatprep.subr.mxu0 0.0
          %1968 = vmatpush1.xpose.msra.mxu0 0.0
          %1969 = vmatprep.subr.mxu0 0.0
          %1970 = vmatpush1.xpose.msra.mxu0 0.0
          %1971 = vmatprep.subr.mxu0 0.0
          %1972 = vmatpush1.xpose.msra.mxu0 0.0
          %1973 = vmatprep.subr.mxu0 0.0
          %1974 = vmatpush1.xpose.msra.mxu0 0.0
          %1975 = vmatprep.subr.mxu0 0.0
          %1976 = vmatpush1.xpose.msra.mxu0 0.0
          %1977 = vmatprep.subr.mxu0 0.0
          %1978 = vmatpush1.xpose.msra.mxu0 0.0
          %1979 = vmatprep.subr.mxu0 0.0
          %1980 = vmatpush1.xpose.msra.mxu0 0.0
          %1981 = vmatprep.subr.mxu0 0.0
          %1982 = vmatpush1.xpose.msra.mxu0 0.0
          %1983 = vmatprep.subr.mxu0 0.0
          %1984 = vmatpush1.xpose.msra.mxu0 0.0
          %1985 = vmatprep.subr.mxu0 0.0
          %1986 = vmatpush1.xpose.msra.mxu0 0.0
          %1987 = vmatprep.subr.mxu0 0.0
          %1988 = vmatpush1.xpose.msra.mxu0 0.0
          %1989 = vmatprep.subr.mxu0 0.0
          %1990 = vmatpush1.xpose.msra.mxu0 0.0
          %1991 = vmatprep.subr.mxu0 0.0
          %1992 = vmatpush1.xpose.msra.mxu0 0.0
          %1993 = vmatprep.subr.mxu0 0.0
          %1994 = vmatpush1.xpose.msra.mxu0 0.0
          %1995 = vmatprep.subr.mxu0 0.0
          %1996 = vmatpush1.xpose.msra.mxu0 0.0
          %1997 = vmatprep.subr.mxu0 0.0
          %1998 = vmatpush1.xpose.msra.mxu0 0.0
          %1999 = vmatprep.subr.mxu0 0.0
          %2000 = vmatpush1.xpose.msra.mxu0 0.0
          %2001 = vmatprep.subr.mxu0 0.0
          %2002 = vmatpush1.xpose.msra.mxu0 0.0
          %2003 = vmatprep.subr.mxu0 0.0
          %2004 = vmatpush1.xpose.msra.mxu0 0.0
          %2005 = vmatprep.subr.mxu0 0.0
          %2006 = vmatpush1.xpose.msra.mxu0 0.0
          %2007 = vmatprep.subr.mxu0 0.0
          %2008 = vmatpush1.xpose.msra.mxu0 0.0
          %2009 = vmatprep.subr.mxu0 0.0
          %2010 = vmatpush1.xpose.msra.mxu0 0.0
          %2011 = vmatprep.subr.mxu0 0.0
          %2012 = vmatpush1.xpose.msra.mxu0 0.0
          %2013 = vmatprep.subr.mxu0 0.0
          %2014 = vmatpush1.xpose.msra.mxu0 0.0
          %2015 = vmatprep.subr.mxu0 0.0
          %2016 = vmatpush1.xpose.msra.mxu0 0.0
          %2017 = vmatprep.subr.mxu0 0.0
          %2018 = vmatpush1.xpose.msra.mxu0 0.0
          %v2019 = vand.u32 %v396, 4294901760
          %2020 = vmatprep.mubr.f32.mxu0 %v2019
          %v2021 = vand.u32 %v395, 4294901760
          %2022 = vmatmul.mubr.f32.gmra.mrb[0].mxu0 %v2021
          %v2023 = vpop.f32.mrb[0].mxu0
          %v2024 = vadd.f32 %v1942, %v2023
          %v2025 = vpop.f32.mrb[0].mxu0
          %2026 = vdwg.mxu0
          %v2027 = vand.u32 %v396, 4294901760
          %v2028 = vsub.f32 %v396, %v2027
          %2029 = vmatprep.subr.mxu0 %v2028
          %v2030 = vand.u32 %v395, 4294901760
          %v2031 = vsub.f32 %v395, %v2030
          %2032 = vmatpush1.xpose.msra.mxu0 %v2031
          %2033 = vmatprep.subr.mxu0 0.0
          %2034 = vmatpush1.xpose.msra.mxu0 0.0
          %2035 = vmatprep.subr.mxu0 0.0
          %2036 = vmatpush1.xpose.msra.mxu0 0.0
          %2037 = vmatprep.subr.mxu0 0.0
          %2038 = vmatpush1.xpose.msra.mxu0 0.0
          %2039 = vmatprep.subr.mxu0 0.0
          %2040 = vmatpush1.xpose.msra.mxu0 0.0
          %2041 = vmatprep.subr.mxu0 0.0
          %2042 = vmatpush1.xpose.msra.mxu0 0.0
          %2043 = vmatprep.subr.mxu0 0.0
          %2044 = vmatpush1.xpose.msra.mxu0 0.0
          %2045 = vmatprep.subr.mxu0 0.0
          %2046 = vmatpush1.xpose.msra.mxu0 0.0
          %2047 = vmatprep.subr.mxu0 0.0
          %2048 = vmatpush1.xpose.msra.mxu0 0.0
          %2049 = vmatprep.subr.mxu0 0.0
          %2050 = vmatpush1.xpose.msra.mxu0 0.0
          %2051 = vmatprep.subr.mxu0 0.0
          %2052 = vmatpush1.xpose.msra.mxu0 0.0
          %2053 = vmatprep.subr.mxu0 0.0
          %2054 = vmatpush1.xpose.msra.mxu0 0.0
          %2055 = vmatprep.subr.mxu0 0.0
          %2056 = vmatpush1.xpose.msra.mxu0 0.0
          %2057 = vmatprep.subr.mxu0 0.0
          %2058 = vmatpush1.xpose.msra.mxu0 0.0
          %2059 = vmatprep.subr.mxu0 0.0
          %2060 = vmatpush1.xpose.msra.mxu0 0.0
          %2061 = vmatprep.subr.mxu0 0.0
          %2062 = vmatpush1.xpose.msra.mxu0 0.0
          %2063 = vmatprep.subr.mxu0 0.0
          %2064 = vmatpush1.xpose.msra.mxu0 0.0
          %2065 = vmatprep.subr.mxu0 0.0
          %2066 = vmatpush1.xpose.msra.mxu0 0.0
          %2067 = vmatprep.subr.mxu0 0.0
          %2068 = vmatpush1.xpose.msra.mxu0 0.0
          %2069 = vmatprep.subr.mxu0 0.0
          %2070 = vmatpush1.xpose.msra.mxu0 0.0
          %2071 = vmatprep.subr.mxu0 0.0
          %2072 = vmatpush1.xpose.msra.mxu0 0.0
          %2073 = vmatprep.subr.mxu0 0.0
          %2074 = vmatpush1.xpose.msra.mxu0 0.0
          %2075 = vmatprep.subr.mxu0 0.0
          %2076 = vmatpush1.xpose.msra.mxu0 0.0
          %2077 = vmatprep.subr.mxu0 0.0
          %2078 = vmatpush1.xpose.msra.mxu0 0.0
          %2079 = vmatprep.subr.mxu0 0.0
          %2080 = vmatpush1.xpose.msra.mxu0 0.0
          %2081 = vmatprep.subr.mxu0 0.0
          %2082 = vmatpush1.xpose.msra.mxu0 0.0
          %2083 = vmatprep.subr.mxu0 0.0
          %2084 = vmatpush1.xpose.msra.mxu0 0.0
          %2085 = vmatprep.subr.mxu0 0.0
          %2086 = vmatpush1.xpose.msra.mxu0 0.0
          %2087 = vmatprep.subr.mxu0 0.0
          %2088 = vmatpush1.xpose.msra.mxu0 0.0
          %2089 = vmatprep.subr.mxu0 0.0
          %2090 = vmatpush1.xpose.msra.mxu0 0.0
          %2091 = vmatprep.subr.mxu0 0.0
          %2092 = vmatpush1.xpose.msra.mxu0 0.0
          %2093 = vmatprep.subr.mxu0 0.0
          %2094 = vmatpush1.xpose.msra.mxu0 0.0
          %v2095 = vand.u32 %v396, 4294901760
          %v2096 = vsub.f32 %v396, %v2095
          %2097 = vmatprep.mubr.f32.mxu0 %v2096
          %v2098 = vand.u32 %v395, 4294901760
          %v2099 = vsub.f32 %v395, %v2098
          %2100 = vmatmul.mubr.f32.gmra.mrb[0].mxu0 %v2099
          %v2101 = vpop.f32.mrb[0].mxu0
          %v2102 = vadd.f32 %v2024, %v2101
          %v2103 = vpop.f32.mrb[0].mxu0
          %2104 = vdwg.mxu0
          %v2105 = vand.u32 %v396, 4294901760
          %2106 = vmatprep.subr.mxu0 %v2105
          %v2107 = vand.u32 %v395, 4294901760
          %2108 = vmatpush1.xpose.msra.mxu0 %v2107
          %2109 = vmatprep.subr.mxu0 0.0
          %2110 = vmatpush1.xpose.msra.mxu0 0.0
          %2111 = vmatprep.subr.mxu0 0.0
          %2112 = vmatpush1.xpose.msra.mxu0 0.0
          %2113 = vmatprep.subr.mxu0 0.0
          %2114 = vmatpush1.xpose.msra.mxu0 0.0
          %2115 = vmatprep.subr.mxu0 0.0
          %2116 = vmatpush1.xpose.msra.mxu0 0.0
          %2117 = vmatprep.subr.mxu0 0.0
          %2118 = vmatpush1.xpose.msra.mxu0 0.0
          %2119 = vmatprep.subr.mxu0 0.0
          %2120 = vmatpush1.xpose.msra.mxu0 0.0
          %2121 = vmatprep.subr.mxu0 0.0
          %2122 = vmatpush1.xpose.msra.mxu0 0.0
          %2123 = vmatprep.subr.mxu0 0.0
          %2124 = vmatpush1.xpose.msra.mxu0 0.0
          %2125 = vmatprep.subr.mxu0 0.0
          %2126 = vmatpush1.xpose.msra.mxu0 0.0
          %2127 = vmatprep.subr.mxu0 0.0
          %2128 = vmatpush1.xpose.msra.mxu0 0.0
          %2129 = vmatprep.subr.mxu0 0.0
          %2130 = vmatpush1.xpose.msra.mxu0 0.0
          %2131 = vmatprep.subr.mxu0 0.0
          %2132 = vmatpush1.xpose.msra.mxu0 0.0
          %2133 = vmatprep.subr.mxu0 0.0
          %2134 = vmatpush1.xpose.msra.mxu0 0.0
          %2135 = vmatprep.subr.mxu0 0.0
          %2136 = vmatpush1.xpose.msra.mxu0 0.0
          %2137 = vmatprep.subr.mxu0 0.0
          %2138 = vmatpush1.xpose.msra.mxu0 0.0
          %2139 = vmatprep.subr.mxu0 0.0
          %2140 = vmatpush1.xpose.msra.mxu0 0.0
          %2141 = vmatprep.subr.mxu0 0.0
          %2142 = vmatpush1.xpose.msra.mxu0 0.0
          %2143 = vmatprep.subr.mxu0 0.0
          %2144 = vmatpush1.xpose.msra.mxu0 0.0
          %2145 = vmatprep.subr.mxu0 0.0
          %2146 = vmatpush1.xpose.msra.mxu0 0.0
          %2147 = vmatprep.subr.mxu0 0.0
          %2148 = vmatpush1.xpose.msra.mxu0 0.0
          %2149 = vmatprep.subr.mxu0 0.0
          %2150 = vmatpush1.xpose.msra.mxu0 0.0
          %2151 = vmatprep.subr.mxu0 0.0
          %2152 = vmatpush1.xpose.msra.mxu0 0.0
          %2153 = vmatprep.subr.mxu0 0.0
          %2154 = vmatpush1.xpose.msra.mxu0 0.0
          %2155 = vmatprep.subr.mxu0 0.0
          %2156 = vmatpush1.xpose.msra.mxu0 0.0
          %2157 = vmatprep.subr.mxu0 0.0
          %2158 = vmatpush1.xpose.msra.mxu0 0.0
          %2159 = vmatprep.subr.mxu0 0.0
          %2160 = vmatpush1.xpose.msra.mxu0 0.0
          %2161 = vmatprep.subr.mxu0 0.0
          %2162 = vmatpush1.xpose.msra.mxu0 0.0
          %2163 = vmatprep.subr.mxu0 0.0
          %2164 = vmatpush1.xpose.msra.mxu0 0.0
          %2165 = vmatprep.subr.mxu0 0.0
          %2166 = vmatpush1.xpose.msra.mxu0 0.0
          %2167 = vmatprep.subr.mxu0 0.0
          %2168 = vmatpush1.xpose.msra.mxu0 0.0
          %2169 = vmatprep.subr.mxu0 0.0
          %2170 = vmatpush1.xpose.msra.mxu0 0.0
          %v2171 = vand.u32 %v396, 4294901760
          %v2172 = vsub.f32 %v396, %v2171
          %v2173 = vand.u32 %v2172, 4294901760
          %2174 = vmatprep.mubr.f32.mxu0 %v2173
          %v2175 = vand.u32 %v395, 4294901760
          %v2176 = vsub.f32 %v395, %v2175
          %v2177 = vand.u32 %v2176, 4294901760
          %2178 = vmatmul.mubr.f32.gmra.mrb[0].mxu0 %v2177
          %v2179 = vpop.f32.mrb[0].mxu0
          %v2180 = vadd.f32 %v2102, %v2179
          %v2181 = vpop.f32.mrb[0].mxu0
          %2182 = vdwg.mxu0
          %v2183 = vand.u32 %v396, 4294901760
          %v2184 = vsub.f32 %v396, %v2183
          %v2185 = vand.u32 %v2184, 4294901760
          %2186 = vmatprep.subr.mxu0 %v2185
          %v2187 = vand.u32 %v395, 4294901760
          %v2188 = vsub.f32 %v395, %v2187
          %v2189 = vand.u32 %v2188, 4294901760
          %2190 = vmatpush1.xpose.msra.mxu0 %v2189
          %2191 = vmatprep.subr.mxu0 0.0
          %2192 = vmatpush1.xpose.msra.mxu0 0.0
          %2193 = vmatprep.subr.mxu0 0.0
          %2194 = vmatpush1.xpose.msra.mxu0 0.0
          %2195 = vmatprep.subr.mxu0 0.0
          %2196 = vmatpush1.xpose.msra.mxu0 0.0
          %2197 = vmatprep.subr.mxu0 0.0
          %2198 = vmatpush1.xpose.msra.mxu0 0.0
          %2199 = vmatprep.subr.mxu0 0.0
          %2200 = vmatpush1.xpose.msra.mxu0 0.0
          %2201 = vmatprep.subr.mxu0 0.0
          %2202 = vmatpush1.xpose.msra.mxu0 0.0
          %2203 = vmatprep.subr.mxu0 0.0
          %2204 = vmatpush1.xpose.msra.mxu0 0.0
          %2205 = vmatprep.subr.mxu0 0.0
          %2206 = vmatpush1.xpose.msra.mxu0 0.0
          %2207 = vmatprep.subr.mxu0 0.0
          %2208 = vmatpush1.xpose.msra.mxu0 0.0
          %2209 = vmatprep.subr.mxu0 0.0
          %2210 = vmatpush1.xpose.msra.mxu0 0.0
          %2211 = vmatprep.subr.mxu0 0.0
          %2212 = vmatpush1.xpose.msra.mxu0 0.0
          %2213 = vmatprep.subr.mxu0 0.0
          %2214 = vmatpush1.xpose.msra.mxu0 0.0
          %2215 = vmatprep.subr.mxu0 0.0
          %2216 = vmatpush1.xpose.msra.mxu0 0.0
          %2217 = vmatprep.subr.mxu0 0.0
          %2218 = vmatpush1.xpose.msra.mxu0 0.0
          %2219 = vmatprep.subr.mxu0 0.0
          %2220 = vmatpush1.xpose.msra.mxu0 0.0
          %2221 = vmatprep.subr.mxu0 0.0
          %2222 = vmatpush1.xpose.msra.mxu0 0.0
          %2223 = vmatprep.subr.mxu0 0.0
          %2224 = vmatpush1.xpose.msra.mxu0 0.0
          %2225 = vmatprep.subr.mxu0 0.0
          %2226 = vmatpush1.xpose.msra.mxu0 0.0
          %2227 = vmatprep.subr.mxu0 0.0
          %2228 = vmatpush1.xpose.msra.mxu0 0.0
          %2229 = vmatprep.subr.mxu0 0.0
          %2230 = vmatpush1.xpose.msra.mxu0 0.0
          %2231 = vmatprep.subr.mxu0 0.0
          %2232 = vmatpush1.xpose.msra.mxu0 0.0
          %2233 = vmatprep.subr.mxu0 0.0
          %2234 = vmatpush1.xpose.msra.mxu0 0.0
          %2235 = vmatprep.subr.mxu0 0.0
          %2236 = vmatpush1.xpose.msra.mxu0 0.0
          %2237 = vmatprep.subr.mxu0 0.0
          %2238 = vmatpush1.xpose.msra.mxu0 0.0
          %2239 = vmatprep.subr.mxu0 0.0
          %2240 = vmatpush1.xpose.msra.mxu0 0.0
          %2241 = vmatprep.subr.mxu0 0.0
          %2242 = vmatpush1.xpose.msra.mxu0 0.0
          %2243 = vmatprep.subr.mxu0 0.0
          %2244 = vmatpush1.xpose.msra.mxu0 0.0
          %2245 = vmatprep.subr.mxu0 0.0
          %2246 = vmatpush1.xpose.msra.mxu0 0.0
          %2247 = vmatprep.subr.mxu0 0.0
          %2248 = vmatpush1.xpose.msra.mxu0 0.0
          %2249 = vmatprep.subr.mxu0 0.0
          %2250 = vmatpush1.xpose.msra.mxu0 0.0
          %2251 = vmatprep.subr.mxu0 0.0
          %2252 = vmatpush1.xpose.msra.mxu0 0.0
          %v2253 = vand.u32 %v396, 4294901760
          %2254 = vmatprep.mubr.f32.mxu0 %v2253
          %v2255 = vand.u32 %v395, 4294901760
          %2256 = vmatmul.mubr.f32.gmra.mrb[0].mxu0 %v2255
          %v2257 = vpop.f32.mrb[0].mxu0
          %v2258 = vadd.f32 %v2180, %v2257
          %v2259 = vpop.f32.mrb[0].mxu0
          %2260 = vdwg.mxu0
          %v2261 = vand.u32 %v396, 4294901760
          %2262 = vmatprep.subr.mxu0 %v2261
          %v2263 = vand.u32 %v395, 4294901760
          %2264 = vmatpush1.xpose.msra.mxu0 %v2263
          %2265 = vmatprep.subr.mxu0 0.0
          %2266 = vmatpush1.xpose.msra.mxu0 0.0
          %2267 = vmatprep.subr.mxu0 0.0
          %2268 = vmatpush1.xpose.msra.mxu0 0.0
          %2269 = vmatprep.subr.mxu0 0.0
          %2270 = vmatpush1.xpose.msra.mxu0 0.0
          %2271 = vmatprep.subr.mxu0 0.0
          %2272 = vmatpush1.xpose.msra.mxu0 0.0
          %2273 = vmatprep.subr.mxu0 0.0
          %2274 = vmatpush1.xpose.msra.mxu0 0.0
          %2275 = vmatprep.subr.mxu0 0.0
          %2276 = vmatpush1.xpose.msra.mxu0 0.0
          %2277 = vmatprep.subr.mxu0 0.0
          %2278 = vmatpush1.xpose.msra.mxu0 0.0
          %2279 = vmatprep.subr.mxu0 0.0
          %2280 = vmatpush1.xpose.msra.mxu0 0.0
          %2281 = vmatprep.subr.mxu0 0.0
          %2282 = vmatpush1.xpose.msra.mxu0 0.0
          %2283 = vmatprep.subr.mxu0 0.0
          %2284 = vmatpush1.xpose.msra.mxu0 0.0
          %2285 = vmatprep.subr.mxu0 0.0
          %2286 = vmatpush1.xpose.msra.mxu0 0.0
          %2287 = vmatprep.subr.mxu0 0.0
          %2288 = vmatpush1.xpose.msra.mxu0 0.0
          %2289 = vmatprep.subr.mxu0 0.0
          %2290 = vmatpush1.xpose.msra.mxu0 0.0
          %2291 = vmatprep.subr.mxu0 0.0
          %2292 = vmatpush1.xpose.msra.mxu0 0.0
          %2293 = vmatprep.subr.mxu0 0.0
          %2294 = vmatpush1.xpose.msra.mxu0 0.0
          %2295 = vmatprep.subr.mxu0 0.0
          %2296 = vmatpush1.xpose.msra.mxu0 0.0
          %2297 = vmatprep.subr.mxu0 0.0
          %2298 = vmatpush1.xpose.msra.mxu0 0.0
          %2299 = vmatprep.subr.mxu0 0.0
          %2300 = vmatpush1.xpose.msra.mxu0 0.0
          %2301 = vmatprep.subr.mxu0 0.0
          %2302 = vmatpush1.xpose.msra.mxu0 0.0
          %2303 = vmatprep.subr.mxu0 0.0
          %2304 = vmatpush1.xpose.msra.mxu0 0.0
          %2305 = vmatprep.subr.mxu0 0.0
          %2306 = vmatpush1.xpose.msra.mxu0 0.0
          %2307 = vmatprep.subr.mxu0 0.0
          %2308 = vmatpush1.xpose.msra.mxu0 0.0
          %2309 = vmatprep.subr.mxu0 0.0
          %2310 = vmatpush1.xpose.msra.mxu0 0.0
          %2311 = vmatprep.subr.mxu0 0.0
          %2312 = vmatpush1.xpose.msra.mxu0 0.0
          %2313 = vmatprep.subr.mxu0 0.0
          %2314 = vmatpush1.xpose.msra.mxu0 0.0
          %2315 = vmatprep.subr.mxu0 0.0
          %2316 = vmatpush1.xpose.msra.mxu0 0.0
          %2317 = vmatprep.subr.mxu0 0.0
          %2318 = vmatpush1.xpose.msra.mxu0 0.0
          %2319 = vmatprep.subr.mxu0 0.0
          %2320 = vmatpush1.xpose.msra.mxu0 0.0
          %2321 = vmatprep.subr.mxu0 0.0
          %2322 = vmatpush1.xpose.msra.mxu0 0.0
          %2323 = vmatprep.subr.mxu0 0.0
          %2324 = vmatpush1.xpose.msra.mxu0 0.0
          %2325 = vmatprep.subr.mxu0 0.0
          %2326 = vmatpush1.xpose.msra.mxu0 0.0
          %v2327 = vand.u32 %v396, 4294901760
          %2328 = vmatprep.mubr.f32.mxu0 %v2327
          %v2329 = vand.u32 %v395, 4294901760
          %2330 = vmatmul.mubr.f32.gmra.mrb[0].mxu0 %v2329
          %v2331 = vpop.f32.mrb[0].mxu0
          %v2332 = vadd.f32 %v2258, %v2331
          %v2333 = vpop.f32.mrb[0].mxu0
          %2334 = vdwg.mxu0
          %v2335 = vadd.f32 %v446, %v2332
          %vm2336 = vcmask 9216
          %2337 = vst.msk [vmem:[#allocation3] sm:$0x3] %vm2336, %v2335
          %v2338 = vld [vmem:[#allocation4] sm:$0x3]
          %v2339 = vmul.f32 %v389, %v389
          %v2340 = vmul.f32 %v390, %v390
          %v2341 = vmul.f32 %v391, %v391
          %v2342 = vmul.f32 %v392, %v392
          %v2343 = vmul.f32 %v393, %v393
          %v2344 = vmul.f32 %v394, %v394
          %v2345 = vmul.f32 %v395, %v395
          %v2346 = vmul.f32 %v396, %v396
          %vm2347 = vcmask 1041408
          %v2348 = vsel %vm2347, %v2339, 0.0
          %v2349 = vsel %vm2347, %v2340, 0.0
          %v2350 = vadd.f32 %v2348, %v2349
          %v2351 = vsel %vm2347, %v2341, 0.0
          %v2352 = vadd.f32 %v2350, %v2351
          %v2353 = vsel %vm2347, %v2342, 0.0
          %v2354 = vadd.f32 %v2352, %v2353
          %v2355 = vsel %vm2347, %v2343, 0.0
          %v2356 = vadd.f32 %v2354, %v2355
          %v2357 = vsel %vm2347, %v2344, 0.0
          %v2358 = vadd.f32 %v2356, %v2357
          %v2359 = vsel %vm2347, %v2345, 0.0
          %v2360 = vadd.f32 %v2358, %v2359
          %v2361 = vsel %vm2347, %v2346, 0.0
          %v2362 = vadd.f32 %v2360, %v2361
          %2363 = vadd.xlane.f32.xlu0 %v2362
          %v2364 = vpop.xlane.xlu0 %2363
          %v2365 = vadd.f32 %v2338, %v2364
          %vm2366 = vcmask 1024
          %2367 = vst.msk [vmem:[#allocation4] sm:$0x3] %vm2366, %v2365
          // Predicated region
          $region49: #{tpu_custom_call.1} parent=43 // pred_check
            %p2368 = pneg %p263
          $region50: #{tpu_custom_call.1} parent=43 // pred_check_branch
            %2370 = sbr.rel (%p2368) target = $region52
          $region51: #{tpu_custom_call.1} parent=43 // pred_region
            %v2371 = vld [vmem:[#allocation4] sm:$0x3]
            %v2372 = vmax.f32 %v2371, 1e-24
            %v2373 = vrsqrt.pop %v2372
            %v2374 = vld [vmem:[#allocation3] sm:$0x3]
            %vm2375 = vcmask 15360
            %v2377 = vsel %vm2375, %v2374, 0
            %v2380 = vsel %vm2347, %v2373, 0
            %2382 = vmatprep.subr.mxu0 0.0
            %v2383 = vand.u32 %v2380, 4294901760
            %2384 = vmatpush1.msra.mxu0 %v2383
            %2385 = vmatprep.subr.mxu0 0.0
            %2386 = vmatpush1.msra.mxu0 0.0
            %2387 = vmatprep.subr.mxu0 0.0
            %2388 = vmatpush1.msra.mxu0 0.0
            %2389 = vmatprep.subr.mxu0 0.0
            %2390 = vmatpush1.msra.mxu0 0.0
            %2391 = vmatprep.subr.mxu0 0.0
            %2392 = vmatpush1.msra.mxu0 0.0
            %2393 = vmatprep.subr.mxu0 0.0
            %2394 = vmatpush1.msra.mxu0 0.0
            %2395 = vmatprep.subr.mxu0 0.0
            %2396 = vmatpush1.msra.mxu0 0.0
            %2397 = vmatprep.subr.mxu0 0.0
            %2398 = vmatpush1.msra.mxu0 0.0
            %2399 = vmatprep.subr.mxu0 0.0
            %2400 = vmatpush1.msra.mxu0 0.0
            %2401 = vmatprep.subr.mxu0 0.0
            %2402 = vmatpush1.msra.mxu0 0.0
            %2403 = vmatprep.subr.mxu0 0.0
            %2404 = vmatpush1.msra.mxu0 0.0
            %2405 = vmatprep.subr.mxu0 0.0
            %2406 = vmatpush1.msra.mxu0 0.0
            %2407 = vmatprep.subr.mxu0 0.0
            %2408 = vmatpush1.msra.mxu0 0.0
            %2409 = vmatprep.subr.mxu0 0.0
            %2410 = vmatpush1.msra.mxu0 0.0
            %2411 = vmatprep.subr.mxu0 0.0
            %2412 = vmatpush1.msra.mxu0 0.0
            %2413 = vmatprep.subr.mxu0 0.0
            %2414 = vmatpush1.msra.mxu0 0.0
            %2415 = vmatprep.subr.mxu0 0.0
            %2416 = vmatpush1.msra.mxu0 0.0
            %2417 = vmatprep.subr.mxu0 0.0
            %2418 = vmatpush1.msra.mxu0 0.0
            %2419 = vmatprep.subr.mxu0 0.0
            %2420 = vmatpush1.msra.mxu0 0.0
            %2421 = vmatprep.subr.mxu0 0.0
            %2422 = vmatpush1.msra.mxu0 0.0
            %2423 = vmatprep.subr.mxu0 0.0
            %2424 = vmatpush1.msra.mxu0 0.0
            %2425 = vmatprep.subr.mxu0 0.0
            %2426 = vmatpush1.msra.mxu0 0.0
            %2427 = vmatprep.subr.mxu0 0.0
            %2428 = vmatpush1.msra.mxu0 0.0
            %2429 = vmatprep.subr.mxu0 0.0
            %2430 = vmatpush1.msra.mxu0 0.0
            %2431 = vmatprep.subr.mxu0 0.0
            %2432 = vmatpush1.msra.mxu0 0.0
            %2433 = vmatprep.subr.mxu0 0.0
            %2434 = vmatpush1.msra.mxu0 0.0
            %2435 = vmatprep.subr.mxu0 0.0
            %2436 = vmatpush1.msra.mxu0 0.0
            %2437 = vmatprep.subr.mxu0 0.0
            %2438 = vmatpush1.msra.mxu0 0.0
            %2439 = vmatprep.subr.mxu0 0.0
            %2440 = vmatpush1.msra.mxu0 0.0
            %2441 = vmatprep.subr.mxu0 0.0
            %2442 = vmatpush1.msra.mxu0 0.0
            %2443 = vmatprep.subr.mxu0 0.0
            %2444 = vmatpush1.msra.mxu0 0.0
            %2445 = vmatprep.subr.mxu0 0.0
            %2446 = vmatpush1.msra.mxu0 0.0
            %2447 = vmatprep.mubr.f32.mxu0 0.0
            %v2448 = vand.u32 %v2377, 4294901760
            %v2449 = vsub.f32 %v2377, %v2448
            %v2450 = vand.u32 %v2449, 4294901760
            %v2451 = vsub.f32 %v2449, %v2450
            %v2452 = vand.u32 %v2451, 4294901760
            %2453 = vmatmul.mubr.f32.gmra.mrb[0].mxu0 %v2452
            %v2454 = vpop.f32.mrb[0].mxu0
            %v2455 = vadd.f32 0.0, %v2454
            %v2456 = vpop.f32.mrb[0].mxu0
            %2457 = vdwg.mxu0
            %2458 = vmatprep.subr.mxu0 0.0
            %v2459 = vand.u32 %v2380, 4294901760
            %v2460 = vsub.f32 %v2380, %v2459
            %v2461 = vand.u32 %v2460, 4294901760
            %v2462 = vsub.f32 %v2460, %v2461
            %v2463 = vand.u32 %v2462, 4294901760
            %2464 = vmatpush1.msra.mxu0 %v2463
            %2465 = vmatprep.subr.mxu0 0.0
            %2466 = vmatpush1.msra.mxu0 0.0
            %2467 = vmatprep.subr.mxu0 0.0
            %2468 = vmatpush1.msra.mxu0 0.0
            %2469 = vmatprep.subr.mxu0 0.0
            %2470 = vmatpush1.msra.mxu0 0.0
            %2471 = vmatprep.subr.mxu0 0.0
            %2472 = vmatpush1.msra.mxu0 0.0
            %2473 = vmatprep.subr.mxu0 0.0
            %2474 = vmatpush1.msra.mxu0 0.0
            %2475 = vmatprep.subr.mxu0 0.0
            %2476 = vmatpush1.msra.mxu0 0.0
            %2477 = vmatprep.subr.mxu0 0.0
            %2478 = vmatpush1.msra.mxu0 0.0
            %2479 = vmatprep.subr.mxu0 0.0
            %2480 = vmatpush1.msra.mxu0 0.0
            %2481 = vmatprep.subr.mxu0 0.0
            %2482 = vmatpush1.msra.mxu0 0.0
            %2483 = vmatprep.subr.mxu0 0.0
            %2484 = vmatpush1.msra.mxu0 0.0
            %2485 = vmatprep.subr.mxu0 0.0
            %2486 = vmatpush1.msra.mxu0 0.0
            %2487 = vmatprep.subr.mxu0 0.0
            %2488 = vmatpush1.msra.mxu0 0.0
            %2489 = vmatprep.subr.mxu0 0.0
            %2490 = vmatpush1.msra.mxu0 0.0
            %2491 = vmatprep.subr.mxu0 0.0
            %2492 = vmatpush1.msra.mxu0 0.0
            %2493 = vmatprep.subr.mxu0 0.0
            %2494 = vmatpush1.msra.mxu0 0.0
            %2495 = vmatprep.subr.mxu0 0.0
            %2496 = vmatpush1.msra.mxu0 0.0
            %2497 = vmatprep.subr.mxu0 0.0
            %2498 = vmatpush1.msra.mxu0 0.0
            %2499 = vmatprep.subr.mxu0 0.0
            %2500 = vmatpush1.msra.mxu0 0.0
            %2501 = vmatprep.subr.mxu0 0.0
            %2502 = vmatpush1.msra.mxu0 0.0
            %2503 = vmatprep.subr.mxu0 0.0
            %2504 = vmatpush1.msra.mxu0 0.0
            %2505 = vmatprep.subr.mxu0 0.0
            %2506 = vmatpush1.msra.mxu0 0.0
            %2507 = vmatprep.subr.mxu0 0.0
            %2508 = vmatpush1.msra.mxu0 0.0
            %2509 = vmatprep.subr.mxu0 0.0
            %2510 = vmatpush1.msra.mxu0 0.0
            %2511 = vmatprep.subr.mxu0 0.0
            %2512 = vmatpush1.msra.mxu0 0.0
            %2513 = vmatprep.subr.mxu0 0.0
            %2514 = vmatpush1.msra.mxu0 0.0
            %2515 = vmatprep.subr.mxu0 0.0
            %2516 = vmatpush1.msra.mxu0 0.0
            %2517 = vmatprep.subr.mxu0 0.0
            %2518 = vmatpush1.msra.mxu0 0.0
            %2519 = vmatprep.subr.mxu0 0.0
            %2520 = vmatpush1.msra.mxu0 0.0
            %2521 = vmatprep.subr.mxu0 0.0
            %2522 = vmatpush1.msra.mxu0 0.0
            %2523 = vmatprep.subr.mxu0 0.0
            %2524 = vmatpush1.msra.mxu0 0.0
            %2525 = vmatprep.subr.mxu0 0.0
            %2526 = vmatpush1.msra.mxu0 0.0
            %2527 = vmatprep.mubr.f32.mxu0 0.0
            %v2528 = vand.u32 %v2377, 4294901760
            %2529 = vmatmul.mubr.f32.gmra.mrb[0].mxu0 %v2528
            %v2530 = vpop.f32.mrb[0].mxu0
            %v2531 = vadd.f32 %v2455, %v2530
            %v2532 = vpop.f32.mrb[0].mxu0
            %2533 = vdwg.mxu0
            %2534 = vmatprep.subr.mxu0 0.0
            %v2535 = vand.u32 %v2380, 4294901760
            %v2536 = vsub.f32 %v2380, %v2535
            %2537 = vmatpush1.msra.mxu0 %v2536
            %2538 = vmatprep.subr.mxu0 0.0
            %2539 = vmatpush1.msra.mxu0 0.0
            %2540 = vmatprep.subr.mxu0 0.0
            %2541 = vmatpush1.msra.mxu0 0.0
            %2542 = vmatprep.subr.mxu0 0.0
            %2543 = vmatpush1.msra.mxu0 0.0
            %2544 = vmatprep.subr.mxu0 0.0
            %2545 = vmatpush1.msra.mxu0 0.0
            %2546 = vmatprep.subr.mxu0 0.0
            %2547 = vmatpush1.msra.mxu0 0.0
            %2548 = vmatprep.subr.mxu0 0.0
            %2549 = vmatpush1.msra.mxu0 0.0
            %2550 = vmatprep.subr.mxu0 0.0
            %2551 = vmatpush1.msra.mxu0 0.0
            %2552 = vmatprep.subr.mxu0 0.0
            %2553 = vmatpush1.msra.mxu0 0.0
            %2554 = vmatprep.subr.mxu0 0.0
            %2555 = vmatpush1.msra.mxu0 0.0
            %2556 = vmatprep.subr.mxu0 0.0
            %2557 = vmatpush1.msra.mxu0 0.0
            %2558 = vmatprep.subr.mxu0 0.0
            %2559 = vmatpush1.msra.mxu0 0.0
            %2560 = vmatprep.subr.mxu0 0.0
            %2561 = vmatpush1.msra.mxu0 0.0
            %2562 = vmatprep.subr.mxu0 0.0
            %2563 = vmatpush1.msra.mxu0 0.0
            %2564 = vmatprep.subr.mxu0 0.0
            %2565 = vmatpush1.msra.mxu0 0.0
            %2566 = vmatprep.subr.mxu0 0.0
            %2567 = vmatpush1.msra.mxu0 0.0
            %2568 = vmatprep.subr.mxu0 0.0
            %2569 = vmatpush1.msra.mxu0 0.0
            %2570 = vmatprep.subr.mxu0 0.0
            %2571 = vmatpush1.msra.mxu0 0.0
            %2572 = vmatprep.subr.mxu0 0.0
            %2573 = vmatpush1.msra.mxu0 0.0
            %2574 = vmatprep.subr.mxu0 0.0
            %2575 = vmatpush1.msra.mxu0 0.0
            %2576 = vmatprep.subr.mxu0 0.0
            %2577 = vmatpush1.msra.mxu0 0.0
            %2578 = vmatprep.subr.mxu0 0.0
            %2579 = vmatpush1.msra.mxu0 0.0
            %2580 = vmatprep.subr.mxu0 0.0
            %2581 = vmatpush1.msra.mxu0 0.0
            %2582 = vmatprep.subr.mxu0 0.0
            %2583 = vmatpush1.msra.mxu0 0.0
            %2584 = vmatprep.subr.mxu0 0.0
            %2585 = vmatpush1.msra.mxu0 0.0
            %2586 = vmatprep.subr.mxu0 0.0
            %2587 = vmatpush1.msra.mxu0 0.0
            %2588 = vmatprep.subr.mxu0 0.0
            %2589 = vmatpush1.msra.mxu0 0.0
            %2590 = vmatprep.subr.mxu0 0.0
            %2591 = vmatpush1.msra.mxu0 0.0
            %2592 = vmatprep.subr.mxu0 0.0
            %2593 = vmatpush1.msra.mxu0 0.0
            %2594 = vmatprep.subr.mxu0 0.0
            %2595 = vmatpush1.msra.mxu0 0.0
            %2596 = vmatprep.subr.mxu0 0.0
            %2597 = vmatpush1.msra.mxu0 0.0
            %2598 = vmatprep.subr.mxu0 0.0
            %2599 = vmatpush1.msra.mxu0 0.0
            %2600 = vmatprep.mubr.f32.mxu0 0.0
            %v2601 = vand.u32 %v2377, 4294901760
            %v2602 = vsub.f32 %v2377, %v2601
            %2603 = vmatmul.mubr.f32.gmra.mrb[0].mxu0 %v2602
            %v2604 = vpop.f32.mrb[0].mxu0
            %v2605 = vadd.f32 %v2531, %v2604
            %v2606 = vpop.f32.mrb[0].mxu0
            %2607 = vdwg.mxu0
            %2608 = vmatprep.subr.mxu0 0.0
            %v2609 = vand.u32 %v2380, 4294901760
            %2610 = vmatpush1.msra.mxu0 %v2609
            %2611 = vmatprep.subr.mxu0 0.0
            %2612 = vmatpush1.msra.mxu0 0.0
            %2613 = vmatprep.subr.mxu0 0.0
            %2614 = vmatpush1.msra.mxu0 0.0
            %2615 = vmatprep.subr.mxu0 0.0
            %2616 = vmatpush1.msra.mxu0 0.0
            %2617 = vmatprep.subr.mxu0 0.0
            %2618 = vmatpush1.msra.mxu0 0.0
            %2619 = vmatprep.subr.mxu0 0.0
            %2620 = vmatpush1.msra.mxu0 0.0
            %2621 = vmatprep.subr.mxu0 0.0
            %2622 = vmatpush1.msra.mxu0 0.0
            %2623 = vmatprep.subr.mxu0 0.0
            %2624 = vmatpush1.msra.mxu0 0.0
            %2625 = vmatprep.subr.mxu0 0.0
            %2626 = vmatpush1.msra.mxu0 0.0
            %2627 = vmatprep.subr.mxu0 0.0
            %2628 = vmatpush1.msra.mxu0 0.0
            %2629 = vmatprep.subr.mxu0 0.0
            %2630 = vmatpush1.msra.mxu0 0.0
            %2631 = vmatprep.subr.mxu0 0.0
            %2632 = vmatpush1.msra.mxu0 0.0
            %2633 = vmatprep.subr.mxu0 0.0
            %2634 = vmatpush1.msra.mxu0 0.0
            %2635 = vmatprep.subr.mxu0 0.0
            %2636 = vmatpush1.msra.mxu0 0.0
            %2637 = vmatprep.subr.mxu0 0.0
            %2638 = vmatpush1.msra.mxu0 0.0
            %2639 = vmatprep.subr.mxu0 0.0
            %2640 = vmatpush1.msra.mxu0 0.0
            %2641 = vmatprep.subr.mxu0 0.0
            %2642 = vmatpush1.msra.mxu0 0.0
            %2643 = vmatprep.subr.mxu0 0.0
            %2644 = vmatpush1.msra.mxu0 0.0
            %2645 = vmatprep.subr.mxu0 0.0
            %2646 = vmatpush1.msra.mxu0 0.0
            %2647 = vmatprep.subr.mxu0 0.0
            %2648 = vmatpush1.msra.mxu0 0.0
            %2649 = vmatprep.subr.mxu0 0.0
            %2650 = vmatpush1.msra.mxu0 0.0
            %2651 = vmatprep.subr.mxu0 0.0
            %2652 = vmatpush1.msra.mxu0 0.0
            %2653 = vmatprep.subr.mxu0 0.0
            %2654 = vmatpush1.msra.mxu0 0.0
            %2655 = vmatprep.subr.mxu0 0.0
            %2656 = vmatpush1.msra.mxu0 0.0
            %2657 = vmatprep.subr.mxu0 0.0
            %2658 = vmatpush1.msra.mxu0 0.0
            %2659 = vmatprep.subr.mxu0 0.0
            %2660 = vmatpush1.msra.mxu0 0.0
            %2661 = vmatprep.subr.mxu0 0.0
            %2662 = vmatpush1.msra.mxu0 0.0
            %2663 = vmatprep.subr.mxu0 0.0
            %2664 = vmatpush1.msra.mxu0 0.0
            %2665 = vmatprep.subr.mxu0 0.0
            %2666 = vmatpush1.msra.mxu0 0.0
            %2667 = vmatprep.subr.mxu0 0.0
            %2668 = vmatpush1.msra.mxu0 0.0
            %2669 = vmatprep.subr.mxu0 0.0
            %2670 = vmatpush1.msra.mxu0 0.0
            %2671 = vmatprep.subr.mxu0 0.0
            %2672 = vmatpush1.msra.mxu0 0.0
            %2673 = vmatprep.mubr.f32.mxu0 0.0
            %v2674 = vand.u32 %v2377, 4294901760
            %v2675 = vsub.f32 %v2377, %v2674
            %v2676 = vand.u32 %v2675, 4294901760
            %2677 = vmatmul.mubr.f32.gmra.mrb[0].mxu0 %v2676
            %v2678 = vpop.f32.mrb[0].mxu0
            %v2679 = vadd.f32 %v2605, %v2678
            %v2680 = vpop.f32.mrb[0].mxu0
            %2681 = vdwg.mxu0
            %2682 = vmatprep.subr.mxu0 0.0
            %v2683 = vand.u32 %v2380, 4294901760
            %v2684 = vsub.f32 %v2380, %v2683
            %v2685 = vand.u32 %v2684, 4294901760
            %2686 = vmatpush1.msra.mxu0 %v2685
            %2687 = vmatprep.subr.mxu0 0.0
            %2688 = vmatpush1.msra.mxu0 0.0
            %2689 = vmatprep.subr.mxu0 0.0
            %2690 = vmatpush1.msra.mxu0 0.0
            %2691 = vmatprep.subr.mxu0 0.0
            %2692 = vmatpush1.msra.mxu0 0.0
            %2693 = vmatprep.subr.mxu0 0.0
            %2694 = vmatpush1.msra.mxu0 0.0
            %2695 = vmatprep.subr.mxu0 0.0
            %2696 = vmatpush1.msra.mxu0 0.0
            %2697 = vmatprep.subr.mxu0 0.0
            %2698 = vmatpush1.msra.mxu0 0.0
            %2699 = vmatprep.subr.mxu0 0.0
            %2700 = vmatpush1.msra.mxu0 0.0
            %2701 = vmatprep.subr.mxu0 0.0
            %2702 = vmatpush1.msra.mxu0 0.0
            %2703 = vmatprep.subr.mxu0 0.0
            %2704 = vmatpush1.msra.mxu0 0.0
            %2705 = vmatprep.subr.mxu0 0.0
            %2706 = vmatpush1.msra.mxu0 0.0
            %2707 = vmatprep.subr.mxu0 0.0
            %2708 = vmatpush1.msra.mxu0 0.0
            %2709 = vmatprep.subr.mxu0 0.0
            %2710 = vmatpush1.msra.mxu0 0.0
            %2711 = vmatprep.subr.mxu0 0.0
            %2712 = vmatpush1.msra.mxu0 0.0
            %2713 = vmatprep.subr.mxu0 0.0
            %2714 = vmatpush1.msra.mxu0 0.0
            %2715 = vmatprep.subr.mxu0 0.0
            %2716 = vmatpush1.msra.mxu0 0.0
            %2717 = vmatprep.subr.mxu0 0.0
            %2718 = vmatpush1.msra.mxu0 0.0
            %2719 = vmatprep.subr.mxu0 0.0
            %2720 = vmatpush1.msra.mxu0 0.0
            %2721 = vmatprep.subr.mxu0 0.0
            %2722 = vmatpush1.msra.mxu0 0.0
            %2723 = vmatprep.subr.mxu0 0.0
            %2724 = vmatpush1.msra.mxu0 0.0
            %2725 = vmatprep.subr.mxu0 0.0
            %2726 = vmatpush1.msra.mxu0 0.0
            %2727 = vmatprep.subr.mxu0 0.0
            %2728 = vmatpush1.msra.mxu0 0.0
            %2729 = vmatprep.subr.mxu0 0.0
            %2730 = vmatpush1.msra.mxu0 0.0
            %2731 = vmatprep.subr.mxu0 0.0
            %2732 = vmatpush1.msra.mxu0 0.0
            %2733 = vmatprep.subr.mxu0 0.0
            %2734 = vmatpush1.msra.mxu0 0.0
            %2735 = vmatprep.subr.mxu0 0.0
            %2736 = vmatpush1.msra.mxu0 0.0
            %2737 = vmatprep.subr.mxu0 0.0
            %2738 = vmatpush1.msra.mxu0 0.0
            %2739 = vmatprep.subr.mxu0 0.0
            %2740 = vmatpush1.msra.mxu0 0.0
            %2741 = vmatprep.subr.mxu0 0.0
            %2742 = vmatpush1.msra.mxu0 0.0
            %2743 = vmatprep.subr.mxu0 0.0
            %2744 = vmatpush1.msra.mxu0 0.0
            %2745 = vmatprep.subr.mxu0 0.0
            %2746 = vmatpush1.msra.mxu0 0.0
            %2747 = vmatprep.subr.mxu0 0.0
            %2748 = vmatpush1.msra.mxu0 0.0
            %2749 = vmatprep.mubr.f32.mxu0 0.0
            %v2750 = vand.u32 %v2377, 4294901760
            %2751 = vmatmul.mubr.f32.gmra.mrb[0].mxu0 %v2750
            %v2752 = vpop.f32.mrb[0].mxu0
            %v2753 = vadd.f32 %v2679, %v2752
            %v2754 = vpop.f32.mrb[0].mxu0
            %2755 = vdwg.mxu0
            %2756 = vmatprep.subr.mxu0 0.0
            %v2757 = vand.u32 %v2380, 4294901760
            %2758 = vmatpush1.msra.mxu0 %v2757
            %2759 = vmatprep.subr.mxu0 0.0
            %2760 = vmatpush1.msra.mxu0 0.0
            %2761 = vmatprep.subr.mxu0 0.0
            %2762 = vmatpush1.msra.mxu0 0.0
            %2763 = vmatprep.subr.mxu0 0.0
            %2764 = vmatpush1.msra.mxu0 0.0
            %2765 = vmatprep.subr.mxu0 0.0
            %2766 = vmatpush1.msra.mxu0 0.0
            %2767 = vmatprep.subr.mxu0 0.0
            %2768 = vmatpush1.msra.mxu0 0.0
            %2769 = vmatprep.subr.mxu0 0.0
            %2770 = vmatpush1.msra.mxu0 0.0
            %2771 = vmatprep.subr.mxu0 0.0
            %2772 = vmatpush1.msra.mxu0 0.0
            %2773 = vmatprep.subr.mxu0 0.0
            %2774 = vmatpush1.msra.mxu0 0.0
            %2775 = vmatprep.subr.mxu0 0.0
            %2776 = vmatpush1.msra.mxu0 0.0
            %2777 = vmatprep.subr.mxu0 0.0
            %2778 = vmatpush1.msra.mxu0 0.0
            %2779 = vmatprep.subr.mxu0 0.0
            %2780 = vmatpush1.msra.mxu0 0.0
            %2781 = vmatprep.subr.mxu0 0.0
            %2782 = vmatpush1.msra.mxu0 0.0
            %2783 = vmatprep.subr.mxu0 0.0
            %2784 = vmatpush1.msra.mxu0 0.0
            %2785 = vmatprep.subr.mxu0 0.0
            %2786 = vmatpush1.msra.mxu0 0.0
            %2787 = vmatprep.subr.mxu0 0.0
            %2788 = vmatpush1.msra.mxu0 0.0
            %2789 = vmatprep.subr.mxu0 0.0
            %2790 = vmatpush1.msra.mxu0 0.0
            %2791 = vmatprep.subr.mxu0 0.0
            %2792 = vmatpush1.msra.mxu0 0.0
            %2793 = vmatprep.subr.mxu0 0.0
            %2794 = vmatpush1.msra.mxu0 0.0
            %2795 = vmatprep.subr.mxu0 0.0
            %2796 = vmatpush1.msra.mxu0 0.0
            %2797 = vmatprep.subr.mxu0 0.0
            %2798 = vmatpush1.msra.mxu0 0.0
            %2799 = vmatprep.subr.mxu0 0.0
            %2800 = vmatpush1.msra.mxu0 0.0
            %2801 = vmatprep.subr.mxu0 0.0
            %2802 = vmatpush1.msra.mxu0 0.0
            %2803 = vmatprep.subr.mxu0 0.0
            %2804 = vmatpush1.msra.mxu0 0.0
            %2805 = vmatprep.subr.mxu0 0.0
            %2806 = vmatpush1.msra.mxu0 0.0
            %2807 = vmatprep.subr.mxu0 0.0
            %2808 = vmatpush1.msra.mxu0 0.0
            %2809 = vmatprep.subr.mxu0 0.0
            %2810 = vmatpush1.msra.mxu0 0.0
            %2811 = vmatprep.subr.mxu0 0.0
            %2812 = vmatpush1.msra.mxu0 0.0
            %2813 = vmatprep.subr.mxu0 0.0
            %2814 = vmatpush1.msra.mxu0 0.0
            %2815 = vmatprep.subr.mxu0 0.0
            %2816 = vmatpush1.msra.mxu0 0.0
            %2817 = vmatprep.subr.mxu0 0.0
            %2818 = vmatpush1.msra.mxu0 0.0
            %2819 = vmatprep.subr.mxu0 0.0
            %2820 = vmatpush1.msra.mxu0 0.0
            %2821 = vmatprep.mubr.f32.mxu0 0.0
            %v2822 = vand.u32 %v2377, 4294901760
            %2823 = vmatmul.mubr.f32.gmra.mrb[0].mxu0 %v2822
            %v2824 = vpop.f32.mrb[0].mxu0
            %v2825 = vadd.f32 %v2753, %v2824
            %v2826 = vpop.f32.mrb[0].mxu0
            %2827 = vdwg.mxu0
            %v2828 = vmul.f32 %v2373, %v2825
            %v2829 = vmul.f32 %v2371, %v2373
            %v2830 = vmul.f32 %v2829, %v2373
            %v2831 = vsub.f32 %v2828, %v2830
            %2832 = vst.msk [vmem:[#allocation5] sm:$0x3] %vm2366, %v2831
          $region52: #{tpu_custom_call.1} parent=43 // pred_fallthru
            _
        $region44: #{tpu_custom_call.1} parent=31 // pred_fallthru
          _
        %p2833 = scmp.eq.s32.totalorder %s27, 1
        // Predicated region
        $region53: #{tpu_custom_call.1} parent=31 // pred_check
          %p2834 = pneg %p2833
        $region54: #{tpu_custom_call.1} parent=31 // pred_check_branch
          %2836 = sbr.rel (%p2834) target = $region56
        $region55: #{tpu_custom_call.1} parent=31 // pred_region
          %s2837 = smul.u32 %s28, 8
          %s2838 = smul.addr %s2837, 2
          %s2839 = scalar_lea.vmem [#allocation2], %s2838
          %v2840 = vld [vmem:[%s2839] sm:$0xff]
          %v2841 = vld [vmem:[%s2839 + $0x8] sm:$0xff]
          %v2842 = vld [vmem:[#allocation5] sm:$0x3]
          %2844 = vset.pattern.permute.xlu0 0
          %2845 = vperm.xlu0 %2844, %v2842
          %v2846 = vpop.permute.xlu0 %2845
          %v2848 = vunpack.c.l.s4 269488144
          %v2849 = vunpack.c.0.s8 %v2848
          %v2850 = vlaneseq
          %v2851 = vshrl.u32 %v2850, 7
          %v2852 = vsub.s32 %v2849, %v2851
          %v2853 = vrot.slane %v2846, %v2852
          %v2855 = vadd.f32 %v2840, %v2853
          %v2856 = vadd.f32 %v2841, %v2853
          %2857 = vst [vmem:[%s250] sm:$0xff] %v2855
          %2858 = vst [vmem:[%s250 + $0x8] sm:$0xff] %v2856
        $region56: #{tpu_custom_call.1} parent=31 // pred_fallthru
          _
        %s2859 = sand.u32 %s126, 1
        %s2860 = scalar_lea.sflag [#allocation8], %s2859
        %s2861 = sand.u32 %s126, 1
        %s2862 = smul.addr %s2861, 16
        %s2863 = scalar_lea.vmem [#allocation11], %s2862
        // Predicated region
        $region57: #{tpu_custom_call.1} parent=31 // pred_check
          %p2864 = pneg %p136
        $region58: #{tpu_custom_call.1} parent=31 // pred_check_branch
          %2866 = sbr.rel (%p2864) target = $region60
        $region59: #{tpu_custom_call.1} parent=31 // pred_region
          %s2867 = smul.u32 %s27, %s28
          %s2868 = smul.u32 8, %s2867
          %s2870 = ssub.s32 256, 256
          %2871 = vsyncadd %s2860, %s2870
          %s2872 = smul.addr %s2868, 32
          %s2873 = scalar_lea.hbm %s3, %s2872
          %s2875 = sshll.u32 %s2863, 4
          %s2876 = int_to_ptr.vmem [resolvable:$true] %s2875
          %2878 = dma.vmem_to_hbm [thread:$0]  %s2876, 256, %s2873, %s2860
        $region60: #{tpu_custom_call.1} parent=31 // pred_fallthru
          _
      $region32: #{tpu_custom_call.1} parent=5 // pred_fallthru
        _
      %p2879 = scmp.le.s32.totalorder 2, %s18
      // Predicated region
      $region61: #{tpu_custom_call.1} parent=5 // pred_check
        %p2880 = pneg %p2879
      $region62: #{tpu_custom_call.1} parent=5 // pred_check_branch
        %2882 = sbr.rel (%p2880) target = $region64
      $region63: #{tpu_custom_call.1} parent=5 // pred_region
        %s2883 = ssub.s32 %s18, 2
        // Predicated region
        $region65: #{tpu_custom_call.1} parent=63 // pred_check
          %p2884 = pneg %p142
        $region66: #{tpu_custom_call.1} parent=63 // pred_check_branch
          %2886 = sbr.rel (%p2884) target = $region68
        $region67: #{tpu_custom_call.1} parent=63 // pred_region
          %s2887 = sand.u32 %s127, 1
          %s2888 = scalar_lea.sflag [#allocation8], %s2887
          %s2889 = sand.u32 %s127, 1
          %s2890 = smul.addr %s2889, 16
          %s2891 = scalar_lea.vmem [#allocation11], %s2890
          %2892 = dma.done %s2888, 256
        $region68: #{tpu_custom_call.1} parent=63 // pred_fallthru
          _
      $region64: #{tpu_custom_call.1} parent=5 // pred_fallthru
        _
    $region6: #{tpu_custom_call.1} parent=1 // loop_footer
      %s22 = sadd.s32 1, %s18
    $region7: #{tpu_custom_call.1} parent=1 // loop_footer_branch
      %17 = sbr.rel target = $region3
    $region8: #{tpu_custom_call.1} parent=1 // loop_exit
      _
    %2893 = vsyncpa [#allocation7], 1
    %s2894 = scalar_lea.sflag [#allocation7], 1
    %2895 = vsyncpa %s2894, 1
    %2896 = vsyncpa [#allocation10], 1
    %s2897 = scalar_lea.sflag [#allocation10], 1
    %2898 = vsyncpa %s2897, 1
    %2899 = vsyncpa [#allocation8], 1
    %s2900 = scalar_lea.sflag [#allocation8], 1
    %2901 = vsyncpa %s2900, 1

</llo_original>
